<compile_context>
chip_gen: v6e
topology: v6e:2x2x1
jax: 0.10.0
libtpu: 0.0.40
codegen_flags: <defaults>
</compile_context>

<pallas_src>
import math
from functools import partial

import numpy as np
import jax
import jax.numpy as jnp
from jax.experimental import pallas as pl
from jax.experimental.pallas import tpu as pltpu


# ----------------------------------------------------------------------------
# helpers
# ----------------------------------------------------------------------------
def _shared(shape):
    """BlockSpec for a weight/constant that is identical for every grid step."""
    zeros = (0,) * len(shape)
    return pl.BlockSpec(shape, lambda b, _z=zeros: _z)


def get_frequency_modes(seq_len, modes=64, mode_select_method="random"):
    modes = min(modes, seq_len // 2)
    if mode_select_method == "random":
        index = list(range(0, seq_len // 2))
        np.random.shuffle(index)
        index = index[:modes]
    else:
        index = list(range(0, modes))
    index.sort()
    return index


def _erf(x):
    # Abramowitz & Stegun 7.1.26, |abs err| <= 1.5e-7 (f32-level).
    # TODO(synk): used instead of lax.erf so the fused kernel relies only on
    # elementwise ops guaranteed to lower in Mosaic (abs/div/exp/where).
    a1, a2, a3 = 0.254829592, -0.284496736, 1.421413741
    a4, a5, p = -1.453152027, 1.061405429, 0.3275911
    ax = jnp.abs(x)
    t = 1.0 / (1.0 + p * ax)
    poly = ((((a5 * t + a4) * t + a3) * t + a2) * t + a1) * t
    y = 1.0 - poly * jnp.exp(-(ax * ax))
    return jnp.where(x < 0.0, -y, y)


def _gelu(x):
    # F.gelu (exact / erf form)
    return 0.5 * x * (1.0 + _erf(x * 0.7071067811865476))


# ----------------------------------------------------------------------------
# fused forward kernel (one batch element per grid step)
# ----------------------------------------------------------------------------
def _fedformer_kernel(x_ref, mark_ref, shift_ref, emb_ref, pe_ref, dm_ref,
                      cr_ref, ci_ref, idr_ref, idi_ref,
                      sel_ref, wr_ref, wi_ref,
                      qw_ref, qb_ref, ow_ref, ob_ref, c1_ref, c2_ref,
                      lng_ref, lnb_ref, pw_ref, pb_ref, o_ref,
                      *, n_layers, n_sub, eps):
    f32 = jnp.float32
    dot = partial(jnp.dot, preferred_element_type=f32)

    x = x_ref[0]          # (L, D) one batch element, channels-last
    mark = mark_ref[0]    # (L, D)
    L, D = x.shape
    M = idr_ref.shape[0]

    # ---- DataEmbedding: circular Conv1d(k=3, bias=False) + positional emb ----
    xm1 = dot(shift_ref[0], x)    # x[(l-1) mod L]
    xp1 = dot(shift_ref[1], x)    # x[(l+1) mod L]
    enc = (dot(xm1, emb_ref[0]) + dot(x, emb_ref[1]) + dot(xp1, emb_ref[2])
           + pe_ref[...])

    dm = dm_ref[...]                        # (L, L): (I - moving_avg) operator
    cr, ci = cr_ref[...], ci_ref[...]       # (L, M): cos / -sin at selected rfft bins
    idr, idi = idr_ref[...], idi_ref[...]   # (M, L): mode-restricted irfft

    # ---- Encoder layers ----
    for li in range(n_layers):
        # AutoCorrelationLayer.query_projection (k/v projections don't affect output)
        q = dot(enc, qw_ref[li]) + qb_ref[li]                  # (L, D)

        # FourierBlock: q.view(L,H,E).permute(H,E,L)  <=>  rows (h*E+e) of q.T
        qT = q.T                                               # (D, L)
        yr = jnp.zeros((D, M), f32)
        yi = jnp.zeros((D, M), f32)
        for e in range(n_sub):                                 # n_sub = D // n_heads
            qe = dot(sel_ref[e], qT)        # row (h,o) <- q.T row (h,e)   (D, L)
            xr = dot(qe, cr)                # Re rfft at selected modes    (D, M)
            xi = dot(qe, ci)                # Im rfft
            wre, wie = wr_ref[e], wi_ref[e]                    # (D, M)
            yr = yr + xr * wre - xi * wie   # complex mode mixing (compl_mul1d)
            yi = yi + xr * wie + xi * wre
        out2d = dot(yr, idr) + dot(yi, idi)  # irfft -> (D, L) == (H, E, L) buffer
        att = out2d.reshape(L, D)            # faithful .view(B, L, -1) reinterpretation
        new_x = dot(att, ow_ref[li]) + ob_ref[li]              # out_projection

        # x = x + dropout(new_x); x, _ = decomp1(x)
        x1 = dot(dm, enc + new_x)

        # position-wise FFN: 1x1 convs (bias=False), activation = gelu
        y = _gelu(dot(x1, c1_ref[li]))
        y = dot(y, c2_ref[li])

        # res, _ = decomp2(x + y)
        enc = dot(dm, x1 + y)

    # ---- my_Layernorm: LayerNorm(D), then subtract per-feature mean over L ----
    mu = jnp.mean(enc, axis=-1, keepdims=True)
    var = jnp.mean(jnp.square(enc - mu), axis=-1, keepdims=True)
    xhat = (enc - mu) * jax.lax.rsqrt(var + eps) * lng_ref[...] + lnb_ref[...]
    xhat = xhat - jnp.mean(xhat, axis=0, keepdims=True)

    # ---- output = gelu(enc) * x_mark_enc ; flatten(L*D) ; Linear(L*D -> 1) ----
    prod = _gelu(xhat) * mark * pw_ref[...]                    # (L, D)
    tot = jnp.sum(jnp.sum(prod, axis=1, keepdims=True), axis=0, keepdims=True)
    o_ref[0] = tot + pb_ref[...]


# ----------------------------------------------------------------------------
# parameter construction (shapes follow the PyTorch __init__) + kernel packing
# ----------------------------------------------------------------------------
def init_params(key, cfg):
    D, L, H = cfg["d_feat"], cfg["seq_len"], cfg["n_heads"]
    Dff, EL = cfg["d_ff"], cfg["e_layers"]
    E = D // H
    M = len(cfg["modes_index"])

    keys = iter(jax.random.split(key, 64))

    def nrm(shape, scale=0.05):
        return scale * jax.random.normal(next(keys), shape, jnp.float32)

    params = {}
    # TokenEmbedding: Conv1d(D -> D, k=3, circular, bias=False) stored (3, C_in, C_out)
    params["emb_w"] = nrm((3, D, D))
    # PositionalEmbedding (sinusoidal), first L rows
    pe = np.zeros((L, D), np.float32)
    position = np.arange(L, dtype=np.float32)[:, None]
    div_term = np.exp(np.arange(0, D, 2, dtype=np.float32) * -(math.log(10000.0) / D))
    pe[:, 0::2] = np.sin(position * div_term)
    pe[:, 1::2] = np.cos(position * div_term)
    params["pe"] = jnp.asarray(pe)

    # FourierBlock weights (H, E, E, M) real/imag — shared across encoder layers
    scale = 1.0 / (D * D)
    params["f_wr"] = scale * jax.random.uniform(next(keys), (H, E, E, M), jnp.float32)
    params["f_wi"] = scale * jax.random.uniform(next(keys), (H, E, E, M), jnp.float32)

    layers = []
    for _ in range(EL):
        layers.append({
            "q_w": nrm((D, D)), "q_b": nrm((D,)),    # query_projection
            "o_w": nrm((D, D)), "o_b": nrm((D,)),    # out_projection
            "c1_w": nrm((D, Dff)),                   # conv1 (1x1, no bias)
            "c2_w": nrm((Dff, D)),                   # conv2 (1x1, no bias)
        })
    params["layers"] = layers

    params["ln_g"] = jnp.ones((1, D), jnp.float32)   # my_Layernorm
    params["ln_b"] = jnp.zeros((1, D), jnp.float32)

    params["proj_w"] = nrm((D * L, 1))               # projection: Linear(D*L, 1)
    params["proj_b"] = jnp.zeros((1,), jnp.float32)
    return params


def pack_params(params, cfg):
    """Derive the kernel-ready constant operators + stacked per-layer weights."""
    D, L, H = cfg["d_feat"], cfg["seq_len"], cfg["n_heads"]
    E = D // H
    K = cfg["moving_avg"]
    index = cfg["modes_index"]
    M = len(index)
    f32 = np.float32

    # circular +/-1 shift operators for the k=3 token conv
    shiftm = np.zeros((2, L, L), f32)
    for l in range(L):
        shiftm[0, l, (l - 1) % L] = 1.0
        shiftm[1, l, (l + 1) % L] = 1.0

    # series_decomp: res = x - AvgPool1d(K, stride=1)(edge-replicate pad(x)) = (I - A) x
    p = (K - 1) // 2
    A = np.zeros((L, L), f32)
    for l in range(L):
        for k in range(K):
            src = min(max(l - p + k, 0), L - 1)
            A[l, src] += 1.0 / K
    dm = np.eye(L, dtype=f32) - A

    # mode-restricted real DFT (rfft bins `index`) and its irfft(n=L) inverse
    cr = np.zeros((L, M), f32); ci = np.zeros((L, M), f32)
    idr = np.zeros((M, L), f32); idi = np.zeros((M, L), f32)
    for wi, i in enumerate(index):
        ang = 2.0 * np.pi * float(i) * np.arange(L, dtype=np.float64) / float(L)
        cr[:, wi] = np.cos(ang)
        ci[:, wi] = -np.sin(ang)
        c = 1.0 if (i == 0 or (L % 2 == 0 and i == L // 2)) else 2.0
        idr[wi, :] = (c / L) * np.cos(ang)
        idi[wi, :] = -(c / L) * np.sin(ang)

    # per-input-subchannel head-block selection matrices (gather expressed as matmul)
    sel = np.zeros((E, D, D), f32)
    for e in range(E):
        for h in range(H):
            for o in range(E):
                sel[e, h * E + o, h * E + e] = 1.0

    # FourierBlock complex weights regrouped as (E_in, H*E_out, M)
    wrs = jnp.transpose(params["f_wr"], (1, 0, 2, 3)).reshape(E, H * E, M)
    wis = jnp.transpose(params["f_wi"], (1, 0, 2, 3)).reshape(E, H * E, M)

    packed = dict(
        shiftm=jnp.asarray(shiftm),
        emb_w=jnp.asarray(params["emb_w"], jnp.float32),
        pe=jnp.asarray(params["pe"], jnp.float32),
        dm=jnp.asarray(dm),
        cr=jnp.asarray(cr), ci=jnp.asarray(ci),
        idr=jnp.asarray(idr), idi=jnp.asarray(idi),
        sel=jnp.asarray(sel),
        wrs=jnp.asarray(wrs, jnp.float32), wis=jnp.asarray(wis, jnp.float32),
        qw=jnp.stack([lp["q_w"] for lp in params["layers"]]),
        qb=jnp.stack([lp["q_b"].reshape(1, D) for lp in params["layers"]]),
        ow=jnp.stack([lp["o_w"] for lp in params["layers"]]),
        ob=jnp.stack([lp["o_b"].reshape(1, D) for lp in params["layers"]]),
        c1=jnp.stack([lp["c1_w"] for lp in params["layers"]]),
        c2=jnp.stack([lp["c2_w"] for lp in params["layers"]]),
        ln_g=jnp.asarray(params["ln_g"], jnp.float32),
        ln_b=jnp.asarray(params["ln_b"], jnp.float32),
        pw2d=params["proj_w"].reshape(L, D),   # flatten order matches reshape(B, -1)
        pb=params["proj_b"].reshape(1, 1),
    )
    return packed


# ----------------------------------------------------------------------------
# model forward (matches Model.forward: dec_out = regression(...); return squeeze)
# ----------------------------------------------------------------------------
def model_forward(packed, cfg, x_enc, x_mark_enc, x_dec=None, x_mark_dec=None, mask=None):
    B = x_enc.shape[0]
    D, L = cfg["d_feat"], cfg["seq_len"]
    H, Dff, EL = cfg["n_heads"], cfg["d_ff"], cfg["e_layers"]
    E = D // H
    M = len(cfg["modes_index"])

    xt = x_enc.reshape(B, D, L).transpose(0, 2, 1)          # (B, L, D)
    markt = x_mark_enc.reshape(B, D, L).transpose(0, 2, 1)  # (B, L, D)

    kernel = partial(_fedformer_kernel, n_layers=EL, n_sub=E, eps=1e-5)

    out = pl.pallas_call(
        kernel,
        grid=(B,),
        in_specs=[
            pl.BlockSpec((1, L, D), lambda b: (b, 0, 0)),   # x (per batch)
            pl.BlockSpec((1, L, D), lambda b: (b, 0, 0)),   # x_mark (per batch)
            _shared((2, L, L)),     # circular +/-1 shift operators
            _shared((3, D, D)),     # token conv weight
            _shared((L, D)),        # positional embedding
            _shared((L, L)),        # I - moving_avg
            _shared((L, M)),        # DFT cos
            _shared((L, M)),        # DFT -sin
            _shared((M, L)),        # inverse DFT cos
            _shared((M, L)),        # inverse DFT -sin
            _shared((E, D, D)),     # head-block selection
            _shared((E, D, M)),     # Fourier weights (real)
            _shared((E, D, M)),     # Fourier weights (imag)
            _shared((EL, D, D)),    # query projections
            _shared((EL, 1, D)),    # query biases
            _shared((EL, D, D)),    # out projections
            _shared((EL, 1, D)),    # out biases
            _shared((EL, D, Dff)),  # FFN conv1
            _shared((EL, Dff, D)),  # FFN conv2
            _shared((1, D)),        # LayerNorm gamma
            _shared((1, D)),        # LayerNorm beta
            _shared((L, D)),        # final projection weight (as (L, D))
            _shared((1, 1)),        # final projection bias
        ],
        out_specs=pl.BlockSpec((1, 1, 1), lambda b: (b, 0, 0)),
        out_shape=jax.ShapeDtypeStruct((B, 1, 1), jnp.float32),
        compiler_params=pltpu.CompilerParams(dimension_semantics=("parallel",)),
    )(xt, markt, packed["shiftm"], packed["emb_w"], packed["pe"], packed["dm"],
      packed["cr"], packed["ci"], packed["idr"], packed["idi"],
      packed["sel"], packed["wrs"], packed["wis"],
      packed["qw"], packed["qb"], packed["ow"], packed["ob"],
      packed["c1"], packed["c2"], packed["ln_g"], packed["ln_b"],
      packed["pw2d"], packed["pb"])

    return jnp.squeeze(out)   # matches dec_out.squeeze()


# ----------------------------------------------------------------------------
if __name__ == "__main__":
    cfg = dict(
        d_feat=16, seq_len=16, n_heads=8, d_ff=32, e_layers=2,
        moving_avg=5, modes=2,
    )
    np.random.seed(0)
    cfg["modes_index"] = get_frequency_modes(
        cfg["seq_len"], modes=cfg["modes"], mode_select_method="random"
    )

    key = jax.random.PRNGKey(0)
    kp, k1, k2 = jax.random.split(key, 3)
    params = init_params(kp, cfg)
    packed = pack_params(params, cfg)

    B = 2
    x_enc = jax.random.normal(k1, (B, cfg["d_feat"] * cfg["seq_len"]), jnp.float32)
    x_mark_enc = jax.random.normal(k2, (B, cfg["d_feat"] * cfg["seq_len"]), jnp.float32)
    x_dec = jnp.zeros_like(x_enc)        # unused by the forward pass
    x_mark_dec = jnp.zeros_like(x_enc)   # unused by the forward pass

    fwd = jax.jit(lambda xe, xm: model_forward(packed, cfg, xe, xm))
    out = jax.block_until_ready(fwd(x_enc, x_mark_enc))
    assert out.shape == (B,)
    assert bool(jnp.all(jnp.isfinite(out)))
    print("KERNEL_OK")
</pallas_src>

<mosaic_0001>
module attributes {stable_mosaic.version = 11 : i64} {
  func.func @_fedformer_kernel(%arg0: i32, %arg1: memref<1x16x16xf32, #tpu.memory_space<vmem>>, %arg2: memref<1x16x16xf32, #tpu.memory_space<vmem>>, %arg3: memref<2x16x16xf32, #tpu.memory_space<vmem>>, %arg4: memref<3x16x16xf32, #tpu.memory_space<vmem>>, %arg5: memref<16x16xf32, #tpu.memory_space<vmem>>, %arg6: memref<16x16xf32, #tpu.memory_space<vmem>>, %arg7: memref<16x2xf32, #tpu.memory_space<vmem>>, %arg8: memref<16x2xf32, #tpu.memory_space<vmem>>, %arg9: memref<2x16xf32, #tpu.memory_space<vmem>>, %arg10: memref<2x16xf32, #tpu.memory_space<vmem>>, %arg11: memref<2x16x16xf32, #tpu.memory_space<vmem>>, %arg12: memref<2x16x2xf32, #tpu.memory_space<vmem>>, %arg13: memref<2x16x2xf32, #tpu.memory_space<vmem>>, %arg14: memref<2x16x16xf32, #tpu.memory_space<vmem>>, %arg15: memref<2x1x16xf32, #tpu.memory_space<vmem>>, %arg16: memref<2x16x16xf32, #tpu.memory_space<vmem>>, %arg17: memref<2x1x16xf32, #tpu.memory_space<vmem>>, %arg18: memref<2x16x32xf32, #tpu.memory_space<vmem>>, %arg19: memref<2x32x16xf32, #tpu.memory_space<vmem>>, %arg20: memref<1x16xf32, #tpu.memory_space<vmem>>, %arg21: memref<1x16xf32, #tpu.memory_space<vmem>>, %arg22: memref<16x16xf32, #tpu.memory_space<vmem>>, %arg23: memref<1x1xf32, #tpu.memory_space<vmem>>, %arg24: memref<1x1x1xf32, #tpu.memory_space<vmem>>) attributes {dimension_semantics = [#tpu.dimension_semantics<parallel>], iteration_bounds = array<i64: 2>, scalar_prefetch = 0 : i64, scratch_operands = 0 : i64, tpu.core_type = #tpu.core_type<tc>, window_params = [{transform_indices = @transform_0, window_bounds = array<i64: 1, 16, 16>}, {transform_indices = @transform_1, window_bounds = array<i64: 1, 16, 16>}, {pipeline_mode = #tpu.pipeline_mode<synchronous>, transform_indices = @transform_2, window_bounds = array<i64: 2, 16, 16>}, {pipeline_mode = #tpu.pipeline_mode<synchronous>, transform_indices = @transform_3, window_bounds = array<i64: 3, 16, 16>}, {pipeline_mode = #tpu.pipeline_mode<synchronous>, transform_indices = @transform_4, window_bounds = array<i64: 16, 16>}, {pipeline_mode = #tpu.pipeline_mode<synchronous>, transform_indices = @transform_5, window_bounds = array<i64: 16, 16>}, {pipeline_mode = #tpu.pipeline_mode<synchronous>, transform_indices = @transform_6, window_bounds = array<i64: 16, 2>}, {pipeline_mode = #tpu.pipeline_mode<synchronous>, transform_indices = @transform_7, window_bounds = array<i64: 16, 2>}, {pipeline_mode = #tpu.pipeline_mode<synchronous>, transform_indices = @transform_8, window_bounds = array<i64: 2, 16>}, {pipeline_mode = #tpu.pipeline_mode<synchronous>, transform_indices = @transform_9, window_bounds = array<i64: 2, 16>}, {pipeline_mode = #tpu.pipeline_mode<synchronous>, transform_indices = @transform_10, window_bounds = array<i64: 2, 16, 16>}, {pipeline_mode = #tpu.pipeline_mode<synchronous>, transform_indices = @transform_11, window_bounds = array<i64: 2, 16, 2>}, {pipeline_mode = #tpu.pipeline_mode<synchronous>, transform_indices = @transform_12, window_bounds = array<i64: 2, 16, 2>}, {pipeline_mode = #tpu.pipeline_mode<synchronous>, transform_indices = @transform_13, window_bounds = array<i64: 2, 16, 16>}, {pipeline_mode = #tpu.pipeline_mode<synchronous>, transform_indices = @transform_14, window_bounds = array<i64: 2, 1, 16>}, {pipeline_mode = #tpu.pipeline_mode<synchronous>, transform_indices = @transform_15, window_bounds = array<i64: 2, 16, 16>}, {pipeline_mode = #tpu.pipeline_mode<synchronous>, transform_indices = @transform_16, window_bounds = array<i64: 2, 1, 16>}, {pipeline_mode = #tpu.pipeline_mode<synchronous>, transform_indices = @transform_17, window_bounds = array<i64: 2, 16, 32>}, {pipeline_mode = #tpu.pipeline_mode<synchronous>, transform_indices = @transform_18, window_bounds = array<i64: 2, 32, 16>}, {pipeline_mode = #tpu.pipeline_mode<synchronous>, transform_indices = @transform_19, window_bounds = array<i64: 1, 16>}, {pipeline_mode = #tpu.pipeline_mode<synchronous>, transform_indices = @transform_20, window_bounds = array<i64: 1, 16>}, {pipeline_mode = #tpu.pipeline_mode<synchronous>, transform_indices = @transform_21, window_bounds = array<i64: 16, 16>}, {pipeline_mode = #tpu.pipeline_mode<synchronous>, transform_indices = @transform_22, window_bounds = array<i64: 1, 1>}, {transform_indices = @transform_23, window_bounds = array<i64: 1, 1, 1>}]} {
    %c0 = arith.constant 0 : index
    %c0_0 = arith.constant 0 : index
    %c0_1 = arith.constant 0 : index
    %0 = vector.load %arg1[%c0, %c0_0, %c0_1] : memref<1x16x16xf32, #tpu.memory_space<vmem>>, vector<1x16x16xf32>
    %1 = vector.shape_cast %0 : vector<1x16x16xf32> to vector<16x16xf32>
    %c0_2 = arith.constant 0 : index
    %c0_3 = arith.constant 0 : index
    %c0_4 = arith.constant 0 : index
    %2 = vector.load %arg2[%c0_2, %c0_3, %c0_4] : memref<1x16x16xf32, #tpu.memory_space<vmem>>, vector<1x16x16xf32>
    %3 = vector.shape_cast %2 : vector<1x16x16xf32> to vector<16x16xf32>
    %c0_5 = arith.constant 0 : index
    %c0_6 = arith.constant 0 : index
    %c0_7 = arith.constant 0 : index
    %4 = vector.load %arg3[%c0_5, %c0_6, %c0_7] : memref<2x16x16xf32, #tpu.memory_space<vmem>>, vector<1x16x16xf32>
    %5 = vector.shape_cast %4 : vector<1x16x16xf32> to vector<16x16xf32>
    %cst = arith.constant dense<0.000000e+00> : vector<16x16xf32>
    %6 = tpu.matmul %5, %1, %cst {dimension_numbers = #tpu.dot_dimension_numbers<[1], [0], [0], [1], [0, 0, 1, 1], [], []>} : vector<16x16xf32>, vector<16x16xf32>, vector<16x16xf32> -> vector<16x16xf32>
    %c1 = arith.constant 1 : index
    %c0_8 = arith.constant 0 : index
    %c0_9 = arith.constant 0 : index
    %7 = vector.load %arg3[%c1, %c0_8, %c0_9] : memref<2x16x16xf32, #tpu.memory_space<vmem>>, vector<1x16x16xf32>
    %8 = vector.shape_cast %7 : vector<1x16x16xf32> to vector<16x16xf32>
    %cst_10 = arith.constant dense<0.000000e+00> : vector<16x16xf32>
    %9 = tpu.matmul %8, %1, %cst_10 {dimension_numbers = #tpu.dot_dimension_numbers<[1], [0], [0], [1], [0, 0, 1, 1], [], []>} : vector<16x16xf32>, vector<16x16xf32>, vector<16x16xf32> -> vector<16x16xf32>
    %c0_11 = arith.constant 0 : index
    %c0_12 = arith.constant 0 : index
    %c0_13 = arith.constant 0 : index
    %10 = vector.load %arg4[%c0_11, %c0_12, %c0_13] : memref<3x16x16xf32, #tpu.memory_space<vmem>>, vector<1x16x16xf32>
    %11 = vector.shape_cast %10 : vector<1x16x16xf32> to vector<16x16xf32>
    %cst_14 = arith.constant dense<0.000000e+00> : vector<16x16xf32>
    %12 = tpu.matmul %6, %11, %cst_14 {dimension_numbers = #tpu.dot_dimension_numbers<[1], [0], [0], [1], [0, 0, 1, 1], [], []>} : vector<16x16xf32>, vector<16x16xf32>, vector<16x16xf32> -> vector<16x16xf32>
    %c1_15 = arith.constant 1 : index
    %c0_16 = arith.constant 0 : index
    %c0_17 = arith.constant 0 : index
    %13 = vector.load %arg4[%c1_15, %c0_16, %c0_17] : memref<3x16x16xf32, #tpu.memory_space<vmem>>, vector<1x16x16xf32>
    %14 = vector.shape_cast %13 : vector<1x16x16xf32> to vector<16x16xf32>
    %cst_18 = arith.constant dense<0.000000e+00> : vector<16x16xf32>
    %15 = tpu.matmul %1, %14, %cst_18 {dimension_numbers = #tpu.dot_dimension_numbers<[1], [0], [0], [1], [0, 0, 1, 1], [], []>} : vector<16x16xf32>, vector<16x16xf32>, vector<16x16xf32> -> vector<16x16xf32>
    %16 = arith.addf %12, %15 : vector<16x16xf32>
    %c2 = arith.constant 2 : index
    %c0_19 = arith.constant 0 : index
    %c0_20 = arith.constant 0 : index
    %17 = vector.load %arg4[%c2, %c0_19, %c0_20] : memref<3x16x16xf32, #tpu.memory_space<vmem>>, vector<1x16x16xf32>
    %18 = vector.shape_cast %17 : vector<1x16x16xf32> to vector<16x16xf32>
    %cst_21 = arith.constant dense<0.000000e+00> : vector<16x16xf32>
    %19 = tpu.matmul %9, %18, %cst_21 {dimension_numbers = #tpu.dot_dimension_numbers<[1], [0], [0], [1], [0, 0, 1, 1], [], []>} : vector<16x16xf32>, vector<16x16xf32>, vector<16x16xf32> -> vector<16x16xf32>
    %20 = arith.addf %16, %19 : vector<16x16xf32>
    %c0_22 = arith.constant 0 : index
    %c0_23 = arith.constant 0 : index
    %21 = vector.load %arg5[%c0_22, %c0_23] : memref<16x16xf32, #tpu.memory_space<vmem>>, vector<16x16xf32>
    %22 = arith.addf %20, %21 : vector<16x16xf32>
    %c0_24 = arith.constant 0 : index
    %c0_25 = arith.constant 0 : index
    %23 = vector.load %arg6[%c0_24, %c0_25] : memref<16x16xf32, #tpu.memory_space<vmem>>, vector<16x16xf32>
    %c0_26 = arith.constant 0 : index
    %c0_27 = arith.constant 0 : index
    %24 = vector.load %arg7[%c0_26, %c0_27] : memref<16x2xf32, #tpu.memory_space<vmem>>, vector<16x2xf32>
    %c0_28 = arith.constant 0 : index
    %c0_29 = arith.constant 0 : index
    %25 = vector.load %arg8[%c0_28, %c0_29] : memref<16x2xf32, #tpu.memory_space<vmem>>, vector<16x2xf32>
    %c0_30 = arith.constant 0 : index
    %c0_31 = arith.constant 0 : index
    %26 = vector.load %arg9[%c0_30, %c0_31] : memref<2x16xf32, #tpu.memory_space<vmem>>, vector<2x16xf32>
    %c0_32 = arith.constant 0 : index
    %c0_33 = arith.constant 0 : index
    %27 = vector.load %arg10[%c0_32, %c0_33] : memref<2x16xf32, #tpu.memory_space<vmem>>, vector<2x16xf32>
    %c0_34 = arith.constant 0 : index
    %c0_35 = arith.constant 0 : index
    %c0_36 = arith.constant 0 : index
    %28 = vector.load %arg14[%c0_34, %c0_35, %c0_36] : memref<2x16x16xf32, #tpu.memory_space<vmem>>, vector<1x16x16xf32>
    %29 = vector.shape_cast %28 : vector<1x16x16xf32> to vector<16x16xf32>
    %cst_37 = arith.constant dense<0.000000e+00> : vector<16x16xf32>
    %30 = tpu.matmul %22, %29, %cst_37 {dimension_numbers = #tpu.dot_dimension_numbers<[1], [0], [0], [1], [0, 0, 1, 1], [], []>} : vector<16x16xf32>, vector<16x16xf32>, vector<16x16xf32> -> vector<16x16xf32>
    %c0_38 = arith.constant 0 : index
    %c0_39 = arith.constant 0 : index
    %c0_40 = arith.constant 0 : index
    %31 = vector.load %arg15[%c0_38, %c0_39, %c0_40] : memref<2x1x16xf32, #tpu.memory_space<vmem>>, vector<1x1x16xf32>
    %32 = vector.shape_cast %31 : vector<1x1x16xf32> to vector<1x16xf32>
    %33 = vector.broadcast %32 : vector<1x16xf32> to vector<16x16xf32>
    %34 = arith.addf %30, %33 : vector<16x16xf32>
    %35 = tpu.transpose %34, [1, 0] : vector<16x16xf32> -> vector<16x16xf32>
    %cst_41 = arith.constant 0.000000e+00 : f32
    %36 = vector.broadcast %cst_41 : f32 to vector<16x2xf32>
    %cst_42 = arith.constant 0.000000e+00 : f32
    %37 = vector.broadcast %cst_42 : f32 to vector<16x2xf32>
    %c0_43 = arith.constant 0 : index
    %c0_44 = arith.constant 0 : index
    %c0_45 = arith.constant 0 : index
    %38 = vector.load %arg11[%c0_43, %c0_44, %c0_45] : memref<2x16x16xf32, #tpu.memory_space<vmem>>, vector<1x16x16xf32>
    %39 = vector.shape_cast %38 : vector<1x16x16xf32> to vector<16x16xf32>
    %cst_46 = arith.constant dense<0.000000e+00> : vector<16x16xf32>
    %40 = tpu.matmul %39, %35, %cst_46 {dimension_numbers = #tpu.dot_dimension_numbers<[1], [0], [0], [1], [0, 0, 1, 1], [], []>} : vector<16x16xf32>, vector<16x16xf32>, vector<16x16xf32> -> vector<16x16xf32>
    %cst_47 = arith.constant dense<0.000000e+00> : vector<16x2xf32>
    %41 = tpu.matmul %40, %24, %cst_47 {dimension_numbers = #tpu.dot_dimension_numbers<[1], [0], [0], [1], [0, 0, 1, 1], [], []>} : vector<16x16xf32>, vector<16x2xf32>, vector<16x2xf32> -> vector<16x2xf32>
    %cst_48 = arith.constant dense<0.000000e+00> : vector<16x2xf32>
    %42 = tpu.matmul %40, %25, %cst_48 {dimension_numbers = #tpu.dot_dimension_numbers<[1], [0], [0], [1], [0, 0, 1, 1], [], []>} : vector<16x16xf32>, vector<16x2xf32>, vector<16x2xf32> -> vector<16x2xf32>
    %c0_49 = arith.constant 0 : index
    %c0_50 = arith.constant 0 : index
    %c0_51 = arith.constant 0 : index
    %43 = vector.load %arg12[%c0_49, %c0_50, %c0_51] : memref<2x16x2xf32, #tpu.memory_space<vmem>>, vector<1x16x2xf32>
    %44 = vector.shape_cast %43 : vector<1x16x2xf32> to vector<16x2xf32>
    %c0_52 = arith.constant 0 : index
    %c0_53 = arith.constant 0 : index
    %c0_54 = arith.constant 0 : index
    %45 = vector.load %arg13[%c0_52, %c0_53, %c0_54] : memref<2x16x2xf32, #tpu.memory_space<vmem>>, vector<1x16x2xf32>
    %46 = vector.shape_cast %45 : vector<1x16x2xf32> to vector<16x2xf32>
    %47 = arith.mulf %41, %44 : vector<16x2xf32>
    %48 = arith.addf %36, %47 : vector<16x2xf32>
    %49 = arith.mulf %42, %46 : vector<16x2xf32>
    %50 = arith.subf %48, %49 : vector<16x2xf32>
    %51 = arith.mulf %41, %46 : vector<16x2xf32>
    %52 = arith.addf %37, %51 : vector<16x2xf32>
    %53 = arith.mulf %42, %44 : vector<16x2xf32>
    %54 = arith.addf %52, %53 : vector<16x2xf32>
    %c1_55 = arith.constant 1 : index
    %c0_56 = arith.constant 0 : index
    %c0_57 = arith.constant 0 : index
    %55 = vector.load %arg11[%c1_55, %c0_56, %c0_57] : memref<2x16x16xf32, #tpu.memory_space<vmem>>, vector<1x16x16xf32>
    %56 = vector.shape_cast %55 : vector<1x16x16xf32> to vector<16x16xf32>
    %cst_58 = arith.constant dense<0.000000e+00> : vector<16x16xf32>
    %57 = tpu.matmul %56, %35, %cst_58 {dimension_numbers = #tpu.dot_dimension_numbers<[1], [0], [0], [1], [0, 0, 1, 1], [], []>} : vector<16x16xf32>, vector<16x16xf32>, vector<16x16xf32> -> vector<16x16xf32>
    %cst_59 = arith.constant dense<0.000000e+00> : vector<16x2xf32>
    %58 = tpu.matmul %57, %24, %cst_59 {dimension_numbers = #tpu.dot_dimension_numbers<[1], [0], [0], [1], [0, 0, 1, 1], [], []>} : vector<16x16xf32>, vector<16x2xf32>, vector<16x2xf32> -> vector<16x2xf32>
    %cst_60 = arith.constant dense<0.000000e+00> : vector<16x2xf32>
    %59 = tpu.matmul %57, %25, %cst_60 {dimension_numbers = #tpu.dot_dimension_numbers<[1], [0], [0], [1], [0, 0, 1, 1], [], []>} : vector<16x16xf32>, vector<16x2xf32>, vector<16x2xf32> -> vector<16x2xf32>
    %c1_61 = arith.constant 1 : index
    %c0_62 = arith.constant 0 : index
    %c0_63 = arith.constant 0 : index
    %60 = vector.load %arg12[%c1_61, %c0_62, %c0_63] : memref<2x16x2xf32, #tpu.memory_space<vmem>>, vector<1x16x2xf32>
    %61 = vector.shape_cast %60 : vector<1x16x2xf32> to vector<16x2xf32>
    %c1_64 = arith.constant 1 : index
    %c0_65 = arith.constant 0 : index
    %c0_66 = arith.constant 0 : index
    %62 = vector.load %arg13[%c1_64, %c0_65, %c0_66] : memref<2x16x2xf32, #tpu.memory_space<vmem>>, vector<1x16x2xf32>
    %63 = vector.shape_cast %62 : vector<1x16x2xf32> to vector<16x2xf32>
    %64 = arith.mulf %58, %61 : vector<16x2xf32>
    %65 = arith.addf %50, %64 : vector<16x2xf32>
    %66 = arith.mulf %59, %63 : vector<16x2xf32>
    %67 = arith.subf %65, %66 : vector<16x2xf32>
    %68 = arith.mulf %58, %63 : vector<16x2xf32>
    %69 = arith.addf %54, %68 : vector<16x2xf32>
    %70 = arith.mulf %59, %61 : vector<16x2xf32>
    %71 = arith.addf %69, %70 : vector<16x2xf32>
    %cst_67 = arith.constant dense<0.000000e+00> : vector<16x16xf32>
    %72 = tpu.matmul %67, %26, %cst_67 {dimension_numbers = #tpu.dot_dimension_numbers<[1], [0], [0], [1], [0, 0, 1, 1], [], []>} : vector<16x2xf32>, vector<2x16xf32>, vector<16x16xf32> -> vector<16x16xf32>
    %cst_68 = arith.constant dense<0.000000e+00> : vector<16x16xf32>
    %73 = tpu.matmul %71, %27, %cst_68 {dimension_numbers = #tpu.dot_dimension_numbers<[1], [0], [0], [1], [0, 0, 1, 1], [], []>} : vector<16x2xf32>, vector<2x16xf32>, vector<16x16xf32> -> vector<16x16xf32>
    %74 = arith.addf %72, %73 : vector<16x16xf32>
    %c0_69 = arith.constant 0 : index
    %c0_70 = arith.constant 0 : index
    %c0_71 = arith.constant 0 : index
    %75 = vector.load %arg16[%c0_69, %c0_70, %c0_71] : memref<2x16x16xf32, #tpu.memory_space<vmem>>, vector<1x16x16xf32>
    %76 = vector.shape_cast %75 : vector<1x16x16xf32> to vector<16x16xf32>
    %cst_72 = arith.constant dense<0.000000e+00> : vector<16x16xf32>
    %77 = tpu.matmul %74, %76, %cst_72 {dimension_numbers = #tpu.dot_dimension_numbers<[1], [0], [0], [1], [0, 0, 1, 1], [], []>} : vector<16x16xf32>, vector<16x16xf32>, vector<16x16xf32> -> vector<16x16xf32>
    %c0_73 = arith.constant 0 : index
    %c0_74 = arith.constant 0 : index
    %c0_75 = arith.constant 0 : index
    %78 = vector.load %arg17[%c0_73, %c0_74, %c0_75] : memref<2x1x16xf32, #tpu.memory_space<vmem>>, vector<1x1x16xf32>
    %79 = vector.shape_cast %78 : vector<1x1x16xf32> to vector<1x16xf32>
    %80 = vector.broadcast %79 : vector<1x16xf32> to vector<16x16xf32>
    %81 = arith.addf %77, %80 : vector<16x16xf32>
    %82 = arith.addf %22, %81 : vector<16x16xf32>
    %cst_76 = arith.constant dense<0.000000e+00> : vector<16x16xf32>
    %83 = tpu.matmul %23, %82, %cst_76 {dimension_numbers = #tpu.dot_dimension_numbers<[1], [0], [0], [1], [0, 0, 1, 1], [], []>} : vector<16x16xf32>, vector<16x16xf32>, vector<16x16xf32> -> vector<16x16xf32>
    %c0_77 = arith.constant 0 : index
    %c0_78 = arith.constant 0 : index
    %c0_79 = arith.constant 0 : index
    %84 = vector.load %arg18[%c0_77, %c0_78, %c0_79] : memref<2x16x32xf32, #tpu.memory_space<vmem>>, vector<1x16x32xf32>
    %85 = vector.shape_cast %84 : vector<1x16x32xf32> to vector<16x32xf32>
    %cst_80 = arith.constant dense<0.000000e+00> : vector<16x32xf32>
    %86 = tpu.matmul %83, %85, %cst_80 {dimension_numbers = #tpu.dot_dimension_numbers<[1], [0], [0], [1], [0, 0, 1, 1], [], []>} : vector<16x16xf32>, vector<16x32xf32>, vector<16x32xf32> -> vector<16x32xf32>
    %cst_81 = arith.constant 5.000000e-01 : f32
    %87 = vector.broadcast %cst_81 : f32 to vector<16x32xf32>
    %88 = arith.mulf %87, %86 : vector<16x32xf32>
    %cst_82 = arith.constant 0.707106769 : f32
    %89 = vector.broadcast %cst_82 : f32 to vector<16x32xf32>
    %90 = arith.mulf %86, %89 : vector<16x32xf32>
    %91 = math.absf %90 : vector<16x32xf32>
    %cst_83 = arith.constant 0.327591091 : f32
    %92 = vector.broadcast %cst_83 : f32 to vector<16x32xf32>
    %93 = arith.mulf %92, %91 : vector<16x32xf32>
    %cst_84 = arith.constant 1.000000e+00 : f32
    %94 = vector.broadcast %cst_84 : f32 to vector<16x32xf32>
    %95 = arith.addf %94, %93 : vector<16x32xf32>
    %cst_85 = arith.constant 1.000000e+00 : f32
    %96 = vector.broadcast %cst_85 : f32 to vector<16x32xf32>
    %97 = arith.divf %96, %95 : vector<16x32xf32>
    %cst_86 = arith.constant 1.06140542 : f32
    %98 = vector.broadcast %cst_86 : f32 to vector<16x32xf32>
    %99 = arith.mulf %98, %97 : vector<16x32xf32>
    %cst_87 = arith.constant -1.45315206 : f32
    %100 = vector.broadcast %cst_87 : f32 to vector<16x32xf32>
    %101 = arith.addf %99, %100 : vector<16x32xf32>
    %102 = arith.mulf %101, %97 : vector<16x32xf32>
    %cst_88 = arith.constant 1.42141378 : f32
    %103 = vector.broadcast %cst_88 : f32 to vector<16x32xf32>
    %104 = arith.addf %102, %103 : vector<16x32xf32>
    %105 = arith.mulf %104, %97 : vector<16x32xf32>
    %cst_89 = arith.constant -0.284496725 : f32
    %106 = vector.broadcast %cst_89 : f32 to vector<16x32xf32>
    %107 = arith.addf %105, %106 : vector<16x32xf32>
    %108 = arith.mulf %107, %97 : vector<16x32xf32>
    %cst_90 = arith.constant 0.254829586 : f32
    %109 = vector.broadcast %cst_90 : f32 to vector<16x32xf32>
    %110 = arith.addf %108, %109 : vector<16x32xf32>
    %111 = arith.mulf %110, %97 : vector<16x32xf32>
    %112 = arith.mulf %91, %91 : vector<16x32xf32>
    %cst_91 = arith.constant 0.000000e+00 : f32
    %113 = vector.broadcast %cst_91 : f32 to vector<16x32xf32>
    %114 = arith.subf %113, %112 : vector<16x32xf32>
    %115 = math.exp %114 : vector<16x32xf32>
    %116 = arith.mulf %111, %115 : vector<16x32xf32>
    %cst_92 = arith.constant 1.000000e+00 : f32
    %117 = vector.broadcast %cst_92 : f32 to vector<16x32xf32>
    %118 = arith.subf %117, %116 : vector<16x32xf32>
    %cst_93 = arith.constant 0.000000e+00 : f32
    %119 = vector.broadcast %cst_93 : f32 to vector<16x32xf32>
    %120 = arith.cmpf olt, %90, %119 : vector<16x32xf32>
    %cst_94 = arith.constant 0.000000e+00 : f32
    %121 = vector.broadcast %cst_94 : f32 to vector<16x32xf32>
    %122 = arith.subf %121, %118 : vector<16x32xf32>
    %123 = arith.select %120, %122, %118 : vector<16x32xi1>, vector<16x32xf32>
    %cst_95 = arith.constant 1.000000e+00 : f32
    %124 = vector.broadcast %cst_95 : f32 to vector<16x32xf32>
    %125 = arith.addf %124, %123 : vector<16x32xf32>
    %126 = arith.mulf %88, %125 : vector<16x32xf32>
    %c0_96 = arith.constant 0 : index
    %c0_97 = arith.constant 0 : index
    %c0_98 = arith.constant 0 : index
    %127 = vector.load %arg19[%c0_96, %c0_97, %c0_98] : memref<2x32x16xf32, #tpu.memory_space<vmem>>, vector<1x32x16xf32>
    %128 = vector.shape_cast %127 : vector<1x32x16xf32> to vector<32x16xf32>
    %cst_99 = arith.constant dense<0.000000e+00> : vector<16x16xf32>
    %129 = tpu.matmul %126, %128, %cst_99 {dimension_numbers = #tpu.dot_dimension_numbers<[1], [0], [0], [1], [0, 0, 1, 1], [], []>} : vector<16x32xf32>, vector<32x16xf32>, vector<16x16xf32> -> vector<16x16xf32>
    %130 = arith.addf %83, %129 : vector<16x16xf32>
    %cst_100 = arith.constant dense<0.000000e+00> : vector<16x16xf32>
    %131 = tpu.matmul %23, %130, %cst_100 {dimension_numbers = #tpu.dot_dimension_numbers<[1], [0], [0], [1], [0, 0, 1, 1], [], []>} : vector<16x16xf32>, vector<16x16xf32>, vector<16x16xf32> -> vector<16x16xf32>
    %c1_101 = arith.constant 1 : index
    %c0_102 = arith.constant 0 : index
    %c0_103 = arith.constant 0 : index
    %132 = vector.load %arg14[%c1_101, %c0_102, %c0_103] : memref<2x16x16xf32, #tpu.memory_space<vmem>>, vector<1x16x16xf32>
    %133 = vector.shape_cast %132 : vector<1x16x16xf32> to vector<16x16xf32>
    %cst_104 = arith.constant dense<0.000000e+00> : vector<16x16xf32>
    %134 = tpu.matmul %131, %133, %cst_104 {dimension_numbers = #tpu.dot_dimension_numbers<[1], [0], [0], [1], [0, 0, 1, 1], [], []>} : vector<16x16xf32>, vector<16x16xf32>, vector<16x16xf32> -> vector<16x16xf32>
    %c1_105 = arith.constant 1 : index
    %c0_106 = arith.constant 0 : index
    %c0_107 = arith.constant 0 : index
    %135 = vector.load %arg15[%c1_105, %c0_106, %c0_107] : memref<2x1x16xf32, #tpu.memory_space<vmem>>, vector<1x1x16xf32>
    %136 = vector.shape_cast %135 : vector<1x1x16xf32> to vector<1x16xf32>
    %137 = vector.broadcast %136 : vector<1x16xf32> to vector<16x16xf32>
    %138 = arith.addf %134, %137 : vector<16x16xf32>
    %139 = tpu.transpose %138, [1, 0] : vector<16x16xf32> -> vector<16x16xf32>
    %cst_108 = arith.constant 0.000000e+00 : f32
    %140 = vector.broadcast %cst_108 : f32 to vector<16x2xf32>
    %cst_109 = arith.constant 0.000000e+00 : f32
    %141 = vector.broadcast %cst_109 : f32 to vector<16x2xf32>
    %c0_110 = arith.constant 0 : index
    %c0_111 = arith.constant 0 : index
    %c0_112 = arith.constant 0 : index
    %142 = vector.load %arg11[%c0_110, %c0_111, %c0_112] : memref<2x16x16xf32, #tpu.memory_space<vmem>>, vector<1x16x16xf32>
    %143 = vector.shape_cast %142 : vector<1x16x16xf32> to vector<16x16xf32>
    %cst_113 = arith.constant dense<0.000000e+00> : vector<16x16xf32>
    %144 = tpu.matmul %143, %139, %cst_113 {dimension_numbers = #tpu.dot_dimension_numbers<[1], [0], [0], [1], [0, 0, 1, 1], [], []>} : vector<16x16xf32>, vector<16x16xf32>, vector<16x16xf32> -> vector<16x16xf32>
    %cst_114 = arith.constant dense<0.000000e+00> : vector<16x2xf32>
    %145 = tpu.matmul %144, %24, %cst_114 {dimension_numbers = #tpu.dot_dimension_numbers<[1], [0], [0], [1], [0, 0, 1, 1], [], []>} : vector<16x16xf32>, vector<16x2xf32>, vector<16x2xf32> -> vector<16x2xf32>
    %cst_115 = arith.constant dense<0.000000e+00> : vector<16x2xf32>
    %146 = tpu.matmul %144, %25, %cst_115 {dimension_numbers = #tpu.dot_dimension_numbers<[1], [0], [0], [1], [0, 0, 1, 1], [], []>} : vector<16x16xf32>, vector<16x2xf32>, vector<16x2xf32> -> vector<16x2xf32>
    %c0_116 = arith.constant 0 : index
    %c0_117 = arith.constant 0 : index
    %c0_118 = arith.constant 0 : index
    %147 = vector.load %arg12[%c0_116, %c0_117, %c0_118] : memref<2x16x2xf32, #tpu.memory_space<vmem>>, vector<1x16x2xf32>
    %148 = vector.shape_cast %147 : vector<1x16x2xf32> to vector<16x2xf32>
    %c0_119 = arith.constant 0 : index
    %c0_120 = arith.constant 0 : index
    %c0_121 = arith.constant 0 : index
    %149 = vector.load %arg13[%c0_119, %c0_120, %c0_121] : memref<2x16x2xf32, #tpu.memory_space<vmem>>, vector<1x16x2xf32>
    %150 = vector.shape_cast %149 : vector<1x16x2xf32> to vector<16x2xf32>
    %151 = arith.mulf %145, %148 : vector<16x2xf32>
    %152 = arith.addf %140, %151 : vector<16x2xf32>
    %153 = arith.mulf %146, %150 : vector<16x2xf32>
    %154 = arith.subf %152, %153 : vector<16x2xf32>
    %155 = arith.mulf %145, %150 : vector<16x2xf32>
    %156 = arith.addf %141, %155 : vector<16x2xf32>
    %157 = arith.mulf %146, %148 : vector<16x2xf32>
    %158 = arith.addf %156, %157 : vector<16x2xf32>
    %c1_122 = arith.constant 1 : index
    %c0_123 = arith.constant 0 : index
    %c0_124 = arith.constant 0 : index
    %159 = vector.load %arg11[%c1_122, %c0_123, %c0_124] : memref<2x16x16xf32, #tpu.memory_space<vmem>>, vector<1x16x16xf32>
    %160 = vector.shape_cast %159 : vector<1x16x16xf32> to vector<16x16xf32>
    %cst_125 = arith.constant dense<0.000000e+00> : vector<16x16xf32>
    %161 = tpu.matmul %160, %139, %cst_125 {dimension_numbers = #tpu.dot_dimension_numbers<[1], [0], [0], [1], [0, 0, 1, 1], [], []>} : vector<16x16xf32>, vector<16x16xf32>, vector<16x16xf32> -> vector<16x16xf32>
    %cst_126 = arith.constant dense<0.000000e+00> : vector<16x2xf32>
    %162 = tpu.matmul %161, %24, %cst_126 {dimension_numbers = #tpu.dot_dimension_numbers<[1], [0], [0], [1], [0, 0, 1, 1], [], []>} : vector<16x16xf32>, vector<16x2xf32>, vector<16x2xf32> -> vector<16x2xf32>
    %cst_127 = arith.constant dense<0.000000e+00> : vector<16x2xf32>
    %163 = tpu.matmul %161, %25, %cst_127 {dimension_numbers = #tpu.dot_dimension_numbers<[1], [0], [0], [1], [0, 0, 1, 1], [], []>} : vector<16x16xf32>, vector<16x2xf32>, vector<16x2xf32> -> vector<16x2xf32>
    %c1_128 = arith.constant 1 : index
    %c0_129 = arith.constant 0 : index
    %c0_130 = arith.constant 0 : index
    %164 = vector.load %arg12[%c1_128, %c0_129, %c0_130] : memref<2x16x2xf32, #tpu.memory_space<vmem>>, vector<1x16x2xf32>
    %165 = vector.shape_cast %164 : vector<1x16x2xf32> to vector<16x2xf32>
    %c1_131 = arith.constant 1 : index
    %c0_132 = arith.constant 0 : index
    %c0_133 = arith.constant 0 : index
    %166 = vector.load %arg13[%c1_131, %c0_132, %c0_133] : memref<2x16x2xf32, #tpu.memory_space<vmem>>, vector<1x16x2xf32>
    %167 = vector.shape_cast %166 : vector<1x16x2xf32> to vector<16x2xf32>
    %168 = arith.mulf %162, %165 : vector<16x2xf32>
    %169 = arith.addf %154, %168 : vector<16x2xf32>
    %170 = arith.mulf %163, %167 : vector<16x2xf32>
    %171 = arith.subf %169, %170 : vector<16x2xf32>
    %172 = arith.mulf %162, %167 : vector<16x2xf32>
    %173 = arith.addf %158, %172 : vector<16x2xf32>
    %174 = arith.mulf %163, %165 : vector<16x2xf32>
    %175 = arith.addf %173, %174 : vector<16x2xf32>
    %cst_134 = arith.constant dense<0.000000e+00> : vector<16x16xf32>
    %176 = tpu.matmul %171, %26, %cst_134 {dimension_numbers = #tpu.dot_dimension_numbers<[1], [0], [0], [1], [0, 0, 1, 1], [], []>} : vector<16x2xf32>, vector<2x16xf32>, vector<16x16xf32> -> vector<16x16xf32>
    %cst_135 = arith.constant dense<0.000000e+00> : vector<16x16xf32>
    %177 = tpu.matmul %175, %27, %cst_135 {dimension_numbers = #tpu.dot_dimension_numbers<[1], [0], [0], [1], [0, 0, 1, 1], [], []>} : vector<16x2xf32>, vector<2x16xf32>, vector<16x16xf32> -> vector<16x16xf32>
    %178 = arith.addf %176, %177 : vector<16x16xf32>
    %c1_136 = arith.constant 1 : index
    %c0_137 = arith.constant 0 : index
    %c0_138 = arith.constant 0 : index
    %179 = vector.load %arg16[%c1_136, %c0_137, %c0_138] : memref<2x16x16xf32, #tpu.memory_space<vmem>>, vector<1x16x16xf32>
    %180 = vector.shape_cast %179 : vector<1x16x16xf32> to vector<16x16xf32>
    %cst_139 = arith.constant dense<0.000000e+00> : vector<16x16xf32>
    %181 = tpu.matmul %178, %180, %cst_139 {dimension_numbers = #tpu.dot_dimension_numbers<[1], [0], [0], [1], [0, 0, 1, 1], [], []>} : vector<16x16xf32>, vector<16x16xf32>, vector<16x16xf32> -> vector<16x16xf32>
    %c1_140 = arith.constant 1 : index
    %c0_141 = arith.constant 0 : index
    %c0_142 = arith.constant 0 : index
    %182 = vector.load %arg17[%c1_140, %c0_141, %c0_142] : memref<2x1x16xf32, #tpu.memory_space<vmem>>, vector<1x1x16xf32>
    %183 = vector.shape_cast %182 : vector<1x1x16xf32> to vector<1x16xf32>
    %184 = vector.broadcast %183 : vector<1x16xf32> to vector<16x16xf32>
    %185 = arith.addf %181, %184 : vector<16x16xf32>
    %186 = arith.addf %131, %185 : vector<16x16xf32>
    %cst_143 = arith.constant dense<0.000000e+00> : vector<16x16xf32>
    %187 = tpu.matmul %23, %186, %cst_143 {dimension_numbers = #tpu.dot_dimension_numbers<[1], [0], [0], [1], [0, 0, 1, 1], [], []>} : vector<16x16xf32>, vector<16x16xf32>, vector<16x16xf32> -> vector<16x16xf32>
    %c1_144 = arith.constant 1 : index
    %c0_145 = arith.constant 0 : index
    %c0_146 = arith.constant 0 : index
    %188 = vector.load %arg18[%c1_144, %c0_145, %c0_146] : memref<2x16x32xf32, #tpu.memory_space<vmem>>, vector<1x16x32xf32>
    %189 = vector.shape_cast %188 : vector<1x16x32xf32> to vector<16x32xf32>
    %cst_147 = arith.constant dense<0.000000e+00> : vector<16x32xf32>
    %190 = tpu.matmul %187, %189, %cst_147 {dimension_numbers = #tpu.dot_dimension_numbers<[1], [0], [0], [1], [0, 0, 1, 1], [], []>} : vector<16x16xf32>, vector<16x32xf32>, vector<16x32xf32> -> vector<16x32xf32>
    %cst_148 = arith.constant 5.000000e-01 : f32
    %191 = vector.broadcast %cst_148 : f32 to vector<16x32xf32>
    %192 = arith.mulf %191, %190 : vector<16x32xf32>
    %cst_149 = arith.constant 0.707106769 : f32
    %193 = vector.broadcast %cst_149 : f32 to vector<16x32xf32>
    %194 = arith.mulf %190, %193 : vector<16x32xf32>
    %195 = math.absf %194 : vector<16x32xf32>
    %cst_150 = arith.constant 0.327591091 : f32
    %196 = vector.broadcast %cst_150 : f32 to vector<16x32xf32>
    %197 = arith.mulf %196, %195 : vector<16x32xf32>
    %cst_151 = arith.constant 1.000000e+00 : f32
    %198 = vector.broadcast %cst_151 : f32 to vector<16x32xf32>
    %199 = arith.addf %198, %197 : vector<16x32xf32>
    %cst_152 = arith.constant 1.000000e+00 : f32
    %200 = vector.broadcast %cst_152 : f32 to vector<16x32xf32>
    %201 = arith.divf %200, %199 : vector<16x32xf32>
    %cst_153 = arith.constant 1.06140542 : f32
    %202 = vector.broadcast %cst_153 : f32 to vector<16x32xf32>
    %203 = arith.mulf %202, %201 : vector<16x32xf32>
    %cst_154 = arith.constant -1.45315206 : f32
    %204 = vector.broadcast %cst_154 : f32 to vector<16x32xf32>
    %205 = arith.addf %203, %204 : vector<16x32xf32>
    %206 = arith.mulf %205, %201 : vector<16x32xf32>
    %cst_155 = arith.constant 1.42141378 : f32
    %207 = vector.broadcast %cst_155 : f32 to vector<16x32xf32>
    %208 = arith.addf %206, %207 : vector<16x32xf32>
    %209 = arith.mulf %208, %201 : vector<16x32xf32>
    %cst_156 = arith.constant -0.284496725 : f32
    %210 = vector.broadcast %cst_156 : f32 to vector<16x32xf32>
    %211 = arith.addf %209, %210 : vector<16x32xf32>
    %212 = arith.mulf %211, %201 : vector<16x32xf32>
    %cst_157 = arith.constant 0.254829586 : f32
    %213 = vector.broadcast %cst_157 : f32 to vector<16x32xf32>
    %214 = arith.addf %212, %213 : vector<16x32xf32>
    %215 = arith.mulf %214, %201 : vector<16x32xf32>
    %216 = arith.mulf %195, %195 : vector<16x32xf32>
    %cst_158 = arith.constant 0.000000e+00 : f32
    %217 = vector.broadcast %cst_158 : f32 to vector<16x32xf32>
    %218 = arith.subf %217, %216 : vector<16x32xf32>
    %219 = math.exp %218 : vector<16x32xf32>
    %220 = arith.mulf %215, %219 : vector<16x32xf32>
    %cst_159 = arith.constant 1.000000e+00 : f32
    %221 = vector.broadcast %cst_159 : f32 to vector<16x32xf32>
    %222 = arith.subf %221, %220 : vector<16x32xf32>
    %cst_160 = arith.constant 0.000000e+00 : f32
    %223 = vector.broadcast %cst_160 : f32 to vector<16x32xf32>
    %224 = arith.cmpf olt, %194, %223 : vector<16x32xf32>
    %cst_161 = arith.constant 0.000000e+00 : f32
    %225 = vector.broadcast %cst_161 : f32 to vector<16x32xf32>
    %226 = arith.subf %225, %222 : vector<16x32xf32>
    %227 = arith.select %224, %226, %222 : vector<16x32xi1>, vector<16x32xf32>
    %cst_162 = arith.constant 1.000000e+00 : f32
    %228 = vector.broadcast %cst_162 : f32 to vector<16x32xf32>
    %229 = arith.addf %228, %227 : vector<16x32xf32>
    %230 = arith.mulf %192, %229 : vector<16x32xf32>
    %c1_163 = arith.constant 1 : index
    %c0_164 = arith.constant 0 : index
    %c0_165 = arith.constant 0 : index
    %231 = vector.load %arg19[%c1_163, %c0_164, %c0_165] : memref<2x32x16xf32, #tpu.memory_space<vmem>>, vector<1x32x16xf32>
    %232 = vector.shape_cast %231 : vector<1x32x16xf32> to vector<32x16xf32>
    %cst_166 = arith.constant dense<0.000000e+00> : vector<16x16xf32>
    %233 = tpu.matmul %230, %232, %cst_166 {dimension_numbers = #tpu.dot_dimension_numbers<[1], [0], [0], [1], [0, 0, 1, 1], [], []>} : vector<16x32xf32>, vector<32x16xf32>, vector<16x16xf32> -> vector<16x16xf32>
    %234 = arith.addf %187, %233 : vector<16x16xf32>
    %cst_167 = arith.constant dense<0.000000e+00> : vector<16x16xf32>
    %235 = tpu.matmul %23, %234, %cst_167 {dimension_numbers = #tpu.dot_dimension_numbers<[1], [0], [0], [1], [0, 0, 1, 1], [], []>} : vector<16x16xf32>, vector<16x16xf32>, vector<16x16xf32> -> vector<16x16xf32>
    %cst_168 = arith.constant dense<0.000000e+00> : vector<16xf32>
    %236 = vector.multi_reduction <add>, %235, %cst_168 [1] : vector<16x16xf32> to vector<16xf32>
    %237 = vector.shape_cast %236 : vector<16xf32> to vector<16x1xf32>
    %cst_169 = arith.constant 1.600000e+01 : f32
    %238 = vector.broadcast %cst_169 : f32 to vector<16x1xf32>
    %239 = arith.divf %237, %238 : vector<16x1xf32>
    %240 = vector.broadcast %239 : vector<16x1xf32> to vector<16x16xf32>
    %241 = arith.subf %235, %240 : vector<16x16xf32>
    %242 = arith.mulf %241, %241 : vector<16x16xf32>
    %cst_170 = arith.constant dense<0.000000e+00> : vector<16xf32>
    %243 = vector.multi_reduction <add>, %242, %cst_170 [1] : vector<16x16xf32> to vector<16xf32>
    %244 = vector.shape_cast %243 : vector<16xf32> to vector<16x1xf32>
    %cst_171 = arith.constant 1.600000e+01 : f32
    %245 = vector.broadcast %cst_171 : f32 to vector<16x1xf32>
    %246 = arith.divf %244, %245 : vector<16x1xf32>
    %247 = vector.broadcast %239 : vector<16x1xf32> to vector<16x16xf32>
    %248 = arith.subf %235, %247 : vector<16x16xf32>
    %cst_172 = arith.constant 9.99999974E-6 : f32
    %249 = vector.broadcast %cst_172 : f32 to vector<16x1xf32>
    %250 = arith.addf %246, %249 : vector<16x1xf32>
    %251 = math.rsqrt %250 : vector<16x1xf32>
    %252 = vector.broadcast %251 : vector<16x1xf32> to vector<16x16xf32>
    %253 = arith.mulf %248, %252 : vector<16x16xf32>
    %c0_173 = arith.constant 0 : index
    %c0_174 = arith.constant 0 : index
    %254 = vector.load %arg20[%c0_173, %c0_174] : memref<1x16xf32, #tpu.memory_space<vmem>>, vector<1x16xf32>
    %255 = vector.broadcast %254 : vector<1x16xf32> to vector<16x16xf32>
    %256 = arith.mulf %253, %255 : vector<16x16xf32>
    %c0_175 = arith.constant 0 : index
    %c0_176 = arith.constant 0 : index
    %257 = vector.load %arg21[%c0_175, %c0_176] : memref<1x16xf32, #tpu.memory_space<vmem>>, vector<1x16xf32>
    %258 = vector.broadcast %257 : vector<1x16xf32> to vector<16x16xf32>
    %259 = arith.addf %256, %258 : vector<16x16xf32>
    %cst_177 = arith.constant dense<0.000000e+00> : vector<16xf32>
    %260 = vector.multi_reduction <add>, %259, %cst_177 [0] : vector<16x16xf32> to vector<16xf32>
    %261 = vector.shape_cast %260 : vector<16xf32> to vector<1x16xf32>
    %cst_178 = arith.constant 1.600000e+01 : f32
    %262 = vector.broadcast %cst_178 : f32 to vector<1x16xf32>
    %263 = arith.divf %261, %262 : vector<1x16xf32>
    %264 = vector.broadcast %263 : vector<1x16xf32> to vector<16x16xf32>
    %265 = arith.subf %259, %264 : vector<16x16xf32>
    %cst_179 = arith.constant 5.000000e-01 : f32
    %266 = vector.broadcast %cst_179 : f32 to vector<16x16xf32>
    %267 = arith.mulf %266, %265 : vector<16x16xf32>
    %cst_180 = arith.constant 0.707106769 : f32
    %268 = vector.broadcast %cst_180 : f32 to vector<16x16xf32>
    %269 = arith.mulf %265, %268 : vector<16x16xf32>
    %270 = math.absf %269 : vector<16x16xf32>
    %cst_181 = arith.constant 0.327591091 : f32
    %271 = vector.broadcast %cst_181 : f32 to vector<16x16xf32>
    %272 = arith.mulf %271, %270 : vector<16x16xf32>
    %cst_182 = arith.constant 1.000000e+00 : f32
    %273 = vector.broadcast %cst_182 : f32 to vector<16x16xf32>
    %274 = arith.addf %273, %272 : vector<16x16xf32>
    %cst_183 = arith.constant 1.000000e+00 : f32
    %275 = vector.broadcast %cst_183 : f32 to vector<16x16xf32>
    %276 = arith.divf %275, %274 : vector<16x16xf32>
    %cst_184 = arith.constant 1.06140542 : f32
    %277 = vector.broadcast %cst_184 : f32 to vector<16x16xf32>
    %278 = arith.mulf %277, %276 : vector<16x16xf32>
    %cst_185 = arith.constant -1.45315206 : f32
    %279 = vector.broadcast %cst_185 : f32 to vector<16x16xf32>
    %280 = arith.addf %278, %279 : vector<16x16xf32>
    %281 = arith.mulf %280, %276 : vector<16x16xf32>
    %cst_186 = arith.constant 1.42141378 : f32
    %282 = vector.broadcast %cst_186 : f32 to vector<16x16xf32>
    %283 = arith.addf %281, %282 : vector<16x16xf32>
    %284 = arith.mulf %283, %276 : vector<16x16xf32>
    %cst_187 = arith.constant -0.284496725 : f32
    %285 = vector.broadcast %cst_187 : f32 to vector<16x16xf32>
    %286 = arith.addf %284, %285 : vector<16x16xf32>
    %287 = arith.mulf %286, %276 : vector<16x16xf32>
    %cst_188 = arith.constant 0.254829586 : f32
    %288 = vector.broadcast %cst_188 : f32 to vector<16x16xf32>
    %289 = arith.addf %287, %288 : vector<16x16xf32>
    %290 = arith.mulf %289, %276 : vector<16x16xf32>
    %291 = arith.mulf %270, %270 : vector<16x16xf32>
    %cst_189 = arith.constant 0.000000e+00 : f32
    %292 = vector.broadcast %cst_189 : f32 to vector<16x16xf32>
    %293 = arith.subf %292, %291 : vector<16x16xf32>
    %294 = math.exp %293 : vector<16x16xf32>
    %295 = arith.mulf %290, %294 : vector<16x16xf32>
    %cst_190 = arith.constant 1.000000e+00 : f32
    %296 = vector.broadcast %cst_190 : f32 to vector<16x16xf32>
    %297 = arith.subf %296, %295 : vector<16x16xf32>
    %cst_191 = arith.constant 0.000000e+00 : f32
    %298 = vector.broadcast %cst_191 : f32 to vector<16x16xf32>
    %299 = arith.cmpf olt, %269, %298 : vector<16x16xf32>
    %cst_192 = arith.constant 0.000000e+00 : f32
    %300 = vector.broadcast %cst_192 : f32 to vector<16x16xf32>
    %301 = arith.subf %300, %297 : vector<16x16xf32>
    %302 = arith.select %299, %301, %297 : vector<16x16xi1>, vector<16x16xf32>
    %cst_193 = arith.constant 1.000000e+00 : f32
    %303 = vector.broadcast %cst_193 : f32 to vector<16x16xf32>
    %304 = arith.addf %303, %302 : vector<16x16xf32>
    %305 = arith.mulf %267, %304 : vector<16x16xf32>
    %306 = arith.mulf %305, %3 : vector<16x16xf32>
    %c0_194 = arith.constant 0 : index
    %c0_195 = arith.constant 0 : index
    %307 = vector.load %arg22[%c0_194, %c0_195] : memref<16x16xf32, #tpu.memory_space<vmem>>, vector<16x16xf32>
    %308 = arith.mulf %306, %307 : vector<16x16xf32>
    %cst_196 = arith.constant dense<0.000000e+00> : vector<16xf32>
    %309 = vector.multi_reduction <add>, %308, %cst_196 [1] : vector<16x16xf32> to vector<16xf32>
    %310 = vector.shape_cast %309 : vector<16xf32> to vector<16x1xf32>
    %cst_197 = arith.constant dense<0.000000e+00> : vector<1xf32>
    %311 = vector.multi_reduction <add>, %310, %cst_197 [0] : vector<16x1xf32> to vector<1xf32>
    %312 = vector.shape_cast %311 : vector<1xf32> to vector<1x1xf32>
    %c0_198 = arith.constant 0 : index
    %c0_199 = arith.constant 0 : index
    %313 = vector.load %arg23[%c0_198, %c0_199] : memref<1x1xf32, #tpu.memory_space<vmem>>, vector<1x1xf32>
    %314 = arith.addf %312, %313 : vector<1x1xf32>
    %c0_200 = arith.constant 0 : index
    %c0_201 = arith.constant 0 : index
    %c0_202 = arith.constant 0 : index
    %315 = vector.load %arg24[%c0_200, %c0_201, %c0_202] : memref<1x1x1xf32, #tpu.memory_space<vmem>>, vector<1x1x1xf32>
    %316 = vector.shape_cast %315 : vector<1x1x1xf32> to vector<1x1xf32>
    %317 = vector.shape_cast %314 : vector<1x1xf32> to vector<1x1x1xf32>
    tpu.vector_store %arg24[%c0_200, %c0_201, %c0_202], %317 {strides = array<i32>} : memref<1x1x1xf32, #tpu.memory_space<vmem>>, vector<1x1x1xf32>,
    return
  }
  func.func @transform_0(%arg0: i32) -> (i32, i32, i32) {
    %c0_i32 = arith.constant 0 : i32
    %c0_i32_0 = arith.constant 0 : i32
    %c0_i32_1 = arith.constant 0 : i32
    return %arg0, %c0_i32, %c0_i32_0 : i32, i32, i32
  }
  func.func @transform_1(%arg0: i32) -> (i32, i32, i32) {
    %c0_i32 = arith.constant 0 : i32
    %c0_i32_0 = arith.constant 0 : i32
    %c0_i32_1 = arith.constant 0 : i32
    return %arg0, %c0_i32, %c0_i32_0 : i32, i32, i32
  }
  func.func @transform_2(%arg0: i32) -> (i32, i32, i32) {
    %c0_i32 = arith.constant 0 : i32
    %c0_i32_0 = arith.constant 0 : i32
    %c0_i32_1 = arith.constant 0 : i32
    %c0_i32_2 = arith.constant 0 : i32
    return %c0_i32, %c0_i32_0, %c0_i32_1 : i32, i32, i32
  }
  func.func @transform_3(%arg0: i32) -> (i32, i32, i32) {
    %c0_i32 = arith.constant 0 : i32
    %c0_i32_0 = arith.constant 0 : i32
    %c0_i32_1 = arith.constant 0 : i32
    %c0_i32_2 = arith.constant 0 : i32
    return %c0_i32, %c0_i32_0, %c0_i32_1 : i32, i32, i32
  }
  func.func @transform_4(%arg0: i32) -> (i32, i32) {
    %c0_i32 = arith.constant 0 : i32
    %c0_i32_0 = arith.constant 0 : i32
    %c0_i32_1 = arith.constant 0 : i32
    return %c0_i32, %c0_i32_0 : i32, i32
  }
  func.func @transform_5(%arg0: i32) -> (i32, i32) {
    %c0_i32 = arith.constant 0 : i32
    %c0_i32_0 = arith.constant 0 : i32
    %c0_i32_1 = arith.constant 0 : i32
    return %c0_i32, %c0_i32_0 : i32, i32
  }
  func.func @transform_6(%arg0: i32) -> (i32, i32) {
    %c0_i32 = arith.constant 0 : i32
    %c0_i32_0 = arith.constant 0 : i32
    %c0_i32_1 = arith.constant 0 : i32
    return %c0_i32, %c0_i32_0 : i32, i32
  }
  func.func @transform_7(%arg0: i32) -> (i32, i32) {
    %c0_i32 = arith.constant 0 : i32
    %c0_i32_0 = arith.constant 0 : i32
    %c0_i32_1 = arith.constant 0 : i32
    return %c0_i32, %c0_i32_0 : i32, i32
  }
  func.func @transform_8(%arg0: i32) -> (i32, i32) {
    %c0_i32 = arith.constant 0 : i32
    %c0_i32_0 = arith.constant 0 : i32
    %c0_i32_1 = arith.constant 0 : i32
    return %c0_i32, %c0_i32_0 : i32, i32
  }
  func.func @transform_9(%arg0: i32) -> (i32, i32) {
    %c0_i32 = arith.constant 0 : i32
    %c0_i32_0 = arith.constant 0 : i32
    %c0_i32_1 = arith.constant 0 : i32
    return %c0_i32, %c0_i32_0 : i32, i32
  }
  func.func @transform_10(%arg0: i32) -> (i32, i32, i32) {
    %c0_i32 = arith.constant 0 : i32
    %c0_i32_0 = arith.constant 0 : i32
    %c0_i32_1 = arith.constant 0 : i32
    %c0_i32_2 = arith.constant 0 : i32
    return %c0_i32, %c0_i32_0, %c0_i32_1 : i32, i32, i32
  }
  func.func @transform_11(%arg0: i32) -> (i32, i32, i32) {
    %c0_i32 = arith.constant 0 : i32
    %c0_i32_0 = arith.constant 0 : i32
    %c0_i32_1 = arith.constant 0 : i32
    %c0_i32_2 = arith.constant 0 : i32
    return %c0_i32, %c0_i32_0, %c0_i32_1 : i32, i32, i32
  }
  func.func @transform_12(%arg0: i32) -> (i32, i32, i32) {
    %c0_i32 = arith.constant 0 : i32
    %c0_i32_0 = arith.constant 0 : i32
    %c0_i32_1 = arith.constant 0 : i32
    %c0_i32_2 = arith.constant 0 : i32
    return %c0_i32, %c0_i32_0, %c0_i32_1 : i32, i32, i32
  }
  func.func @transform_13(%arg0: i32) -> (i32, i32, i32) {
    %c0_i32 = arith.constant 0 : i32
    %c0_i32_0 = arith.constant 0 : i32
    %c0_i32_1 = arith.constant 0 : i32
    %c0_i32_2 = arith.constant 0 : i32
    return %c0_i32, %c0_i32_0, %c0_i32_1 : i32, i32, i32
  }
  func.func @transform_14(%arg0: i32) -> (i32, i32, i32) {
    %c0_i32 = arith.constant 0 : i32
    %c0_i32_0 = arith.constant 0 : i32
    %c0_i32_1 = arith.constant 0 : i32
    %c0_i32_2 = arith.constant 0 : i32
    return %c0_i32, %c0_i32_0, %c0_i32_1 : i32, i32, i32
  }
  func.func @transform_15(%arg0: i32) -> (i32, i32, i32) {
    %c0_i32 = arith.constant 0 : i32
    %c0_i32_0 = arith.constant 0 : i32
    %c0_i32_1 = arith.constant 0 : i32
    %c0_i32_2 = arith.constant 0 : i32
    return %c0_i32, %c0_i32_0, %c0_i32_1 : i32, i32, i32
  }
  func.func @transform_16(%arg0: i32) -> (i32, i32, i32) {
    %c0_i32 = arith.constant 0 : i32
    %c0_i32_0 = arith.constant 0 : i32
    %c0_i32_1 = arith.constant 0 : i32
    %c0_i32_2 = arith.constant 0 : i32
    return %c0_i32, %c0_i32_0, %c0_i32_1 : i32, i32, i32
  }
  func.func @transform_17(%arg0: i32) -> (i32, i32, i32) {
    %c0_i32 = arith.constant 0 : i32
    %c0_i32_0 = arith.constant 0 : i32
    %c0_i32_1 = arith.constant 0 : i32
    %c0_i32_2 = arith.constant 0 : i32
    return %c0_i32, %c0_i32_0, %c0_i32_1 : i32, i32, i32
  }
  func.func @transform_18(%arg0: i32) -> (i32, i32, i32) {
    %c0_i32 = arith.constant 0 : i32
    %c0_i32_0 = arith.constant 0 : i32
    %c0_i32_1 = arith.constant 0 : i32
    %c0_i32_2 = arith.constant 0 : i32
    return %c0_i32, %c0_i32_0, %c0_i32_1 : i32, i32, i32
  }
  func.func @transform_19(%arg0: i32) -> (i32, i32) {
    %c0_i32 = arith.constant 0 : i32
    %c0_i32_0 = arith.constant 0 : i32
    %c0_i32_1 = arith.constant 0 : i32
    return %c0_i32, %c0_i32_0 : i32, i32
  }
  func.func @transform_20(%arg0: i32) -> (i32, i32) {
    %c0_i32 = arith.constant 0 : i32
    %c0_i32_0 = arith.constant 0 : i32
    %c0_i32_1 = arith.constant 0 : i32
    return %c0_i32, %c0_i32_0 : i32, i32
  }
  func.func @transform_21(%arg0: i32) -> (i32, i32) {
    %c0_i32 = arith.constant 0 : i32
    %c0_i32_0 = arith.constant 0 : i32
    %c0_i32_1 = arith.constant 0 : i32
    return %c0_i32, %c0_i32_0 : i32, i32
  }
  func.func @transform_22(%arg0: i32) -> (i32, i32) {
    %c0_i32 = arith.constant 0 : i32
    %c0_i32_0 = arith.constant 0 : i32
    %c0_i32_1 = arith.constant 0 : i32
    return %c0_i32, %c0_i32_0 : i32, i32
  }
  func.func @transform_23(%arg0: i32) -> (i32, i32, i32) {
    %c0_i32 = arith.constant 0 : i32
    %c0_i32_0 = arith.constant 0 : i32
    %c0_i32_1 = arith.constant 0 : i32
    return %arg0, %c0_i32, %c0_i32_0 : i32, i32, i32
  }
}

</mosaic_0001>

<llo_original>
// kernel: _lambda_.1
$region0: #{_lambda_.1}
  #allocation0 [shape = 'u32[]', space=smem, size = 0x4, offset = 0x4, fixed_abs, tag = 'smem constant byte address 0x4 - core index']
  #allocation1 [shape = 'u32[144,128]{1,0:T(1,128)}', space=vmem, size = 0x12000, scoped, tag = 'internal scratch']
  #allocation2 [shape = 'f32[1,1]{1,0:T(1,128)S(1)}', space=vmem, size = 0x200, scoped, tag = 'scoped memory for _lambda_.1']
  %s0 = inlined_call_operand.vmem [shape: f32[2,16,16], index: 0, kind: input, shape index: {}]
  %s1 = inlined_call_operand.vmem [shape: f32[2,16,16], index: 1, kind: input, shape index: {}]
  %s2 = inlined_call_operand.vmem [shape: f32[2,16,16], index: 2, kind: input, shape index: {}]
  %s3 = inlined_call_operand.vmem [shape: f32[3,16,16], index: 3, kind: input, shape index: {}]
  %s4 = inlined_call_operand.vmem [shape: f32[16,16], index: 4, kind: input, shape index: {}]
  %s5 = inlined_call_operand.vmem [shape: f32[16,16], index: 5, kind: input, shape index: {}]
  %s6 = inlined_call_operand.hbm [shape: f32[16,2], index: 6, kind: input, shape index: {}]
  %s7 = inlined_call_operand.hbm [shape: f32[16,2], index: 7, kind: input, shape index: {}]
  %s8 = inlined_call_operand.hbm [shape: f32[2,16], index: 8, kind: input, shape index: {}]
  %s9 = inlined_call_operand.hbm [shape: f32[2,16], index: 9, kind: input, shape index: {}]
  %s10 = inlined_call_operand.vmem [shape: f32[2,16,16], index: 10, kind: input, shape index: {}]
  %s11 = inlined_call_operand.vmem [shape: f32[2,16,2], index: 11, kind: input, shape index: {}]
  %s12 = inlined_call_operand.hbm [shape: f32[2,16,2], index: 12, kind: input, shape index: {}]
  %s13 = inlined_call_operand.hbm [shape: f32[2,16,16], index: 13, kind: input, shape index: {}]
  %s14 = inlined_call_operand.hbm [shape: f32[2,1,16], index: 14, kind: input, shape index: {}]
  %s15 = inlined_call_operand.hbm [shape: f32[2,16,16], index: 15, kind: input, shape index: {}]
  %s16 = inlined_call_operand.hbm [shape: f32[2,1,16], index: 16, kind: input, shape index: {}]
  %s17 = inlined_call_operand.hbm [shape: f32[2,16,32], index: 17, kind: input, shape index: {}]
  %s18 = inlined_call_operand.vmem [shape: f32[2,32,16], index: 18, kind: input, shape index: {}]
  %s19 = inlined_call_operand.vmem [shape: f32[1,16], index: 19, kind: input, shape index: {}]
  %s20 = inlined_call_operand.vmem [shape: f32[1,16], index: 20, kind: input, shape index: {}]
  %s21 = inlined_call_operand.hbm [shape: f32[16,16], index: 21, kind: input, shape index: {}]
  %s22 = inlined_call_operand.<no memory space> [shape: f32[1,1], index: 22, kind: input, shape index: {}]
  %s23 = inlined_call_operand.vmem [shape: f32[2,1,1], index: 23, kind: output, shape index: {}]
  %s24 = sld [smem:[#allocation0]]
  $region169: #{_lambda_.1} parent=0
    _
  %s26 = ssub.s32 1, %s24
  %s27 = scalar_select 0, %s26, %s24
  %v28 = vstv %s22
  %29 = vst [vmem:[#allocation2] sm:$0x1] %v28
  $region1: #{_lambda_.1} parent=0
    #allocation3 [shape = 'u8[8192]{0}', space=vmem, size = 0x2000, scoped, tag = 'input window, operand 6, single buffered']
    #allocation4 [shape = 's32[2]{0}', space=sflag, size = 0x8, scoped, tag = 'scoped memory for _lambda_.1']
    #allocation5 [shape = 'u8[8192]{0}', space=vmem, size = 0x2000, scoped, tag = 'input window, operand 7, single buffered']
    #allocation6 [shape = 's32[1]{0}', space=sflag, size = 0x4, scoped, tag = 'scoped memory for _lambda_.1']
    #allocation7 [shape = 'u8[1024]{0}', space=vmem, size = 0x400, scoped, tag = 'input window, operand 8, single buffered']
    #allocation8 [shape = 'u8[1024]{0}', space=vmem, size = 0x400, scoped, tag = 'input window, operand 9, single buffered']
    #allocation9 [shape = 's32[1]{0}', space=sflag, size = 0x4, scoped, tag = 'scoped memory for _lambda_.1']
    #allocation10 [shape = 'u8[16384]{0}', space=vmem, size = 0x4000, scoped, tag = 'input window, operand 12, single buffered']
    #allocation11 [shape = 'u8[16384]{0}', space=vmem, size = 0x4000, scoped, tag = 'input window, operand 13, single buffered']
    #allocation12 [shape = 's32[1]{0}', space=sflag, size = 0x4, scoped, tag = 'scoped memory for _lambda_.1']
    #allocation13 [shape = 'u8[1024]{0}', space=vmem, size = 0x400, scoped, tag = 'input window, operand 14, single buffered']
    #allocation14 [shape = 'u8[16384]{0}', space=vmem, size = 0x4000, scoped, tag = 'input window, operand 15, single buffered']
    #allocation15 [shape = 's32[1]{0}', space=sflag, size = 0x4, scoped, tag = 'scoped memory for _lambda_.1']
    #allocation16 [shape = 'u8[1024]{0}', space=vmem, size = 0x400, scoped, tag = 'input window, operand 16, single buffered']
    #allocation17 [shape = 'u8[16384]{0}', space=vmem, size = 0x4000, scoped, tag = 'input window, operand 17, single buffered']
    #allocation18 [shape = 's32[1]{0}', space=sflag, size = 0x4, scoped, tag = 'scoped memory for _lambda_.1']
    #allocation19 [shape = 'u8[8192]{0}', space=vmem, size = 0x2000, scoped, tag = 'input window, operand 21, single buffered']
    %30 = vsyncpa [#allocation4], 0
    %31 = vsyncpa [#allocation6], 0
    %32 = vsyncpa [#allocation9], 0
    %33 = vsyncpa [#allocation12], 0
    %34 = vsyncpa [#allocation15], 0
    %35 = vsyncpa [#allocation18], 0
    loop: start=0, step=1, limit=4
    $region2: #{_lambda_.1} parent=1 // loop_pre_header
      _
    $region3: #{_lambda_.1} parent=1 // loop_header
      %s37 = sphi 0, %s41
      %p38 = scmp.ge.s32.totalorder %s37, 4
      %s47 = sphi 0, %s49
      %s50 = sphi 0, %s47
      %s51 = sphi 0, %s50
      %s67 = sphi 0, %s51
      %s73 = sphi 0, %s75
      %s76 = sphi 0, %s73
      %s77 = sphi 0, %s76
      %s93 = sphi 0, %s77
      %s97 = sphi 0, %s97
      %s99 = sphi 0, %s97
      %s100 = sphi 0, %s99
      %s114 = sphi 0, %s100
      %s118 = sphi 0, %s118
      %s120 = sphi 0, %s118
      %s121 = sphi 0, %s120
      %s135 = sphi 0, %s121
      %s139 = sphi 0, %s139
      %s141 = sphi 0, %s139
      %s142 = sphi 0, %s141
      %s156 = sphi 0, %s142
      %s160 = sphi 0, %s160
      %s162 = sphi 0, %s160
      %s163 = sphi 0, %s162
      %s177 = sphi 0, %s163
      %s181 = sphi 0, %s181
      %s183 = sphi 0, %s181
      %s184 = sphi 0, %s183
      %s198 = sphi 0, %s184
      %s202 = sphi 0, %s202
      %s204 = sphi 0, %s202
      %s205 = sphi 0, %s204
      %s219 = sphi 0, %s205
      %s223 = sphi 0, %s223
      %s225 = sphi 0, %s223
      %s226 = sphi 0, %s225
      %s240 = sphi 0, %s226
      %s244 = sphi 0, %s244
      %s246 = sphi 0, %s244
      %s247 = sphi 0, %s246
      %s261 = sphi 0, %s247
      %s265 = sphi 0, %s265
      %s267 = sphi 0, %s265
      %s268 = sphi 0, %s267
      %s282 = sphi 0, %s268
      %s286 = sphi 0, %s286
      %s288 = sphi 0, %s286
      %s289 = sphi 0, %s288
      %s303 = sphi 0, %s289
      %s307 = sphi 0, %s307
      %s309 = sphi 0, %s307
      %s310 = sphi 0, %s309
      %s324 = sphi 0, %s310
      %s328 = sphi 0, %s328
      %s330 = sphi 0, %s328
      %s331 = sphi 0, %s330
      %s345 = sphi 0, %s331
      %s349 = sphi 0, %s349
      %s351 = sphi 0, %s349
      %s352 = sphi 0, %s351
      %s366 = sphi 0, %s352
      %s370 = sphi 0, %s370
      %s372 = sphi 0, %s370
      %s373 = sphi 0, %s372
      %s387 = sphi 0, %s373
      %s391 = sphi 0, %s391
      %s393 = sphi 0, %s391
      %s394 = sphi 0, %s393
      %s408 = sphi 0, %s394
      %s412 = sphi 0, %s412
      %s414 = sphi 0, %s412
      %s415 = sphi 0, %s414
      %s429 = sphi 0, %s415
      %s433 = sphi 0, %s433
      %s435 = sphi 0, %s433
      %s436 = sphi 0, %s435
      %s450 = sphi 0, %s436
      %s454 = sphi 0, %s454
      %s456 = sphi 0, %s454
      %s457 = sphi 0, %s456
      %s471 = sphi 0, %s457
      %s475 = sphi 0, %s475
      %s477 = sphi 0, %s475
      %s478 = sphi 0, %s477
      %s492 = sphi 0, %s478
      %s496 = sphi 0, %s496
      %s498 = sphi 0, %s496
      %s499 = sphi 0, %s498
      %s513 = sphi 0, %s499
      %s517 = sphi 0, %s517
      %s519 = sphi 0, %s517
      %s520 = sphi 0, %s519
      %s534 = sphi 0, %s520
      %s540 = sphi 0, %s542
      %s543 = sphi 0, %s540
      %s544 = sphi 0, %s543
      %s560 = sphi 0, %s544
    $region4: #{_lambda_.1} parent=1 // loop_header_branch
      %40 = sbr.rel (%p38) target = $region8
    $region5: #{_lambda_.1} parent=1 // loop_body
      %s42 = ssub.s32 %s37, 1
      %s43 = ssub.s32 %s37, 2
      %s44 = sadd.s32 %s37, 1
      %s45 = ssub.s32 %s37, %s44
      %p46 = scmp.eq.s32.totalorder %s45, 0
      %s48 = sadd.s32 %s47, 1
      %s49 = scalar_select %p46, %s47, %s48
      %p52 = pneg %p46
      %p53 = scmp.eq.s32.totalorder %s37, 1
      %p54 = por %p52, %p53
      %p55 = scmp.ne.s32.totalorder %s47, %s50
      %p56 = scmp.eq.s32.totalorder %s37, 0
      %p57 = por %p55, %p56
      %p58 = scmp.ne.s32.totalorder %s47, %s50
      %p59 = scmp.eq.s32.totalorder %s42, 1
      %p60 = por %p58, %p59
      %p61 = scmp.ne.s32.totalorder %s50, %s51
      %p62 = scmp.eq.s32.totalorder %s42, 0
      %p63 = por %p61, %p62
      %p64 = scmp.ne.s32.totalorder %s50, %s51
      %p65 = scmp.eq.s32.totalorder %s43, 1
      %p66 = por %p64, %p65
      %p68 = scmp.ne.s32.totalorder %s51, %s67
      %p69 = scmp.eq.s32.totalorder %s43, 0
      %p70 = por %p68, %p69
      %s71 = ssub.s32 %s37, %s44
      %p72 = scmp.eq.s32.totalorder %s71, 0
      %s74 = sadd.s32 %s73, 1
      %s75 = scalar_select %p72, %s73, %s74
      %p78 = pneg %p72
      %p79 = scmp.eq.s32.totalorder %s37, 1
      %p80 = por %p78, %p79
      %p81 = scmp.ne.s32.totalorder %s73, %s76
      %p82 = scmp.eq.s32.totalorder %s37, 0
      %p83 = por %p81, %p82
      %p84 = scmp.ne.s32.totalorder %s73, %s76
      %p85 = scmp.eq.s32.totalorder %s42, 1
      %p86 = por %p84, %p85
      %p87 = scmp.ne.s32.totalorder %s76, %s77
      %p88 = scmp.eq.s32.totalorder %s42, 0
      %p89 = por %p87, %p88
      %p90 = scmp.ne.s32.totalorder %s76, %s77
      %p91 = scmp.eq.s32.totalorder %s43, 1
      %p92 = por %p90, %p91
      %p94 = scmp.ne.s32.totalorder %s77, %s93
      %p95 = scmp.eq.s32.totalorder %s43, 0
      %p96 = por %p94, %p95
      %s98 = sadd.s32 %s97, 1
      %p101 = scmp.eq.s32.totalorder %s37, 1
      %p102 = scmp.ne.s32.totalorder %s97, %s99
      %p103 = scmp.eq.s32.totalorder %s37, 0
      %p104 = por %p102, %p103
      %p105 = scmp.ne.s32.totalorder %s97, %s99
      %p106 = scmp.eq.s32.totalorder %s42, 1
      %p107 = por %p105, %p106
      %p108 = scmp.ne.s32.totalorder %s99, %s100
      %p109 = scmp.eq.s32.totalorder %s42, 0
      %p110 = por %p108, %p109
      %p111 = scmp.ne.s32.totalorder %s99, %s100
      %p112 = scmp.eq.s32.totalorder %s43, 1
      %p113 = por %p111, %p112
      %p115 = scmp.ne.s32.totalorder %s100, %s114
      %p116 = scmp.eq.s32.totalorder %s43, 0
      %p117 = por %p115, %p116
      %s119 = sadd.s32 %s118, 1
      %p122 = scmp.eq.s32.totalorder %s37, 1
      %p123 = scmp.ne.s32.totalorder %s118, %s120
      %p124 = scmp.eq.s32.totalorder %s37, 0
      %p125 = por %p123, %p124
      %p126 = scmp.ne.s32.totalorder %s118, %s120
      %p127 = scmp.eq.s32.totalorder %s42, 1
      %p128 = por %p126, %p127
      %p129 = scmp.ne.s32.totalorder %s120, %s121
      %p130 = scmp.eq.s32.totalorder %s42, 0
      %p131 = por %p129, %p130
      %p132 = scmp.ne.s32.totalorder %s120, %s121
      %p133 = scmp.eq.s32.totalorder %s43, 1
      %p134 = por %p132, %p133
      %p136 = scmp.ne.s32.totalorder %s121, %s135
      %p137 = scmp.eq.s32.totalorder %s43, 0
      %p138 = por %p136, %p137
      %s140 = sadd.s32 %s139, 1
      %p143 = scmp.eq.s32.totalorder %s37, 1
      %p144 = scmp.ne.s32.totalorder %s139, %s141
      %p145 = scmp.eq.s32.totalorder %s37, 0
      %p146 = por %p144, %p145
      %p147 = scmp.ne.s32.totalorder %s139, %s141
      %p148 = scmp.eq.s32.totalorder %s42, 1
      %p149 = por %p147, %p148
      %p150 = scmp.ne.s32.totalorder %s141, %s142
      %p151 = scmp.eq.s32.totalorder %s42, 0
      %p152 = por %p150, %p151
      %p153 = scmp.ne.s32.totalorder %s141, %s142
      %p154 = scmp.eq.s32.totalorder %s43, 1
      %p155 = por %p153, %p154
      %p157 = scmp.ne.s32.totalorder %s142, %s156
      %p158 = scmp.eq.s32.totalorder %s43, 0
      %p159 = por %p157, %p158
      %s161 = sadd.s32 %s160, 1
      %p164 = scmp.eq.s32.totalorder %s37, 1
      %p165 = scmp.ne.s32.totalorder %s160, %s162
      %p166 = scmp.eq.s32.totalorder %s37, 0
      %p167 = por %p165, %p166
      %p168 = scmp.ne.s32.totalorder %s160, %s162
      %p169 = scmp.eq.s32.totalorder %s42, 1
      %p170 = por %p168, %p169
      %p171 = scmp.ne.s32.totalorder %s162, %s163
      %p172 = scmp.eq.s32.totalorder %s42, 0
      %p173 = por %p171, %p172
      %p174 = scmp.ne.s32.totalorder %s162, %s163
      %p175 = scmp.eq.s32.totalorder %s43, 1
      %p176 = por %p174, %p175
      %p178 = scmp.ne.s32.totalorder %s163, %s177
      %p179 = scmp.eq.s32.totalorder %s43, 0
      %p180 = por %p178, %p179
      %s182 = sadd.s32 %s181, 1
      %p185 = scmp.eq.s32.totalorder %s37, 1
      %p186 = scmp.ne.s32.totalorder %s181, %s183
      %p187 = scmp.eq.s32.totalorder %s37, 0
      %p188 = por %p186, %p187
      %p189 = scmp.ne.s32.totalorder %s181, %s183
      %p190 = scmp.eq.s32.totalorder %s42, 1
      %p191 = por %p189, %p190
      %p192 = scmp.ne.s32.totalorder %s183, %s184
      %p193 = scmp.eq.s32.totalorder %s42, 0
      %p194 = por %p192, %p193
      %p195 = scmp.ne.s32.totalorder %s183, %s184
      %p196 = scmp.eq.s32.totalorder %s43, 1
      %p197 = por %p195, %p196
      %p199 = scmp.ne.s32.totalorder %s184, %s198
      %p200 = scmp.eq.s32.totalorder %s43, 0
      %p201 = por %p199, %p200
      %s203 = sadd.s32 %s202, 1
      %p206 = scmp.eq.s32.totalorder %s37, 1
      %p207 = scmp.ne.s32.totalorder %s202, %s204
      %p208 = scmp.eq.s32.totalorder %s37, 0
      %p209 = por %p207, %p208
      %p210 = scmp.ne.s32.totalorder %s202, %s204
      %p211 = scmp.eq.s32.totalorder %s42, 1
      %p212 = por %p210, %p211
      %p213 = scmp.ne.s32.totalorder %s204, %s205
      %p214 = scmp.eq.s32.totalorder %s42, 0
      %p215 = por %p213, %p214
      %p216 = scmp.ne.s32.totalorder %s204, %s205
      %p217 = scmp.eq.s32.totalorder %s43, 1
      %p218 = por %p216, %p217
      %p220 = scmp.ne.s32.totalorder %s205, %s219
      %p221 = scmp.eq.s32.totalorder %s43, 0
      %p222 = por %p220, %p221
      %s224 = sadd.s32 %s223, 1
      %p227 = scmp.eq.s32.totalorder %s37, 1
      %p228 = scmp.ne.s32.totalorder %s223, %s225
      %p229 = scmp.eq.s32.totalorder %s37, 0
      %p230 = por %p228, %p229
      %p231 = scmp.ne.s32.totalorder %s223, %s225
      %p232 = scmp.eq.s32.totalorder %s42, 1
      %p233 = por %p231, %p232
      %p234 = scmp.ne.s32.totalorder %s225, %s226
      %p235 = scmp.eq.s32.totalorder %s42, 0
      %p236 = por %p234, %p235
      %p237 = scmp.ne.s32.totalorder %s225, %s226
      %p238 = scmp.eq.s32.totalorder %s43, 1
      %p239 = por %p237, %p238
      %p241 = scmp.ne.s32.totalorder %s226, %s240
      %p242 = scmp.eq.s32.totalorder %s43, 0
      %p243 = por %p241, %p242
      %s245 = sadd.s32 %s244, 1
      %p248 = scmp.eq.s32.totalorder %s37, 1
      %p249 = scmp.ne.s32.totalorder %s244, %s246
      %p250 = scmp.eq.s32.totalorder %s37, 0
      %p251 = por %p249, %p250
      %p252 = scmp.ne.s32.totalorder %s244, %s246
      %p253 = scmp.eq.s32.totalorder %s42, 1
      %p254 = por %p252, %p253
      %p255 = scmp.ne.s32.totalorder %s246, %s247
      %p256 = scmp.eq.s32.totalorder %s42, 0
      %p257 = por %p255, %p256
      %p258 = scmp.ne.s32.totalorder %s246, %s247
      %p259 = scmp.eq.s32.totalorder %s43, 1
      %p260 = por %p258, %p259
      %p262 = scmp.ne.s32.totalorder %s247, %s261
      %p263 = scmp.eq.s32.totalorder %s43, 0
      %p264 = por %p262, %p263
      %s266 = sadd.s32 %s265, 1
      %p269 = scmp.eq.s32.totalorder %s37, 1
      %p270 = scmp.ne.s32.totalorder %s265, %s267
      %p271 = scmp.eq.s32.totalorder %s37, 0
      %p272 = por %p270, %p271
      %p273 = scmp.ne.s32.totalorder %s265, %s267
      %p274 = scmp.eq.s32.totalorder %s42, 1
      %p275 = por %p273, %p274
      %p276 = scmp.ne.s32.totalorder %s267, %s268
      %p277 = scmp.eq.s32.totalorder %s42, 0
      %p278 = por %p276, %p277
      %p279 = scmp.ne.s32.totalorder %s267, %s268
      %p280 = scmp.eq.s32.totalorder %s43, 1
      %p281 = por %p279, %p280
      %p283 = scmp.ne.s32.totalorder %s268, %s282
      %p284 = scmp.eq.s32.totalorder %s43, 0
      %p285 = por %p283, %p284
      %s287 = sadd.s32 %s286, 1
      %p290 = scmp.eq.s32.totalorder %s37, 1
      %p291 = scmp.ne.s32.totalorder %s286, %s288
      %p292 = scmp.eq.s32.totalorder %s37, 0
      %p293 = por %p291, %p292
      %p294 = scmp.ne.s32.totalorder %s286, %s288
      %p295 = scmp.eq.s32.totalorder %s42, 1
      %p296 = por %p294, %p295
      %p297 = scmp.ne.s32.totalorder %s288, %s289
      %p298 = scmp.eq.s32.totalorder %s42, 0
      %p299 = por %p297, %p298
      %p300 = scmp.ne.s32.totalorder %s288, %s289
      %p301 = scmp.eq.s32.totalorder %s43, 1
      %p302 = por %p300, %p301
      %p304 = scmp.ne.s32.totalorder %s289, %s303
      %p305 = scmp.eq.s32.totalorder %s43, 0
      %p306 = por %p304, %p305
      %s308 = sadd.s32 %s307, 1
      %p311 = scmp.eq.s32.totalorder %s37, 1
      %p312 = scmp.ne.s32.totalorder %s307, %s309
      %p313 = scmp.eq.s32.totalorder %s37, 0
      %p314 = por %p312, %p313
      %p315 = scmp.ne.s32.totalorder %s307, %s309
      %p316 = scmp.eq.s32.totalorder %s42, 1
      %p317 = por %p315, %p316
      %p318 = scmp.ne.s32.totalorder %s309, %s310
      %p319 = scmp.eq.s32.totalorder %s42, 0
      %p320 = por %p318, %p319
      %p321 = scmp.ne.s32.totalorder %s309, %s310
      %p322 = scmp.eq.s32.totalorder %s43, 1
      %p323 = por %p321, %p322
      %p325 = scmp.ne.s32.totalorder %s310, %s324
      %p326 = scmp.eq.s32.totalorder %s43, 0
      %p327 = por %p325, %p326
      %s329 = sadd.s32 %s328, 1
      %p332 = scmp.eq.s32.totalorder %s37, 1
      %p333 = scmp.ne.s32.totalorder %s328, %s330
      %p334 = scmp.eq.s32.totalorder %s37, 0
      %p335 = por %p333, %p334
      %p336 = scmp.ne.s32.totalorder %s328, %s330
      %p337 = scmp.eq.s32.totalorder %s42, 1
      %p338 = por %p336, %p337
      %p339 = scmp.ne.s32.totalorder %s330, %s331
      %p340 = scmp.eq.s32.totalorder %s42, 0
      %p341 = por %p339, %p340
      %p342 = scmp.ne.s32.totalorder %s330, %s331
      %p343 = scmp.eq.s32.totalorder %s43, 1
      %p344 = por %p342, %p343
      %p346 = scmp.ne.s32.totalorder %s331, %s345
      %p347 = scmp.eq.s32.totalorder %s43, 0
      %p348 = por %p346, %p347
      %s350 = sadd.s32 %s349, 1
      %p353 = scmp.eq.s32.totalorder %s37, 1
      %p354 = scmp.ne.s32.totalorder %s349, %s351
      %p355 = scmp.eq.s32.totalorder %s37, 0
      %p356 = por %p354, %p355
      %p357 = scmp.ne.s32.totalorder %s349, %s351
      %p358 = scmp.eq.s32.totalorder %s42, 1
      %p359 = por %p357, %p358
      %p360 = scmp.ne.s32.totalorder %s351, %s352
      %p361 = scmp.eq.s32.totalorder %s42, 0
      %p362 = por %p360, %p361
      %p363 = scmp.ne.s32.totalorder %s351, %s352
      %p364 = scmp.eq.s32.totalorder %s43, 1
      %p365 = por %p363, %p364
      %p367 = scmp.ne.s32.totalorder %s352, %s366
      %p368 = scmp.eq.s32.totalorder %s43, 0
      %p369 = por %p367, %p368
      %s371 = sadd.s32 %s370, 1
      %p374 = scmp.eq.s32.totalorder %s37, 1
      %p375 = scmp.ne.s32.totalorder %s370, %s372
      %p376 = scmp.eq.s32.totalorder %s37, 0
      %p377 = por %p375, %p376
      %p378 = scmp.ne.s32.totalorder %s370, %s372
      %p379 = scmp.eq.s32.totalorder %s42, 1
      %p380 = por %p378, %p379
      %p381 = scmp.ne.s32.totalorder %s372, %s373
      %p382 = scmp.eq.s32.totalorder %s42, 0
      %p383 = por %p381, %p382
      %p384 = scmp.ne.s32.totalorder %s372, %s373
      %p385 = scmp.eq.s32.totalorder %s43, 1
      %p386 = por %p384, %p385
      %p388 = scmp.ne.s32.totalorder %s373, %s387
      %p389 = scmp.eq.s32.totalorder %s43, 0
      %p390 = por %p388, %p389
      %s392 = sadd.s32 %s391, 1
      %p395 = scmp.eq.s32.totalorder %s37, 1
      %p396 = scmp.ne.s32.totalorder %s391, %s393
      %p397 = scmp.eq.s32.totalorder %s37, 0
      %p398 = por %p396, %p397
      %p399 = scmp.ne.s32.totalorder %s391, %s393
      %p400 = scmp.eq.s32.totalorder %s42, 1
      %p401 = por %p399, %p400
      %p402 = scmp.ne.s32.totalorder %s393, %s394
      %p403 = scmp.eq.s32.totalorder %s42, 0
      %p404 = por %p402, %p403
      %p405 = scmp.ne.s32.totalorder %s393, %s394
      %p406 = scmp.eq.s32.totalorder %s43, 1
      %p407 = por %p405, %p406
      %p409 = scmp.ne.s32.totalorder %s394, %s408
      %p410 = scmp.eq.s32.totalorder %s43, 0
      %p411 = por %p409, %p410
      %s413 = sadd.s32 %s412, 1
      %p416 = scmp.eq.s32.totalorder %s37, 1
      %p417 = scmp.ne.s32.totalorder %s412, %s414
      %p418 = scmp.eq.s32.totalorder %s37, 0
      %p419 = por %p417, %p418
      %p420 = scmp.ne.s32.totalorder %s412, %s414
      %p421 = scmp.eq.s32.totalorder %s42, 1
      %p422 = por %p420, %p421
      %p423 = scmp.ne.s32.totalorder %s414, %s415
      %p424 = scmp.eq.s32.totalorder %s42, 0
      %p425 = por %p423, %p424
      %p426 = scmp.ne.s32.totalorder %s414, %s415
      %p427 = scmp.eq.s32.totalorder %s43, 1
      %p428 = por %p426, %p427
      %p430 = scmp.ne.s32.totalorder %s415, %s429
      %p431 = scmp.eq.s32.totalorder %s43, 0
      %p432 = por %p430, %p431
      %s434 = sadd.s32 %s433, 1
      %p437 = scmp.eq.s32.totalorder %s37, 1
      %p438 = scmp.ne.s32.totalorder %s433, %s435
      %p439 = scmp.eq.s32.totalorder %s37, 0
      %p440 = por %p438, %p439
      %p441 = scmp.ne.s32.totalorder %s433, %s435
      %p442 = scmp.eq.s32.totalorder %s42, 1
      %p443 = por %p441, %p442
      %p444 = scmp.ne.s32.totalorder %s435, %s436
      %p445 = scmp.eq.s32.totalorder %s42, 0
      %p446 = por %p444, %p445
      %p447 = scmp.ne.s32.totalorder %s435, %s436
      %p448 = scmp.eq.s32.totalorder %s43, 1
      %p449 = por %p447, %p448
      %p451 = scmp.ne.s32.totalorder %s436, %s450
      %p452 = scmp.eq.s32.totalorder %s43, 0
      %p453 = por %p451, %p452
      %s455 = sadd.s32 %s454, 1
      %p458 = scmp.eq.s32.totalorder %s37, 1
      %p459 = scmp.ne.s32.totalorder %s454, %s456
      %p460 = scmp.eq.s32.totalorder %s37, 0
      %p461 = por %p459, %p460
      %p462 = scmp.ne.s32.totalorder %s454, %s456
      %p463 = scmp.eq.s32.totalorder %s42, 1
      %p464 = por %p462, %p463
      %p465 = scmp.ne.s32.totalorder %s456, %s457
      %p466 = scmp.eq.s32.totalorder %s42, 0
      %p467 = por %p465, %p466
      %p468 = scmp.ne.s32.totalorder %s456, %s457
      %p469 = scmp.eq.s32.totalorder %s43, 1
      %p470 = por %p468, %p469
      %p472 = scmp.ne.s32.totalorder %s457, %s471
      %p473 = scmp.eq.s32.totalorder %s43, 0
      %p474 = por %p472, %p473
      %s476 = sadd.s32 %s475, 1
      %p479 = scmp.eq.s32.totalorder %s37, 1
      %p480 = scmp.ne.s32.totalorder %s475, %s477
      %p481 = scmp.eq.s32.totalorder %s37, 0
      %p482 = por %p480, %p481
      %p483 = scmp.ne.s32.totalorder %s475, %s477
      %p484 = scmp.eq.s32.totalorder %s42, 1
      %p485 = por %p483, %p484
      %p486 = scmp.ne.s32.totalorder %s477, %s478
      %p487 = scmp.eq.s32.totalorder %s42, 0
      %p488 = por %p486, %p487
      %p489 = scmp.ne.s32.totalorder %s477, %s478
      %p490 = scmp.eq.s32.totalorder %s43, 1
      %p491 = por %p489, %p490
      %p493 = scmp.ne.s32.totalorder %s478, %s492
      %p494 = scmp.eq.s32.totalorder %s43, 0
      %p495 = por %p493, %p494
      %s497 = sadd.s32 %s496, 1
      %p500 = scmp.eq.s32.totalorder %s37, 1
      %p501 = scmp.ne.s32.totalorder %s496, %s498
      %p502 = scmp.eq.s32.totalorder %s37, 0
      %p503 = por %p501, %p502
      %p504 = scmp.ne.s32.totalorder %s496, %s498
      %p505 = scmp.eq.s32.totalorder %s42, 1
      %p506 = por %p504, %p505
      %p507 = scmp.ne.s32.totalorder %s498, %s499
      %p508 = scmp.eq.s32.totalorder %s42, 0
      %p509 = por %p507, %p508
      %p510 = scmp.ne.s32.totalorder %s498, %s499
      %p511 = scmp.eq.s32.totalorder %s43, 1
      %p512 = por %p510, %p511
      %p514 = scmp.ne.s32.totalorder %s499, %s513
      %p515 = scmp.eq.s32.totalorder %s43, 0
      %p516 = por %p514, %p515
      %s518 = sadd.s32 %s517, 1
      %p521 = scmp.eq.s32.totalorder %s37, 1
      %p522 = scmp.ne.s32.totalorder %s517, %s519
      %p523 = scmp.eq.s32.totalorder %s37, 0
      %p524 = por %p522, %p523
      %p525 = scmp.ne.s32.totalorder %s517, %s519
      %p526 = scmp.eq.s32.totalorder %s42, 1
      %p527 = por %p525, %p526
      %p528 = scmp.ne.s32.totalorder %s519, %s520
      %p529 = scmp.eq.s32.totalorder %s42, 0
      %p530 = por %p528, %p529
      %p531 = scmp.ne.s32.totalorder %s519, %s520
      %p532 = scmp.eq.s32.totalorder %s43, 1
      %p533 = por %p531, %p532
      %p535 = scmp.ne.s32.totalorder %s520, %s534
      %p536 = scmp.eq.s32.totalorder %s43, 0
      %p537 = por %p535, %p536
      %s538 = ssub.s32 %s37, %s44
      %p539 = scmp.eq.s32.totalorder %s538, 0
      %s541 = sadd.s32 %s540, 1
      %s542 = scalar_select %p539, %s540, %s541
      %p545 = pneg %p539
      %p546 = scmp.eq.s32.totalorder %s37, 1
      %p547 = por %p545, %p546
      %p548 = scmp.ne.s32.totalorder %s540, %s543
      %p549 = scmp.eq.s32.totalorder %s37, 0
      %p550 = por %p548, %p549
      %p551 = scmp.ne.s32.totalorder %s540, %s543
      %p552 = scmp.eq.s32.totalorder %s42, 1
      %p553 = por %p551, %p552
      %p554 = scmp.ne.s32.totalorder %s543, %s544
      %p555 = scmp.eq.s32.totalorder %s42, 0
      %p556 = por %p554, %p555
      %p557 = scmp.ne.s32.totalorder %s543, %s544
      %p558 = scmp.eq.s32.totalorder %s43, 1
      %p559 = por %p557, %p558
      %p561 = scmp.ne.s32.totalorder %s544, %s560
      %p562 = scmp.eq.s32.totalorder %s43, 0
      %p563 = por %p561, %p562
      %p564 = scmp.le.s32.totalorder 1, %s37
      %p565 = scmp.lt.s32.totalorder %s37, 3
      %p566 = pnand %p564, %p565
      %p567 = pneg %p566
      // Predicated region
      $region9: #{_lambda_.1} parent=5 // pred_check
        _
      $region10: #{_lambda_.1} parent=5 // pred_check_branch
        %569 = sbr.rel (%p566) target = $region12
      $region11: #{_lambda_.1} parent=5 // pred_region
        %s570 = ssub.s32 %s37, 1
        // Predicated region
        $region13: #{_lambda_.1} parent=11 // pred_check
          %p571 = pneg %p110
        $region14: #{_lambda_.1} parent=11 // pred_check_branch
          %573 = sbr.rel (%p571) target = $region16
        $region15: #{_lambda_.1} parent=11 // pred_region
          _
        $region16: #{_lambda_.1} parent=11 // pred_fallthru
          _
        // Predicated region
        $region17: #{_lambda_.1} parent=11 // pred_check
          %p574 = pneg %p131
        $region18: #{_lambda_.1} parent=11 // pred_check_branch
          %576 = sbr.rel (%p574) target = $region20
        $region19: #{_lambda_.1} parent=11 // pred_region
          _
        $region20: #{_lambda_.1} parent=11 // pred_fallthru
          _
        // Predicated region
        $region21: #{_lambda_.1} parent=11 // pred_check
          %p577 = pneg %p152
        $region22: #{_lambda_.1} parent=11 // pred_check_branch
          %579 = sbr.rel (%p577) target = $region24
        $region23: #{_lambda_.1} parent=11 // pred_region
          _
        $region24: #{_lambda_.1} parent=11 // pred_fallthru
          _
        // Predicated region
        $region25: #{_lambda_.1} parent=11 // pred_check
          %p580 = pneg %p173
        $region26: #{_lambda_.1} parent=11 // pred_check_branch
          %582 = sbr.rel (%p580) target = $region28
        $region27: #{_lambda_.1} parent=11 // pred_region
          _
        $region28: #{_lambda_.1} parent=11 // pred_fallthru
          _
        // Predicated region
        $region29: #{_lambda_.1} parent=11 // pred_check
          %p583 = pneg %p194
        $region30: #{_lambda_.1} parent=11 // pred_check_branch
          %585 = sbr.rel (%p583) target = $region32
        $region31: #{_lambda_.1} parent=11 // pred_region
          %s587 = ssub.s32 256, 256
          %588 = vsyncadd [#allocation4], %s587
          %s589 = sshll.u32 [#allocation3], 4
          %s590 = int_to_ptr.vmem [resolvable:$true] %s589
          %595 = dma.hbm_to_vmem [thread:$0]  %s6, 256, %s590, [#allocation4], 128, 128, 8
        $region32: #{_lambda_.1} parent=11 // pred_fallthru
          _
        // Predicated region
        $region33: #{_lambda_.1} parent=11 // pred_check
          %p596 = pneg %p215
        $region34: #{_lambda_.1} parent=11 // pred_check_branch
          %598 = sbr.rel (%p596) target = $region36
        $region35: #{_lambda_.1} parent=11 // pred_region
          %s600 = ssub.s32 256, 256
          %601 = vsyncadd [#allocation6], %s600
          %s602 = sshll.u32 [#allocation5], 4
          %s603 = int_to_ptr.vmem [resolvable:$true] %s602
          %608 = dma.hbm_to_vmem [thread:$0]  %s7, 256, %s603, [#allocation6], 128, 128, 8
        $region36: #{_lambda_.1} parent=11 // pred_fallthru
          _
        // Predicated region
        $region37: #{_lambda_.1} parent=11 // pred_check
          %p609 = pneg %p236
        $region38: #{_lambda_.1} parent=11 // pred_check_branch
          %611 = sbr.rel (%p609) target = $region40
        $region39: #{_lambda_.1} parent=11 // pred_region
          %s613 = ssub.s32 32, 32
          %614 = vsyncadd [#allocation6], %s613
          %s616 = sshll.u32 [#allocation7], 4
          %s617 = int_to_ptr.vmem [resolvable:$true] %s616
          %619 = dma.hbm_to_vmem [thread:$0]  %s8, 32, %s617, [#allocation6]
        $region40: #{_lambda_.1} parent=11 // pred_fallthru
          _
        // Predicated region
        $region41: #{_lambda_.1} parent=11 // pred_check
          %p620 = pneg %p257
        $region42: #{_lambda_.1} parent=11 // pred_check_branch
          %622 = sbr.rel (%p620) target = $region44
        $region43: #{_lambda_.1} parent=11 // pred_region
          %s624 = ssub.s32 32, 32
          %625 = vsyncadd [#allocation9], %s624
          %s627 = sshll.u32 [#allocation8], 4
          %s628 = int_to_ptr.vmem [resolvable:$true] %s627
          %630 = dma.hbm_to_vmem [thread:$0]  %s9, 32, %s628, [#allocation9]
        $region44: #{_lambda_.1} parent=11 // pred_fallthru
          _
        // Predicated region
        $region45: #{_lambda_.1} parent=11 // pred_check
          %p631 = pneg %p278
        $region46: #{_lambda_.1} parent=11 // pred_check_branch
          %633 = sbr.rel (%p631) target = $region48
        $region47: #{_lambda_.1} parent=11 // pred_region
          _
        $region48: #{_lambda_.1} parent=11 // pred_fallthru
          _
        // Predicated region
        $region49: #{_lambda_.1} parent=11 // pred_check
          %p634 = pneg %p299
        $region50: #{_lambda_.1} parent=11 // pred_check_branch
          %636 = sbr.rel (%p634) target = $region52
        $region51: #{_lambda_.1} parent=11 // pred_region
          _
        $region52: #{_lambda_.1} parent=11 // pred_fallthru
          _
        // Predicated region
        $region53: #{_lambda_.1} parent=11 // pred_check
          %p637 = pneg %p320
        $region54: #{_lambda_.1} parent=11 // pred_check_branch
          %639 = sbr.rel (%p637) target = $region56
        $region55: #{_lambda_.1} parent=11 // pred_region
          %s641 = ssub.s32 512, 512
          %642 = vsyncadd [#allocation9], %s641
          %s643 = sshll.u32 [#allocation10], 4
          %s644 = int_to_ptr.vmem [resolvable:$true] %s643
          %649 = dma.hbm_to_vmem [thread:$0]  %s12, 512, %s644, [#allocation9], 128, 128, 8
        $region56: #{_lambda_.1} parent=11 // pred_fallthru
          _
        // Predicated region
        $region57: #{_lambda_.1} parent=11 // pred_check
          %p650 = pneg %p341
        $region58: #{_lambda_.1} parent=11 // pred_check_branch
          %652 = sbr.rel (%p650) target = $region60
        $region59: #{_lambda_.1} parent=11 // pred_region
          %s654 = ssub.s32 512, 512
          %655 = vsyncadd [#allocation12], %s654
          %s656 = sshll.u32 [#allocation11], 4
          %s657 = int_to_ptr.vmem [resolvable:$true] %s656
          %662 = dma.hbm_to_vmem [thread:$0]  %s13, 512, %s657, [#allocation12], 128, 128, 8
        $region60: #{_lambda_.1} parent=11 // pred_fallthru
          _
        // Predicated region
        $region61: #{_lambda_.1} parent=11 // pred_check
          %p663 = pneg %p362
        $region62: #{_lambda_.1} parent=11 // pred_check_branch
          %665 = sbr.rel (%p663) target = $region64
        $region63: #{_lambda_.1} parent=11 // pred_region
          %s667 = ssub.s32 32, 32
          %668 = vsyncadd [#allocation12], %s667
          %s669 = sshll.u32 [#allocation13], 4
          %s670 = int_to_ptr.vmem [resolvable:$true] %s669
          %675 = dma.hbm_to_vmem [thread:$0]  %s14, 32, %s670, [#allocation12], 16, 16, 1
        $region64: #{_lambda_.1} parent=11 // pred_fallthru
          _
        // Predicated region
        $region65: #{_lambda_.1} parent=11 // pred_check
          %p676 = pneg %p383
        $region66: #{_lambda_.1} parent=11 // pred_check_branch
          %678 = sbr.rel (%p676) target = $region68
        $region67: #{_lambda_.1} parent=11 // pred_region
          %s680 = ssub.s32 512, 512
          %681 = vsyncadd [#allocation15], %s680
          %s682 = sshll.u32 [#allocation14], 4
          %s683 = int_to_ptr.vmem [resolvable:$true] %s682
          %688 = dma.hbm_to_vmem [thread:$0]  %s15, 512, %s683, [#allocation15], 128, 128, 8
        $region68: #{_lambda_.1} parent=11 // pred_fallthru
          _
        // Predicated region
        $region69: #{_lambda_.1} parent=11 // pred_check
          %p689 = pneg %p404
        $region70: #{_lambda_.1} parent=11 // pred_check_branch
          %691 = sbr.rel (%p689) target = $region72
        $region71: #{_lambda_.1} parent=11 // pred_region
          %s693 = ssub.s32 32, 32
          %694 = vsyncadd [#allocation15], %s693
          %s695 = sshll.u32 [#allocation16], 4
          %s696 = int_to_ptr.vmem [resolvable:$true] %s695
          %701 = dma.hbm_to_vmem [thread:$0]  %s16, 32, %s696, [#allocation15], 16, 16, 1
        $region72: #{_lambda_.1} parent=11 // pred_fallthru
          _
        // Predicated region
        $region73: #{_lambda_.1} parent=11 // pred_check
          %p702 = pneg %p425
        $region74: #{_lambda_.1} parent=11 // pred_check_branch
          %704 = sbr.rel (%p702) target = $region76
        $region75: #{_lambda_.1} parent=11 // pred_region
          %s706 = ssub.s32 512, 512
          %707 = vsyncadd [#allocation18], %s706
          %s708 = sshll.u32 [#allocation17], 4
          %s709 = int_to_ptr.vmem [resolvable:$true] %s708
          %714 = dma.hbm_to_vmem [thread:$0]  %s17, 512, %s709, [#allocation18], 128, 128, 8
        $region76: #{_lambda_.1} parent=11 // pred_fallthru
          _
        // Predicated region
        $region77: #{_lambda_.1} parent=11 // pred_check
          %p715 = pneg %p446
        $region78: #{_lambda_.1} parent=11 // pred_check_branch
          %717 = sbr.rel (%p715) target = $region80
        $region79: #{_lambda_.1} parent=11 // pred_region
          _
        $region80: #{_lambda_.1} parent=11 // pred_fallthru
          _
        // Predicated region
        $region81: #{_lambda_.1} parent=11 // pred_check
          %p718 = pneg %p467
        $region82: #{_lambda_.1} parent=11 // pred_check_branch
          %720 = sbr.rel (%p718) target = $region84
        $region83: #{_lambda_.1} parent=11 // pred_region
          _
        $region84: #{_lambda_.1} parent=11 // pred_fallthru
          _
        // Predicated region
        $region85: #{_lambda_.1} parent=11 // pred_check
          %p721 = pneg %p488
        $region86: #{_lambda_.1} parent=11 // pred_check_branch
          %723 = sbr.rel (%p721) target = $region88
        $region87: #{_lambda_.1} parent=11 // pred_region
          _
        $region88: #{_lambda_.1} parent=11 // pred_fallthru
          _
        // Predicated region
        $region89: #{_lambda_.1} parent=11 // pred_check
          %p724 = pneg %p509
        $region90: #{_lambda_.1} parent=11 // pred_check_branch
          %726 = sbr.rel (%p724) target = $region92
        $region91: #{_lambda_.1} parent=11 // pred_region
          %s728 = ssub.s32 256, 256
          %729 = vsyncadd [#allocation18], %s728
          %s730 = sshll.u32 [#allocation19], 4
          %s731 = int_to_ptr.vmem [resolvable:$true] %s730
          %736 = dma.hbm_to_vmem [thread:$0]  %s21, 256, %s731, [#allocation18], 128, 128, 8
        $region92: #{_lambda_.1} parent=11 // pred_fallthru
          _
        // Predicated region
        $region93: #{_lambda_.1} parent=11 // pred_check
          %p737 = pneg %p530
        $region94: #{_lambda_.1} parent=11 // pred_check_branch
          %739 = sbr.rel (%p737) target = $region96
        $region95: #{_lambda_.1} parent=11 // pred_region
          _
        $region96: #{_lambda_.1} parent=11 // pred_fallthru
          _
      $region12: #{_lambda_.1} parent=5 // pred_fallthru
        _
      %p740 = scmp.lt.s32.totalorder %s37, 2
      // Predicated region
      $region97: #{_lambda_.1} parent=5 // pred_check
        %p741 = pneg %p740
      $region98: #{_lambda_.1} parent=5 // pred_check_branch
        %743 = sbr.rel (%p741) target = $region100
      $region99: #{_lambda_.1} parent=5 // pred_region
        // Predicated region
        $region101: #{_lambda_.1} parent=99 // pred_check
          %p744 = pneg %p57
        $region102: #{_lambda_.1} parent=99 // pred_check_branch
          %746 = sbr.rel (%p744) target = $region104
        $region103: #{_lambda_.1} parent=99 // pred_region
          %p747 = scmp.lt.s32.totalorder %s37, 1
          %s748 = scalar_select %p747, %s37, 1
          %s749 = smul.addr %s748, 2
          %s750 = smul.addr %s749, 8
          %s751 = scalar_lea.vmem %s0, %s750
        $region104: #{_lambda_.1} parent=99 // pred_fallthru
          _
        // Predicated region
        $region105: #{_lambda_.1} parent=99 // pred_check
          %p752 = pneg %p83
        $region106: #{_lambda_.1} parent=99 // pred_check_branch
          %754 = sbr.rel (%p752) target = $region108
        $region107: #{_lambda_.1} parent=99 // pred_region
          %p755 = scmp.lt.s32.totalorder %s37, 1
          %s756 = scalar_select %p755, %s37, 1
          %s757 = smul.addr %s756, 2
          %s758 = smul.addr %s757, 8
          %s759 = scalar_lea.vmem %s1, %s758
        $region108: #{_lambda_.1} parent=99 // pred_fallthru
          _
      $region100: #{_lambda_.1} parent=5 // pred_fallthru
        _
      %p760 = scmp.le.s32.totalorder 1, %s37
      %p761 = scmp.lt.s32.totalorder %s37, 3
      %p762 = pnand %p760, %p761
      %p763 = pneg %p762
      // Predicated region
      $region109: #{_lambda_.1} parent=5 // pred_check
        _
      $region110: #{_lambda_.1} parent=5 // pred_check_branch
        %765 = sbr.rel (%p762) target = $region112
      $region111: #{_lambda_.1} parent=5 // pred_region
        %s766 = ssub.s32 %s37, 1
        // Predicated region
        $region113: #{_lambda_.1} parent=111 // pred_check
          %p767 = pneg %p194
        $region114: #{_lambda_.1} parent=111 // pred_check_branch
          %769 = sbr.rel (%p767) target = $region116
        $region115: #{_lambda_.1} parent=111 // pred_region
          %770 = dma.done [#allocation4], 256
        $region116: #{_lambda_.1} parent=111 // pred_fallthru
          _
        // Predicated region
        $region117: #{_lambda_.1} parent=111 // pred_check
          %p771 = pneg %p215
        $region118: #{_lambda_.1} parent=111 // pred_check_branch
          %773 = sbr.rel (%p771) target = $region120
        $region119: #{_lambda_.1} parent=111 // pred_region
          %774 = dma.done [#allocation6], 256
        $region120: #{_lambda_.1} parent=111 // pred_fallthru
          _
        // Predicated region
        $region121: #{_lambda_.1} parent=111 // pred_check
          %p775 = pneg %p236
        $region122: #{_lambda_.1} parent=111 // pred_check_branch
          %777 = sbr.rel (%p775) target = $region124
        $region123: #{_lambda_.1} parent=111 // pred_region
          %778 = dma.done [#allocation6], 32
        $region124: #{_lambda_.1} parent=111 // pred_fallthru
          _
        // Predicated region
        $region125: #{_lambda_.1} parent=111 // pred_check
          %p779 = pneg %p257
        $region126: #{_lambda_.1} parent=111 // pred_check_branch
          %781 = sbr.rel (%p779) target = $region128
        $region127: #{_lambda_.1} parent=111 // pred_region
          %782 = dma.done [#allocation9], 32
        $region128: #{_lambda_.1} parent=111 // pred_fallthru
          _
        // Predicated region
        $region129: #{_lambda_.1} parent=111 // pred_check
          %p783 = pneg %p320
        $region130: #{_lambda_.1} parent=111 // pred_check_branch
          %785 = sbr.rel (%p783) target = $region132
        $region131: #{_lambda_.1} parent=111 // pred_region
          %786 = dma.done [#allocation9], 512
        $region132: #{_lambda_.1} parent=111 // pred_fallthru
          _
        // Predicated region
        $region133: #{_lambda_.1} parent=111 // pred_check
          %p787 = pneg %p341
        $region134: #{_lambda_.1} parent=111 // pred_check_branch
          %789 = sbr.rel (%p787) target = $region136
        $region135: #{_lambda_.1} parent=111 // pred_region
          %790 = dma.done [#allocation12], 512
        $region136: #{_lambda_.1} parent=111 // pred_fallthru
          _
        // Predicated region
        $region137: #{_lambda_.1} parent=111 // pred_check
          %p791 = pneg %p362
        $region138: #{_lambda_.1} parent=111 // pred_check_branch
          %793 = sbr.rel (%p791) target = $region140
        $region139: #{_lambda_.1} parent=111 // pred_region
          %794 = dma.done [#allocation12], 32
        $region140: #{_lambda_.1} parent=111 // pred_fallthru
          _
        // Predicated region
        $region141: #{_lambda_.1} parent=111 // pred_check
          %p795 = pneg %p383
        $region142: #{_lambda_.1} parent=111 // pred_check_branch
          %797 = sbr.rel (%p795) target = $region144
        $region143: #{_lambda_.1} parent=111 // pred_region
          %798 = dma.done [#allocation15], 512
        $region144: #{_lambda_.1} parent=111 // pred_fallthru
          _
        // Predicated region
        $region145: #{_lambda_.1} parent=111 // pred_check
          %p799 = pneg %p404
        $region146: #{_lambda_.1} parent=111 // pred_check_branch
          %801 = sbr.rel (%p799) target = $region148
        $region147: #{_lambda_.1} parent=111 // pred_region
          %802 = dma.done [#allocation15], 32
        $region148: #{_lambda_.1} parent=111 // pred_fallthru
          _
        // Predicated region
        $region149: #{_lambda_.1} parent=111 // pred_check
          %p803 = pneg %p425
        $region150: #{_lambda_.1} parent=111 // pred_check_branch
          %805 = sbr.rel (%p803) target = $region152
        $region151: #{_lambda_.1} parent=111 // pred_region
          %806 = dma.done [#allocation18], 512
        $region152: #{_lambda_.1} parent=111 // pred_fallthru
          _
        // Predicated region
        $region153: #{_lambda_.1} parent=111 // pred_check
          %p807 = pneg %p509
        $region154: #{_lambda_.1} parent=111 // pred_check_branch
          %809 = sbr.rel (%p807) target = $region156
        $region155: #{_lambda_.1} parent=111 // pred_region
          %810 = dma.done [#allocation18], 256
        $region156: #{_lambda_.1} parent=111 // pred_fallthru
          _
        %p811 = scmp.lt.s32.totalorder %s42, 1
        %s812 = scalar_select %p811, %s42, 1
        %s813 = smul.addr %s812, 2
        %s814 = smul.addr %s813, 8
        %s815 = scalar_lea.vmem %s0, %s814
        %p816 = pneg %p63
        %p817 = pneg %p60
        %p818 = scmp.lt.s32.totalorder %s42, 1
        %s819 = scalar_select %p818, %s42, 1
        %s820 = smul.addr %s819, 2
        %s821 = smul.addr %s820, 8
        %s822 = scalar_lea.vmem %s1, %s821
        %p823 = pneg %p89
        %p824 = pneg %p86
        %p825 = pneg %p110
        %p826 = pneg %p107
        %p827 = pneg %p131
        %p828 = pneg %p128
        %p829 = pneg %p152
        %p830 = pneg %p149
        %p831 = pneg %p173
        %p832 = pneg %p170
        %p833 = pneg %p194
        %p834 = pneg %p191
        %p835 = pneg %p215
        %p836 = pneg %p212
        %p837 = pneg %p236
        %p838 = pneg %p233
        %p839 = pneg %p257
        %p840 = pneg %p254
        %p841 = pneg %p278
        %p842 = pneg %p275
        %p843 = pneg %p299
        %p844 = pneg %p296
        %p845 = pneg %p320
        %p846 = pneg %p317
        %p847 = pneg %p341
        %p848 = pneg %p338
        %p849 = pneg %p362
        %p850 = pneg %p359
        %p851 = pneg %p383
        %p852 = pneg %p380
        %p853 = pneg %p404
        %p854 = pneg %p401
        %p855 = pneg %p425
        %p856 = pneg %p422
        %p857 = pneg %p446
        %p858 = pneg %p443
        %p859 = pneg %p467
        %p860 = pneg %p464
        %p861 = pneg %p488
        %p862 = pneg %p485
        %p863 = pneg %p509
        %p864 = pneg %p506
        %p865 = pneg %p530
        %p866 = pneg %p527
        %p867 = pneg %p556
        %p868 = pneg %p553
        %p869 = scmp.lt.s32.totalorder %s42, 1
        %s870 = scalar_select %p869, %s42, 1
        %s871 = scalar_lea.vmem %s23, %s870
        %p872 = scmp.lt.s32.totalorder %s42, 1
        %s873 = scalar_select %p872, %s42, 1
        %s874 = smul.addr %s873, 2
        %s875 = smul.addr %s874, 8
        %s876 = scalar_lea.vmem %s0, %s875
        %p877 = scmp.lt.s32.totalorder %s42, 1
        %s878 = scalar_select %p877, %s42, 1
        %s879 = smul.addr %s878, 2
        %s880 = smul.addr %s879, 8
        %s881 = scalar_lea.vmem %s1, %s880
        %p882 = scmp.lt.s32.totalorder %s42, 1
        %s883 = scalar_select %p882, %s42, 1
        %s884 = scalar_lea.vmem %s23, %s883
        %v885 = vld [vmem:[%s876] sm:$0xff]
        %v886 = vld [vmem:[%s876 + $0x8] sm:$0xff]
        %v887 = vld [vmem:[%s881] sm:$0xff]
        %v888 = vld [vmem:[%s881 + $0x8] sm:$0xff]
        %v889 = vld [vmem:[%s2] sm:$0xff]
        %v890 = vld [vmem:[%s2 + $0x8] sm:$0xff]
        %vm891 = vcmask 130048
        %v893 = vsel %vm891, %v889, 0
        %v896 = vsel %vm891, %v890, 0
        %898 = vmatprep.subr.mxu0 0.0
        %899 = vmatpush1.msra.mxu0 0.0
        %900 = vmatprep.subr.mxu0 0.0
        %901 = vmatpush1.msra.mxu0 0.0
        %902 = vmatprep.subr.mxu0 0.0
        %903 = vmatpush1.msra.mxu0 0.0
        %904 = vmatprep.subr.mxu0 0.0
        %905 = vmatpush1.msra.mxu0 0.0
        %906 = vmatprep.subr.mxu0 0.0
        %907 = vmatpush1.msra.mxu0 0.0
        %908 = vmatprep.subr.mxu0 0.0
        %909 = vmatpush1.msra.mxu0 0.0
        %910 = vmatprep.subr.mxu0 0.0
        %911 = vmatpush1.msra.mxu0 0.0
        %912 = vmatprep.subr.mxu0 0.0
        %913 = vmatpush1.msra.mxu0 0.0
        %914 = vmatprep.subr.mxu0 0.0
        %915 = vmatpush1.msra.mxu0 0.0
        %916 = vmatprep.subr.mxu0 0.0
        %917 = vmatpush1.msra.mxu0 0.0
        %918 = vmatprep.subr.mxu0 0.0
        %919 = vmatpush1.msra.mxu0 0.0
        %920 = vmatprep.subr.mxu0 0.0
        %921 = vmatpush1.msra.mxu0 0.0
        %922 = vmatprep.subr.mxu0 0.0
        %923 = vmatpush1.msra.mxu0 0.0
        %924 = vmatprep.subr.mxu0 0.0
        %925 = vmatpush1.msra.mxu0 0.0
        %926 = vmatprep.subr.mxu0 0.0
        %927 = vmatpush1.msra.mxu0 %v886
        %928 = vmatprep.subr.mxu0 0.0
        %929 = vmatpush1.msra.mxu0 %v885
        %930 = vmatprep.subr.mxu0 0.0
        %931 = vmatpush2.msra.mxu0 0.0
        %932 = vmatprep.subr.mxu0 0.0
        %933 = vmatpush2.msra.mxu0 0.0
        %934 = vmatprep.subr.mxu0 0.0
        %935 = vmatpush2.msra.mxu0 0.0
        %936 = vmatprep.subr.mxu0 0.0
        %937 = vmatpush2.msra.mxu0 0.0
        %938 = vmatprep.subr.mxu0 0.0
        %939 = vmatpush2.msra.mxu0 0.0
        %940 = vmatprep.subr.mxu0 0.0
        %941 = vmatpush2.msra.mxu0 0.0
        %942 = vmatprep.subr.mxu0 0.0
        %943 = vmatpush2.msra.mxu0 0.0
        %944 = vmatprep.subr.mxu0 0.0
        %945 = vmatpush2.msra.mxu0 0.0
        %946 = vmatprep.subr.mxu0 0.0
        %947 = vmatpush2.msra.mxu0 0.0
        %948 = vmatprep.subr.mxu0 0.0
        %949 = vmatpush2.msra.mxu0 0.0
        %950 = vmatprep.subr.mxu0 0.0
        %951 = vmatpush2.msra.mxu0 0.0
        %952 = vmatprep.subr.mxu0 0.0
        %953 = vmatpush2.msra.mxu0 0.0
        %954 = vmatprep.subr.mxu0 0.0
        %955 = vmatpush2.msra.mxu0 0.0
        %956 = vmatprep.subr.mxu0 0.0
        %957 = vmatpush2.msra.mxu0 0.0
        %958 = vmatprep.subr.mxu0 0.0
        %959 = vmatpush2.msra.mxu0 0.0
        %960 = vmatprep.subr.mxu0 0.0
        %961 = vmatpush2.msra.mxu0 0.0
        %962 = vmatprep.mubr.f32.mxu0 0.0
        %963 = vmatmul.mubr.f32.gmra.mxu0 %v893
        %v964 = vpop.f32.mrf.mxu0
        %v965 = vadd.f32 0.0, %v964
        %v966 = vpop.f32.mrf.mxu0
        %967 = vmatprep.mubr.f32.mxu0 0.0
        %968 = vmatmul.mubr.f32.gmra.mxu0 %v896
        %v969 = vpop.f32.mrf.mxu0
        %v970 = vadd.f32 0.0, %v969
        %v971 = vpop.f32.mrf.mxu0
        %972 = vdwg.mxu0
        %s973 = scalar_lea.vmem %s2, 16
        %v974 = vld [vmem:[%s973] sm:$0xff]
        %v975 = vld [vmem:[%s973 + $0x8] sm:$0xff]
        %v977 = vsel %vm891, %v974, 0
        %v980 = vsel %vm891, %v975, 0
        %982 = vmatprep.subr.mxu0 0.0
        %983 = vmatpush1.msra.mxu0 0.0
        %984 = vmatprep.subr.mxu0 0.0
        %985 = vmatpush1.msra.mxu0 0.0
        %986 = vmatprep.subr.mxu0 0.0
        %987 = vmatpush1.msra.mxu0 0.0
        %988 = vmatprep.subr.mxu0 0.0
        %989 = vmatpush1.msra.mxu0 0.0
        %990 = vmatprep.subr.mxu0 0.0
        %991 = vmatpush1.msra.mxu0 0.0
        %992 = vmatprep.subr.mxu0 0.0
        %993 = vmatpush1.msra.mxu0 0.0
        %994 = vmatprep.subr.mxu0 0.0
        %995 = vmatpush1.msra.mxu0 0.0
        %996 = vmatprep.subr.mxu0 0.0
        %997 = vmatpush1.msra.mxu0 0.0
        %998 = vmatprep.subr.mxu0 0.0
        %999 = vmatpush1.msra.mxu0 0.0
        %1000 = vmatprep.subr.mxu0 0.0
        %1001 = vmatpush1.msra.mxu0 0.0
        %1002 = vmatprep.subr.mxu0 0.0
        %1003 = vmatpush1.msra.mxu0 0.0
        %1004 = vmatprep.subr.mxu0 0.0
        %1005 = vmatpush1.msra.mxu0 0.0
        %1006 = vmatprep.subr.mxu0 0.0
        %1007 = vmatpush1.msra.mxu0 0.0
        %1008 = vmatprep.subr.mxu0 0.0
        %1009 = vmatpush1.msra.mxu0 0.0
        %1010 = vmatprep.subr.mxu0 0.0
        %1011 = vmatpush1.msra.mxu0 %v886
        %1012 = vmatprep.subr.mxu0 0.0
        %1013 = vmatpush1.msra.mxu0 %v885
        %1014 = vmatprep.subr.mxu0 0.0
        %1015 = vmatpush2.msra.mxu0 0.0
        %1016 = vmatprep.subr.mxu0 0.0
        %1017 = vmatpush2.msra.mxu0 0.0
        %1018 = vmatprep.subr.mxu0 0.0
        %1019 = vmatpush2.msra.mxu0 0.0
        %1020 = vmatprep.subr.mxu0 0.0
        %1021 = vmatpush2.msra.mxu0 0.0
        %1022 = vmatprep.subr.mxu0 0.0
        %1023 = vmatpush2.msra.mxu0 0.0
        %1024 = vmatprep.subr.mxu0 0.0
        %1025 = vmatpush2.msra.mxu0 0.0
        %1026 = vmatprep.subr.mxu0 0.0
        %1027 = vmatpush2.msra.mxu0 0.0
        %1028 = vmatprep.subr.mxu0 0.0
        %1029 = vmatpush2.msra.mxu0 0.0
        %1030 = vmatprep.subr.mxu0 0.0
        %1031 = vmatpush2.msra.mxu0 0.0
        %1032 = vmatprep.subr.mxu0 0.0
        %1033 = vmatpush2.msra.mxu0 0.0
        %1034 = vmatprep.subr.mxu0 0.0
        %1035 = vmatpush2.msra.mxu0 0.0
        %1036 = vmatprep.subr.mxu0 0.0
        %1037 = vmatpush2.msra.mxu0 0.0
        %1038 = vmatprep.subr.mxu0 0.0
        %1039 = vmatpush2.msra.mxu0 0.0
        %1040 = vmatprep.subr.mxu0 0.0
        %1041 = vmatpush2.msra.mxu0 0.0
        %1042 = vmatprep.subr.mxu0 0.0
        %1043 = vmatpush2.msra.mxu0 0.0
        %1044 = vmatprep.subr.mxu0 0.0
        %1045 = vmatpush2.msra.mxu0 0.0
        %1046 = vmatprep.mubr.f32.mxu0 0.0
        %1047 = vmatmul.mubr.f32.gmra.mxu0 %v977
        %v1048 = vpop.f32.mrf.mxu0
        %v1049 = vadd.f32 0.0, %v1048
        %v1050 = vpop.f32.mrf.mxu0
        %1051 = vmatprep.mubr.f32.mxu0 0.0
        %1052 = vmatmul.mubr.f32.gmra.mxu0 %v980
        %v1053 = vpop.f32.mrf.mxu0
        %v1054 = vadd.f32 0.0, %v1053
        %v1055 = vpop.f32.mrf.mxu0
        %1056 = vdwg.mxu0
        %v1057 = vld [vmem:[%s3] sm:$0xff]
        %v1058 = vld [vmem:[%s3 + $0x8] sm:$0xff]
        %s1059 = scalar_lea.vmem %s3, 16
        %v1060 = vld [vmem:[%s1059] sm:$0xff]
        %v1061 = vld [vmem:[%s1059 + $0x8] sm:$0xff]
        %v1063 = vsel %vm891, %v885, 0
        %v1066 = vsel %vm891, %v886, 0
        %1068 = vmatprep.subr.mxu0 0.0
        %1069 = vmatpush1.msra.mxu0 0.0
        %1070 = vmatprep.subr.mxu0 0.0
        %1071 = vmatpush1.msra.mxu0 0.0
        %1072 = vmatprep.subr.mxu0 0.0
        %1073 = vmatpush1.msra.mxu0 0.0
        %1074 = vmatprep.subr.mxu0 0.0
        %1075 = vmatpush1.msra.mxu0 0.0
        %1076 = vmatprep.subr.mxu0 0.0
        %1077 = vmatpush1.msra.mxu0 0.0
        %1078 = vmatprep.subr.mxu0 0.0
        %1079 = vmatpush1.msra.mxu0 0.0
        %1080 = vmatprep.subr.mxu0 0.0
        %1081 = vmatpush1.msra.mxu0 0.0
        %1082 = vmatprep.subr.mxu0 0.0
        %1083 = vmatpush1.msra.mxu0 0.0
        %1084 = vmatprep.subr.mxu0 0.0
        %1085 = vmatpush1.msra.mxu0 0.0
        %1086 = vmatprep.subr.mxu0 0.0
        %1087 = vmatpush1.msra.mxu0 0.0
        %1088 = vmatprep.subr.mxu0 0.0
        %1089 = vmatpush1.msra.mxu0 0.0
        %1090 = vmatprep.subr.mxu0 0.0
        %1091 = vmatpush1.msra.mxu0 0.0
        %1092 = vmatprep.subr.mxu0 0.0
        %1093 = vmatpush1.msra.mxu0 0.0
        %1094 = vmatprep.subr.mxu0 0.0
        %1095 = vmatpush1.msra.mxu0 0.0
        %1096 = vmatprep.subr.mxu0 0.0
        %1097 = vmatpush1.msra.mxu0 %v1061
        %1098 = vmatprep.subr.mxu0 0.0
        %1099 = vmatpush1.msra.mxu0 %v1060
        %1100 = vmatprep.subr.mxu0 0.0
        %1101 = vmatpush2.msra.mxu0 0.0
        %1102 = vmatprep.subr.mxu0 0.0
        %1103 = vmatpush2.msra.mxu0 0.0
        %1104 = vmatprep.subr.mxu0 0.0
        %1105 = vmatpush2.msra.mxu0 0.0
        %1106 = vmatprep.subr.mxu0 0.0
        %1107 = vmatpush2.msra.mxu0 0.0
        %1108 = vmatprep.subr.mxu0 0.0
        %1109 = vmatpush2.msra.mxu0 0.0
        %1110 = vmatprep.subr.mxu0 0.0
        %1111 = vmatpush2.msra.mxu0 0.0
        %1112 = vmatprep.subr.mxu0 0.0
        %1113 = vmatpush2.msra.mxu0 0.0
        %1114 = vmatprep.subr.mxu0 0.0
        %1115 = vmatpush2.msra.mxu0 0.0
        %1116 = vmatprep.subr.mxu0 0.0
        %1117 = vmatpush2.msra.mxu0 0.0
        %1118 = vmatprep.subr.mxu0 0.0
        %1119 = vmatpush2.msra.mxu0 0.0
        %1120 = vmatprep.subr.mxu0 0.0
        %1121 = vmatpush2.msra.mxu0 0.0
        %1122 = vmatprep.subr.mxu0 0.0
        %1123 = vmatpush2.msra.mxu0 0.0
        %1124 = vmatprep.subr.mxu0 0.0
        %1125 = vmatpush2.msra.mxu0 0.0
        %1126 = vmatprep.subr.mxu0 0.0
        %1127 = vmatpush2.msra.mxu0 0.0
        %1128 = vmatprep.subr.mxu0 0.0
        %1129 = vmatpush2.msra.mxu0 0.0
        %1130 = vmatprep.subr.mxu0 0.0
        %1131 = vmatpush2.msra.mxu0 0.0
        %1132 = vmatprep.mubr.f32.mxu0 0.0
        %1133 = vmatmul.mubr.f32.gmra.mxu0 %v1063
        %v1134 = vpop.f32.mrf.mxu0
        %v1135 = vadd.f32 0.0, %v1134
        %v1136 = vpop.f32.mrf.mxu0
        %1137 = vmatprep.mubr.f32.mxu0 0.0
        %1138 = vmatmul.mubr.f32.gmra.mxu0 %v1066
        %v1139 = vpop.f32.mrf.mxu0
        %v1140 = vadd.f32 0.0, %v1139
        %v1141 = vpop.f32.mrf.mxu0
        %1142 = vdwg.mxu0
        %v1144 = vsel %vm891, %v965, 0
        %v1147 = vsel %vm891, %v970, 0
        %1149 = vmatprep.subr.mxu0 0.0
        %1150 = vmatpush1.msra.mxu0 0.0
        %1151 = vmatprep.subr.mxu0 0.0
        %1152 = vmatpush1.msra.mxu0 0.0
        %1153 = vmatprep.subr.mxu0 0.0
        %1154 = vmatpush1.msra.mxu0 0.0
        %1155 = vmatprep.subr.mxu0 0.0
        %1156 = vmatpush1.msra.mxu0 0.0
        %1157 = vmatprep.subr.mxu0 0.0
        %1158 = vmatpush1.msra.mxu0 0.0
        %1159 = vmatprep.subr.mxu0 0.0
        %1160 = vmatpush1.msra.mxu0 0.0
        %1161 = vmatprep.subr.mxu0 0.0
        %1162 = vmatpush1.msra.mxu0 0.0
        %1163 = vmatprep.subr.mxu0 0.0
        %1164 = vmatpush1.msra.mxu0 0.0
        %1165 = vmatprep.subr.mxu0 0.0
        %1166 = vmatpush1.msra.mxu0 0.0
        %1167 = vmatprep.subr.mxu0 0.0
        %1168 = vmatpush1.msra.mxu0 0.0
        %1169 = vmatprep.subr.mxu0 0.0
        %1170 = vmatpush1.msra.mxu0 0.0
        %1171 = vmatprep.subr.mxu0 0.0
        %1172 = vmatpush1.msra.mxu0 0.0
        %1173 = vmatprep.subr.mxu0 0.0
        %1174 = vmatpush1.msra.mxu0 0.0
        %1175 = vmatprep.subr.mxu0 0.0
        %1176 = vmatpush1.msra.mxu0 0.0
        %1177 = vmatprep.subr.mxu0 0.0
        %1178 = vmatpush1.msra.mxu0 %v1058
        %1179 = vmatprep.subr.mxu0 0.0
        %1180 = vmatpush1.msra.mxu0 %v1057
        %1181 = vmatprep.subr.mxu0 0.0
        %1182 = vmatpush2.msra.mxu0 0.0
        %1183 = vmatprep.subr.mxu0 0.0
        %1184 = vmatpush2.msra.mxu0 0.0
        %1185 = vmatprep.subr.mxu0 0.0
        %1186 = vmatpush2.msra.mxu0 0.0
        %1187 = vmatprep.subr.mxu0 0.0
        %1188 = vmatpush2.msra.mxu0 0.0
        %1189 = vmatprep.subr.mxu0 0.0
        %1190 = vmatpush2.msra.mxu0 0.0
        %1191 = vmatprep.subr.mxu0 0.0
        %1192 = vmatpush2.msra.mxu0 0.0
        %1193 = vmatprep.subr.mxu0 0.0
        %1194 = vmatpush2.msra.mxu0 0.0
        %1195 = vmatprep.subr.mxu0 0.0
        %1196 = vmatpush2.msra.mxu0 0.0
        %1197 = vmatprep.subr.mxu0 0.0
        %1198 = vmatpush2.msra.mxu0 0.0
        %1199 = vmatprep.subr.mxu0 0.0
        %1200 = vmatpush2.msra.mxu0 0.0
        %1201 = vmatprep.subr.mxu0 0.0
        %1202 = vmatpush2.msra.mxu0 0.0
        %1203 = vmatprep.subr.mxu0 0.0
        %1204 = vmatpush2.msra.mxu0 0.0
        %1205 = vmatprep.subr.mxu0 0.0
        %1206 = vmatpush2.msra.mxu0 0.0
        %1207 = vmatprep.subr.mxu0 0.0
        %1208 = vmatpush2.msra.mxu0 0.0
        %1209 = vmatprep.subr.mxu0 0.0
        %1210 = vmatpush2.msra.mxu0 0.0
        %1211 = vmatprep.subr.mxu0 0.0
        %1212 = vmatpush2.msra.mxu0 0.0
        %1213 = vmatprep.mubr.f32.mxu0 0.0
        %1214 = vmatmul.mubr.f32.gmra.mxu0 %v1144
        %v1215 = vpop.f32.mrf.mxu0
        %v1216 = vadd.f32 %v1135, %v1215
        %v1217 = vpop.f32.mrf.mxu0
        %1218 = vmatprep.mubr.f32.mxu0 0.0
        %1219 = vmatmul.mubr.f32.gmra.mxu0 %v1147
        %v1220 = vpop.f32.mrf.mxu0
        %v1221 = vadd.f32 %v1140, %v1220
        %v1222 = vpop.f32.mrf.mxu0
        %1223 = vdwg.mxu0
        %s1224 = scalar_lea.vmem %s3, 32
        %v1225 = vld [vmem:[%s1224] sm:$0xff]
        %v1226 = vld [vmem:[%s1224 + $0x8] sm:$0xff]
        %v1228 = vsel %vm891, %v1049, 0
        %v1231 = vsel %vm891, %v1054, 0
        %1233 = vmatprep.subr.mxu0 0.0
        %1234 = vmatpush1.msra.mxu0 0.0
        %1235 = vmatprep.subr.mxu0 0.0
        %1236 = vmatpush1.msra.mxu0 0.0
        %1237 = vmatprep.subr.mxu0 0.0
        %1238 = vmatpush1.msra.mxu0 0.0
        %1239 = vmatprep.subr.mxu0 0.0
        %1240 = vmatpush1.msra.mxu0 0.0
        %1241 = vmatprep.subr.mxu0 0.0
        %1242 = vmatpush1.msra.mxu0 0.0
        %1243 = vmatprep.subr.mxu0 0.0
        %1244 = vmatpush1.msra.mxu0 0.0
        %1245 = vmatprep.subr.mxu0 0.0
        %1246 = vmatpush1.msra.mxu0 0.0
        %1247 = vmatprep.subr.mxu0 0.0
        %1248 = vmatpush1.msra.mxu0 0.0
        %1249 = vmatprep.subr.mxu0 0.0
        %1250 = vmatpush1.msra.mxu0 0.0
        %1251 = vmatprep.subr.mxu0 0.0
        %1252 = vmatpush1.msra.mxu0 0.0
        %1253 = vmatprep.subr.mxu0 0.0
        %1254 = vmatpush1.msra.mxu0 0.0
        %1255 = vmatprep.subr.mxu0 0.0
        %1256 = vmatpush1.msra.mxu0 0.0
        %1257 = vmatprep.subr.mxu0 0.0
        %1258 = vmatpush1.msra.mxu0 0.0
        %1259 = vmatprep.subr.mxu0 0.0
        %1260 = vmatpush1.msra.mxu0 0.0
        %1261 = vmatprep.subr.mxu0 0.0
        %1262 = vmatpush1.msra.mxu0 %v1226
        %1263 = vmatprep.subr.mxu0 0.0
        %1264 = vmatpush1.msra.mxu0 %v1225
        %1265 = vmatprep.subr.mxu0 0.0
        %1266 = vmatpush2.msra.mxu0 0.0
        %1267 = vmatprep.subr.mxu0 0.0
        %1268 = vmatpush2.msra.mxu0 0.0
        %1269 = vmatprep.subr.mxu0 0.0
        %1270 = vmatpush2.msra.mxu0 0.0
        %1271 = vmatprep.subr.mxu0 0.0
        %1272 = vmatpush2.msra.mxu0 0.0
        %1273 = vmatprep.subr.mxu0 0.0
        %1274 = vmatpush2.msra.mxu0 0.0
        %1275 = vmatprep.subr.mxu0 0.0
        %1276 = vmatpush2.msra.mxu0 0.0
        %1277 = vmatprep.subr.mxu0 0.0
        %1278 = vmatpush2.msra.mxu0 0.0
        %1279 = vmatprep.subr.mxu0 0.0
        %1280 = vmatpush2.msra.mxu0 0.0
        %1281 = vmatprep.subr.mxu0 0.0
        %1282 = vmatpush2.msra.mxu0 0.0
        %1283 = vmatprep.subr.mxu0 0.0
        %1284 = vmatpush2.msra.mxu0 0.0
        %1285 = vmatprep.subr.mxu0 0.0
        %1286 = vmatpush2.msra.mxu0 0.0
        %1287 = vmatprep.subr.mxu0 0.0
        %1288 = vmatpush2.msra.mxu0 0.0
        %1289 = vmatprep.subr.mxu0 0.0
        %1290 = vmatpush2.msra.mxu0 0.0
        %1291 = vmatprep.subr.mxu0 0.0
        %1292 = vmatpush2.msra.mxu0 0.0
        %1293 = vmatprep.subr.mxu0 0.0
        %1294 = vmatpush2.msra.mxu0 0.0
        %1295 = vmatprep.subr.mxu0 0.0
        %1296 = vmatpush2.msra.mxu0 0.0
        %1297 = vmatprep.mubr.f32.mxu0 0.0
        %1298 = vmatmul.mubr.f32.gmra.mxu0 %v1228
        %v1299 = vpop.f32.mrf.mxu0
        %v1300 = vadd.f32 0.0, %v1299
        %v1301 = vpop.f32.mrf.mxu0
        %1302 = vmatprep.mubr.f32.mxu0 0.0
        %1303 = vmatmul.mubr.f32.gmra.mxu0 %v1231
        %v1304 = vpop.f32.mrf.mxu0
        %v1305 = vadd.f32 0.0, %v1304
        %v1306 = vpop.f32.mrf.mxu0
        %1307 = vdwg.mxu0
        %v1308 = vadd.f32 %v1216, %v1300
        %v1309 = vadd.f32 %v1221, %v1305
        %v1310 = vld [vmem:[%s4] sm:$0xff]
        %v1311 = vld [vmem:[%s4 + $0x8] sm:$0xff]
        %v1312 = vadd.f32 %v1308, %v1310
        %v1313 = vadd.f32 %v1309, %v1311
        %v1314 = vld [vmem:[%s5] sm:$0xff]
        %v1315 = vld [vmem:[%s5 + $0x8] sm:$0xff]
        %v1316 = vld [vmem:[#allocation3] sm:$0xff]
        %v1317 = vld [vmem:[#allocation3 + $0x8] sm:$0xff]
        %v1318 = vld [vmem:[#allocation5] sm:$0xff]
        %v1319 = vld [vmem:[#allocation5 + $0x8] sm:$0xff]
        %v1320 = vld [vmem:[#allocation7] sm:$0x3]
        %v1321 = vld [vmem:[#allocation8] sm:$0x3]
        %v1322 = vld [vmem:[#allocation11] sm:$0xff]
        %v1323 = vld [vmem:[#allocation11 + $0x8] sm:$0xff]
        %v1324 = vld [vmem:[#allocation13] sm:$0x1]
        %v1326 = vlaneseq
        %v1327 = vshrl.u32 %v1326, 7
        %v1328 = vsub.s32 0, %v1327
        %v1329 = vrot.slane %v1324, %v1328
        %v1332 = vsel %vm891, %v1312, 0
        %v1335 = vsel %vm891, %v1313, 0
        %1337 = vmatprep.subr.mxu0 0.0
        %1338 = vmatpush1.msra.mxu0 0.0
        %1339 = vmatprep.subr.mxu0 0.0
        %1340 = vmatpush1.msra.mxu0 0.0
        %1341 = vmatprep.subr.mxu0 0.0
        %1342 = vmatpush1.msra.mxu0 0.0
        %1343 = vmatprep.subr.mxu0 0.0
        %1344 = vmatpush1.msra.mxu0 0.0
        %1345 = vmatprep.subr.mxu0 0.0
        %1346 = vmatpush1.msra.mxu0 0.0
        %1347 = vmatprep.subr.mxu0 0.0
        %1348 = vmatpush1.msra.mxu0 0.0
        %1349 = vmatprep.subr.mxu0 0.0
        %1350 = vmatpush1.msra.mxu0 0.0
        %1351 = vmatprep.subr.mxu0 0.0
        %1352 = vmatpush1.msra.mxu0 0.0
        %1353 = vmatprep.subr.mxu0 0.0
        %1354 = vmatpush1.msra.mxu0 0.0
        %1355 = vmatprep.subr.mxu0 0.0
        %1356 = vmatpush1.msra.mxu0 0.0
        %1357 = vmatprep.subr.mxu0 0.0
        %1358 = vmatpush1.msra.mxu0 0.0
        %1359 = vmatprep.subr.mxu0 0.0
        %1360 = vmatpush1.msra.mxu0 0.0
        %1361 = vmatprep.subr.mxu0 0.0
        %1362 = vmatpush1.msra.mxu0 0.0
        %1363 = vmatprep.subr.mxu0 0.0
        %1364 = vmatpush1.msra.mxu0 0.0
        %1365 = vmatprep.subr.mxu0 0.0
        %1366 = vmatpush1.msra.mxu0 %v1323
        %1367 = vmatprep.subr.mxu0 0.0
        %1368 = vmatpush1.msra.mxu0 %v1322
        %1369 = vmatprep.subr.mxu0 0.0
        %1370 = vmatpush2.msra.mxu0 0.0
        %1371 = vmatprep.subr.mxu0 0.0
        %1372 = vmatpush2.msra.mxu0 0.0
        %1373 = vmatprep.subr.mxu0 0.0
        %1374 = vmatpush2.msra.mxu0 0.0
        %1375 = vmatprep.subr.mxu0 0.0
        %1376 = vmatpush2.msra.mxu0 0.0
        %1377 = vmatprep.subr.mxu0 0.0
        %1378 = vmatpush2.msra.mxu0 0.0
        %1379 = vmatprep.subr.mxu0 0.0
        %1380 = vmatpush2.msra.mxu0 0.0
        %1381 = vmatprep.subr.mxu0 0.0
        %1382 = vmatpush2.msra.mxu0 0.0
        %1383 = vmatprep.subr.mxu0 0.0
        %1384 = vmatpush2.msra.mxu0 0.0
        %1385 = vmatprep.subr.mxu0 0.0
        %1386 = vmatpush2.msra.mxu0 0.0
        %1387 = vmatprep.subr.mxu0 0.0
        %1388 = vmatpush2.msra.mxu0 0.0
        %1389 = vmatprep.subr.mxu0 0.0
        %1390 = vmatpush2.msra.mxu0 0.0
        %1391 = vmatprep.subr.mxu0 0.0
        %1392 = vmatpush2.msra.mxu0 0.0
        %1393 = vmatprep.subr.mxu0 0.0
        %1394 = vmatpush2.msra.mxu0 0.0
        %1395 = vmatprep.subr.mxu0 0.0
        %1396 = vmatpush2.msra.mxu0 0.0
        %1397 = vmatprep.subr.mxu0 0.0
        %1398 = vmatpush2.msra.mxu0 0.0
        %1399 = vmatprep.subr.mxu0 0.0
        %1400 = vmatpush2.msra.mxu0 0.0
        %1401 = vmatprep.mubr.f32.mxu0 0.0
        %1402 = vmatmul.mubr.f32.gmra.mxu0 %v1332
        %v1403 = vpop.f32.mrf.mxu0
        %v1404 = vadd.f32 %v1329, %v1403
        %v1405 = vpop.f32.mrf.mxu0
        %1406 = vmatprep.mubr.f32.mxu0 0.0
        %1407 = vmatmul.mubr.f32.gmra.mxu0 %v1335
        %v1408 = vpop.f32.mrf.mxu0
        %v1409 = vadd.f32 %v1329, %v1408
        %v1410 = vpop.f32.mrf.mxu0
        %1411 = vdwg.mxu0
        %v1412 = vld [vmem:[%s10] sm:$0xff]
        %v1413 = vld [vmem:[%s10 + $0x8] sm:$0xff]
        %v1415 = vsel %vm891, %v1412, 0
        %v1418 = vsel %vm891, %v1413, 0
        %v1421 = vsel %vm891, %v1404, 0
        %v1424 = vsel %vm891, %v1409, 0
        %1426 = vmatprep.subr.mxu0 0.0
        %1427 = vmatpush1.xpose.msra.mxu0 0.0
        %1428 = vmatprep.subr.mxu0 0.0
        %1429 = vmatpush1.xpose.msra.mxu0 0.0
        %1430 = vmatprep.subr.mxu0 0.0
        %1431 = vmatpush1.xpose.msra.mxu0 0.0
        %1432 = vmatprep.subr.mxu0 0.0
        %1433 = vmatpush1.xpose.msra.mxu0 0.0
        %1434 = vmatprep.subr.mxu0 0.0
        %1435 = vmatpush1.xpose.msra.mxu0 0.0
        %1436 = vmatprep.subr.mxu0 0.0
        %1437 = vmatpush1.xpose.msra.mxu0 0.0
        %1438 = vmatprep.subr.mxu0 0.0
        %1439 = vmatpush1.xpose.msra.mxu0 0.0
        %1440 = vmatprep.subr.mxu0 0.0
        %1441 = vmatpush1.xpose.msra.mxu0 0.0
        %1442 = vmatprep.subr.mxu0 0.0
        %1443 = vmatpush1.xpose.msra.mxu0 0.0
        %1444 = vmatprep.subr.mxu0 0.0
        %1445 = vmatpush1.xpose.msra.mxu0 0.0
        %1446 = vmatprep.subr.mxu0 0.0
        %1447 = vmatpush1.xpose.msra.mxu0 0.0
        %1448 = vmatprep.subr.mxu0 0.0
        %1449 = vmatpush1.xpose.msra.mxu0 0.0
        %1450 = vmatprep.subr.mxu0 0.0
        %1451 = vmatpush1.xpose.msra.mxu0 0.0
        %1452 = vmatprep.subr.mxu0 0.0
        %1453 = vmatpush1.xpose.msra.mxu0 0.0
        %1454 = vmatprep.subr.mxu0 0.0
        %1455 = vmatpush1.xpose.msra.mxu0 %v1424
        %1456 = vmatprep.subr.mxu0 0.0
        %1457 = vmatpush1.xpose.msra.mxu0 %v1421
        %1458 = vmatprep.subr.mxu0 0.0
        %1459 = vmatpush2.xpose.msra.mxu0 0.0
        %1460 = vmatprep.subr.mxu0 0.0
        %1461 = vmatpush2.xpose.msra.mxu0 0.0
        %1462 = vmatprep.subr.mxu0 0.0
        %1463 = vmatpush2.xpose.msra.mxu0 0.0
        %1464 = vmatprep.subr.mxu0 0.0
        %1465 = vmatpush2.xpose.msra.mxu0 0.0
        %1466 = vmatprep.subr.mxu0 0.0
        %1467 = vmatpush2.xpose.msra.mxu0 0.0
        %1468 = vmatprep.subr.mxu0 0.0
        %1469 = vmatpush2.xpose.msra.mxu0 0.0
        %1470 = vmatprep.subr.mxu0 0.0
        %1471 = vmatpush2.xpose.msra.mxu0 0.0
        %1472 = vmatprep.subr.mxu0 0.0
        %1473 = vmatpush2.xpose.msra.mxu0 0.0
        %1474 = vmatprep.subr.mxu0 0.0
        %1475 = vmatpush2.xpose.msra.mxu0 0.0
        %1476 = vmatprep.subr.mxu0 0.0
        %1477 = vmatpush2.xpose.msra.mxu0 0.0
        %1478 = vmatprep.subr.mxu0 0.0
        %1479 = vmatpush2.xpose.msra.mxu0 0.0
        %1480 = vmatprep.subr.mxu0 0.0
        %1481 = vmatpush2.xpose.msra.mxu0 0.0
        %1482 = vmatprep.subr.mxu0 0.0
        %1483 = vmatpush2.xpose.msra.mxu0 0.0
        %1484 = vmatprep.subr.mxu0 0.0
        %1485 = vmatpush2.xpose.msra.mxu0 0.0
        %1486 = vmatprep.subr.mxu0 0.0
        %1487 = vmatpush2.xpose.msra.mxu0 0.0
        %1488 = vmatprep.subr.mxu0 0.0
        %1489 = vmatpush2.xpose.msra.mxu0 0.0
        %1490 = vmatprep.mubr.f32.mxu0 0.0
        %1491 = vmatmul.mubr.f32.gmra.mxu0 %v1415
        %v1492 = vpop.f32.mrf.mxu0
        %v1493 = vadd.f32 0.0, %v1492
        %v1494 = vpop.f32.mrf.mxu0
        %1495 = vmatprep.mubr.f32.mxu0 0.0
        %1496 = vmatmul.mubr.f32.gmra.mxu0 %v1418
        %v1497 = vpop.f32.mrf.mxu0
        %v1498 = vadd.f32 0.0, %v1497
        %v1499 = vpop.f32.mrf.mxu0
        %1500 = vdwg.mxu0
        %v1502 = vsel %vm891, %v1493, 0
        %v1505 = vsel %vm891, %v1498, 0
        %1507 = vmatprep.subr.mxu0 0.0
        %1508 = vmatpush1.msra.mxu0 0.0
        %1509 = vmatprep.subr.mxu0 0.0
        %1510 = vmatpush1.msra.mxu0 0.0
        %1511 = vmatprep.subr.mxu0 0.0
        %1512 = vmatpush1.msra.mxu0 0.0
        %1513 = vmatprep.subr.mxu0 0.0
        %1514 = vmatpush1.msra.mxu0 0.0
        %1515 = vmatprep.subr.mxu0 0.0
        %1516 = vmatpush1.msra.mxu0 0.0
        %1517 = vmatprep.subr.mxu0 0.0
        %1518 = vmatpush1.msra.mxu0 0.0
        %1519 = vmatprep.subr.mxu0 0.0
        %1520 = vmatpush1.msra.mxu0 0.0
        %1521 = vmatprep.subr.mxu0 0.0
        %1522 = vmatpush1.msra.mxu0 0.0
        %1523 = vmatprep.subr.mxu0 0.0
        %1524 = vmatpush1.msra.mxu0 0.0
        %1525 = vmatprep.subr.mxu0 0.0
        %1526 = vmatpush1.msra.mxu0 0.0
        %1527 = vmatprep.subr.mxu0 0.0
        %1528 = vmatpush1.msra.mxu0 0.0
        %1529 = vmatprep.subr.mxu0 0.0
        %1530 = vmatpush1.msra.mxu0 0.0
        %1531 = vmatprep.subr.mxu0 0.0
        %1532 = vmatpush1.msra.mxu0 0.0
        %1533 = vmatprep.subr.mxu0 0.0
        %1534 = vmatpush1.msra.mxu0 0.0
        %1535 = vmatprep.subr.mxu0 0.0
        %1536 = vmatpush1.msra.mxu0 %v1317
        %1537 = vmatprep.subr.mxu0 0.0
        %1538 = vmatpush1.msra.mxu0 %v1316
        %1539 = vmatprep.subr.mxu0 0.0
        %1540 = vmatpush2.msra.mxu0 0.0
        %1541 = vmatprep.subr.mxu0 0.0
        %1542 = vmatpush2.msra.mxu0 0.0
        %1543 = vmatprep.subr.mxu0 0.0
        %1544 = vmatpush2.msra.mxu0 0.0
        %1545 = vmatprep.subr.mxu0 0.0
        %1546 = vmatpush2.msra.mxu0 0.0
        %1547 = vmatprep.subr.mxu0 0.0
        %1548 = vmatpush2.msra.mxu0 0.0
        %1549 = vmatprep.subr.mxu0 0.0
        %1550 = vmatpush2.msra.mxu0 0.0
        %1551 = vmatprep.subr.mxu0 0.0
        %1552 = vmatpush2.msra.mxu0 0.0
        %1553 = vmatprep.subr.mxu0 0.0
        %1554 = vmatpush2.msra.mxu0 0.0
        %1555 = vmatprep.subr.mxu0 0.0
        %1556 = vmatpush2.msra.mxu0 0.0
        %1557 = vmatprep.subr.mxu0 0.0
        %1558 = vmatpush2.msra.mxu0 0.0
        %1559 = vmatprep.subr.mxu0 0.0
        %1560 = vmatpush2.msra.mxu0 0.0
        %1561 = vmatprep.subr.mxu0 0.0
        %1562 = vmatpush2.msra.mxu0 0.0
        %1563 = vmatprep.subr.mxu0 0.0
        %1564 = vmatpush2.msra.mxu0 0.0
        %1565 = vmatprep.subr.mxu0 0.0
        %1566 = vmatpush2.msra.mxu0 0.0
        %1567 = vmatprep.subr.mxu0 0.0
        %1568 = vmatpush2.msra.mxu0 0.0
        %1569 = vmatprep.subr.mxu0 0.0
        %1570 = vmatpush2.msra.mxu0 0.0
        %1571 = vmatprep.mubr.f32.mxu0 0.0
        %1572 = vmatmul.mubr.f32.gmra.mxu0 %v1502
        %v1573 = vpop.f32.mrf.mxu0
        %v1574 = vadd.f32 0.0, %v1573
        %v1575 = vpop.f32.mrf.mxu0
        %1576 = vmatprep.mubr.f32.mxu0 0.0
        %1577 = vmatmul.mubr.f32.gmra.mxu0 %v1505
        %v1578 = vpop.f32.mrf.mxu0
        %v1579 = vadd.f32 0.0, %v1578
        %v1580 = vpop.f32.mrf.mxu0
        %1581 = vdwg.mxu0
        %1582 = vmatprep.subr.mxu0 0.0
        %1583 = vmatpush1.msra.mxu0 0.0
        %1584 = vmatprep.subr.mxu0 0.0
        %1585 = vmatpush1.msra.mxu0 0.0
        %1586 = vmatprep.subr.mxu0 0.0
        %1587 = vmatpush1.msra.mxu0 0.0
        %1588 = vmatprep.subr.mxu0 0.0
        %1589 = vmatpush1.msra.mxu0 0.0
        %1590 = vmatprep.subr.mxu0 0.0
        %1591 = vmatpush1.msra.mxu0 0.0
        %1592 = vmatprep.subr.mxu0 0.0
        %1593 = vmatpush1.msra.mxu0 0.0
        %1594 = vmatprep.subr.mxu0 0.0
        %1595 = vmatpush1.msra.mxu0 0.0
        %1596 = vmatprep.subr.mxu0 0.0
        %1597 = vmatpush1.msra.mxu0 0.0
        %1598 = vmatprep.subr.mxu0 0.0
        %1599 = vmatpush1.msra.mxu0 0.0
        %1600 = vmatprep.subr.mxu0 0.0
        %1601 = vmatpush1.msra.mxu0 0.0
        %1602 = vmatprep.subr.mxu0 0.0
        %1603 = vmatpush1.msra.mxu0 0.0
        %1604 = vmatprep.subr.mxu0 0.0
        %1605 = vmatpush1.msra.mxu0 0.0
        %1606 = vmatprep.subr.mxu0 0.0
        %1607 = vmatpush1.msra.mxu0 0.0
        %1608 = vmatprep.subr.mxu0 0.0
        %1609 = vmatpush1.msra.mxu0 0.0
        %1610 = vmatprep.subr.mxu0 0.0
        %1611 = vmatpush1.msra.mxu0 %v1319
        %1612 = vmatprep.subr.mxu0 0.0
        %1613 = vmatpush1.msra.mxu0 %v1318
        %1614 = vmatprep.subr.mxu0 0.0
        %1615 = vmatpush2.msra.mxu0 0.0
        %1616 = vmatprep.subr.mxu0 0.0
        %1617 = vmatpush2.msra.mxu0 0.0
        %1618 = vmatprep.subr.mxu0 0.0
        %1619 = vmatpush2.msra.mxu0 0.0
        %1620 = vmatprep.subr.mxu0 0.0
        %1621 = vmatpush2.msra.mxu0 0.0
        %1622 = vmatprep.subr.mxu0 0.0
        %1623 = vmatpush2.msra.mxu0 0.0
        %1624 = vmatprep.subr.mxu0 0.0
        %1625 = vmatpush2.msra.mxu0 0.0
        %1626 = vmatprep.subr.mxu0 0.0
        %1627 = vmatpush2.msra.mxu0 0.0
        %1628 = vmatprep.subr.mxu0 0.0
        %1629 = vmatpush2.msra.mxu0 0.0
        %1630 = vmatprep.subr.mxu0 0.0
        %1631 = vmatpush2.msra.mxu0 0.0
        %1632 = vmatprep.subr.mxu0 0.0
        %1633 = vmatpush2.msra.mxu0 0.0
        %1634 = vmatprep.subr.mxu0 0.0
        %1635 = vmatpush2.msra.mxu0 0.0
        %1636 = vmatprep.subr.mxu0 0.0
        %1637 = vmatpush2.msra.mxu0 0.0
        %1638 = vmatprep.subr.mxu0 0.0
        %1639 = vmatpush2.msra.mxu0 0.0
        %1640 = vmatprep.subr.mxu0 0.0
        %1641 = vmatpush2.msra.mxu0 0.0
        %1642 = vmatprep.subr.mxu0 0.0
        %1643 = vmatpush2.msra.mxu0 0.0
        %1644 = vmatprep.subr.mxu0 0.0
        %1645 = vmatpush2.msra.mxu0 0.0
        %1646 = vmatprep.mubr.f32.mxu0 0.0
        %1647 = vmatmul.mubr.f32.gmra.mxu0 %v1502
        %v1648 = vpop.f32.mrf.mxu0
        %v1649 = vadd.f32 0.0, %v1648
        %v1650 = vpop.f32.mrf.mxu0
        %1651 = vmatprep.mubr.f32.mxu0 0.0
        %1652 = vmatmul.mubr.f32.gmra.mxu0 %v1505
        %v1653 = vpop.f32.mrf.mxu0
        %v1654 = vadd.f32 0.0, %v1653
        %v1655 = vpop.f32.mrf.mxu0
        %1656 = vdwg.mxu0
        %v1657 = vld [vmem:[%s11] sm:$0xff]
        %v1658 = vld [vmem:[%s11 + $0x8] sm:$0xff]
        %v1659 = vld [vmem:[#allocation10] sm:$0xff]
        %v1660 = vld [vmem:[#allocation10 + $0x8] sm:$0xff]
        %v1661 = vmul.f32 %v1574, %v1657
        %v1662 = vmul.f32 %v1579, %v1658
        %v1663 = vadd.f32 %v1661, 0.0
        %v1664 = vadd.f32 %v1662, 0.0
        %v1665 = vmul.f32 %v1649, %v1659
        %v1666 = vmul.f32 %v1654, %v1660
        %v1667 = vsub.f32 %v1663, %v1665
        %v1668 = vsub.f32 %v1664, %v1666
        %v1669 = vmul.f32 %v1574, %v1659
        %v1670 = vmul.f32 %v1579, %v1660
        %v1671 = vadd.f32 %v1669, 0.0
        %v1672 = vadd.f32 %v1670, 0.0
        %v1673 = vmul.f32 %v1649, %v1657
        %v1674 = vmul.f32 %v1654, %v1658
        %v1675 = vadd.f32 %v1671, %v1673
        %v1676 = vadd.f32 %v1672, %v1674
        %s1677 = scalar_lea.vmem %s10, 16
        %v1678 = vld [vmem:[%s1677] sm:$0xff]
        %v1679 = vld [vmem:[%s1677 + $0x8] sm:$0xff]
        %v1681 = vsel %vm891, %v1678, 0
        %v1684 = vsel %vm891, %v1679, 0
        %1686 = vmatprep.subr.mxu0 0.0
        %1687 = vmatpush1.xpose.msra.mxu0 0.0
        %1688 = vmatprep.subr.mxu0 0.0
        %1689 = vmatpush1.xpose.msra.mxu0 0.0
        %1690 = vmatprep.subr.mxu0 0.0
        %1691 = vmatpush1.xpose.msra.mxu0 0.0
        %1692 = vmatprep.subr.mxu0 0.0
        %1693 = vmatpush1.xpose.msra.mxu0 0.0
        %1694 = vmatprep.subr.mxu0 0.0
        %1695 = vmatpush1.xpose.msra.mxu0 0.0
        %1696 = vmatprep.subr.mxu0 0.0
        %1697 = vmatpush1.xpose.msra.mxu0 0.0
        %1698 = vmatprep.subr.mxu0 0.0
        %1699 = vmatpush1.xpose.msra.mxu0 0.0
        %1700 = vmatprep.subr.mxu0 0.0
        %1701 = vmatpush1.xpose.msra.mxu0 0.0
        %1702 = vmatprep.subr.mxu0 0.0
        %1703 = vmatpush1.xpose.msra.mxu0 0.0
        %1704 = vmatprep.subr.mxu0 0.0
        %1705 = vmatpush1.xpose.msra.mxu0 0.0
        %1706 = vmatprep.subr.mxu0 0.0
        %1707 = vmatpush1.xpose.msra.mxu0 0.0
        %1708 = vmatprep.subr.mxu0 0.0
        %1709 = vmatpush1.xpose.msra.mxu0 0.0
        %1710 = vmatprep.subr.mxu0 0.0
        %1711 = vmatpush1.xpose.msra.mxu0 0.0
        %1712 = vmatprep.subr.mxu0 0.0
        %1713 = vmatpush1.xpose.msra.mxu0 0.0
        %1714 = vmatprep.subr.mxu0 0.0
        %1715 = vmatpush1.xpose.msra.mxu0 %v1424
        %1716 = vmatprep.subr.mxu0 0.0
        %1717 = vmatpush1.xpose.msra.mxu0 %v1421
        %1718 = vmatprep.subr.mxu0 0.0
        %1719 = vmatpush2.xpose.msra.mxu0 0.0
        %1720 = vmatprep.subr.mxu0 0.0
        %1721 = vmatpush2.xpose.msra.mxu0 0.0
        %1722 = vmatprep.subr.mxu0 0.0
        %1723 = vmatpush2.xpose.msra.mxu0 0.0
        %1724 = vmatprep.subr.mxu0 0.0
        %1725 = vmatpush2.xpose.msra.mxu0 0.0
        %1726 = vmatprep.subr.mxu0 0.0
        %1727 = vmatpush2.xpose.msra.mxu0 0.0
        %1728 = vmatprep.subr.mxu0 0.0
        %1729 = vmatpush2.xpose.msra.mxu0 0.0
        %1730 = vmatprep.subr.mxu0 0.0
        %1731 = vmatpush2.xpose.msra.mxu0 0.0
        %1732 = vmatprep.subr.mxu0 0.0
        %1733 = vmatpush2.xpose.msra.mxu0 0.0
        %1734 = vmatprep.subr.mxu0 0.0
        %1735 = vmatpush2.xpose.msra.mxu0 0.0
        %1736 = vmatprep.subr.mxu0 0.0
        %1737 = vmatpush2.xpose.msra.mxu0 0.0
        %1738 = vmatprep.subr.mxu0 0.0
        %1739 = vmatpush2.xpose.msra.mxu0 0.0
        %1740 = vmatprep.subr.mxu0 0.0
        %1741 = vmatpush2.xpose.msra.mxu0 0.0
        %1742 = vmatprep.subr.mxu0 0.0
        %1743 = vmatpush2.xpose.msra.mxu0 0.0
        %1744 = vmatprep.subr.mxu0 0.0
        %1745 = vmatpush2.xpose.msra.mxu0 0.0
        %1746 = vmatprep.subr.mxu0 0.0
        %1747 = vmatpush2.xpose.msra.mxu0 0.0
        %1748 = vmatprep.subr.mxu0 0.0
        %1749 = vmatpush2.xpose.msra.mxu0 0.0
        %1750 = vmatprep.mubr.f32.mxu0 0.0
        %1751 = vmatmul.mubr.f32.gmra.mxu0 %v1681
        %v1752 = vpop.f32.mrf.mxu0
        %v1753 = vadd.f32 0.0, %v1752
        %v1754 = vpop.f32.mrf.mxu0
        %1755 = vmatprep.mubr.f32.mxu0 0.0
        %1756 = vmatmul.mubr.f32.gmra.mxu0 %v1684
        %v1757 = vpop.f32.mrf.mxu0
        %v1758 = vadd.f32 0.0, %v1757
        %v1759 = vpop.f32.mrf.mxu0
        %1760 = vdwg.mxu0
        %v1762 = vsel %vm891, %v1753, 0
        %v1765 = vsel %vm891, %v1758, 0
        %1767 = vmatprep.subr.mxu0 0.0
        %1768 = vmatpush1.msra.mxu0 0.0
        %1769 = vmatprep.subr.mxu0 0.0
        %1770 = vmatpush1.msra.mxu0 0.0
        %1771 = vmatprep.subr.mxu0 0.0
        %1772 = vmatpush1.msra.mxu0 0.0
        %1773 = vmatprep.subr.mxu0 0.0
        %1774 = vmatpush1.msra.mxu0 0.0
        %1775 = vmatprep.subr.mxu0 0.0
        %1776 = vmatpush1.msra.mxu0 0.0
        %1777 = vmatprep.subr.mxu0 0.0
        %1778 = vmatpush1.msra.mxu0 0.0
        %1779 = vmatprep.subr.mxu0 0.0
        %1780 = vmatpush1.msra.mxu0 0.0
        %1781 = vmatprep.subr.mxu0 0.0
        %1782 = vmatpush1.msra.mxu0 0.0
        %1783 = vmatprep.subr.mxu0 0.0
        %1784 = vmatpush1.msra.mxu0 0.0
        %1785 = vmatprep.subr.mxu0 0.0
        %1786 = vmatpush1.msra.mxu0 0.0
        %1787 = vmatprep.subr.mxu0 0.0
        %1788 = vmatpush1.msra.mxu0 0.0
        %1789 = vmatprep.subr.mxu0 0.0
        %1790 = vmatpush1.msra.mxu0 0.0
        %1791 = vmatprep.subr.mxu0 0.0
        %1792 = vmatpush1.msra.mxu0 0.0
        %1793 = vmatprep.subr.mxu0 0.0
        %1794 = vmatpush1.msra.mxu0 0.0
        %1795 = vmatprep.subr.mxu0 0.0
        %1796 = vmatpush1.msra.mxu0 %v1317
        %1797 = vmatprep.subr.mxu0 0.0
        %1798 = vmatpush1.msra.mxu0 %v1316
        %1799 = vmatprep.subr.mxu0 0.0
        %1800 = vmatpush2.msra.mxu0 0.0
        %1801 = vmatprep.subr.mxu0 0.0
        %1802 = vmatpush2.msra.mxu0 0.0
        %1803 = vmatprep.subr.mxu0 0.0
        %1804 = vmatpush2.msra.mxu0 0.0
        %1805 = vmatprep.subr.mxu0 0.0
        %1806 = vmatpush2.msra.mxu0 0.0
        %1807 = vmatprep.subr.mxu0 0.0
        %1808 = vmatpush2.msra.mxu0 0.0
        %1809 = vmatprep.subr.mxu0 0.0
        %1810 = vmatpush2.msra.mxu0 0.0
        %1811 = vmatprep.subr.mxu0 0.0
        %1812 = vmatpush2.msra.mxu0 0.0
        %1813 = vmatprep.subr.mxu0 0.0
        %1814 = vmatpush2.msra.mxu0 0.0
        %1815 = vmatprep.subr.mxu0 0.0
        %1816 = vmatpush2.msra.mxu0 0.0
        %1817 = vmatprep.subr.mxu0 0.0
        %1818 = vmatpush2.msra.mxu0 0.0
        %1819 = vmatprep.subr.mxu0 0.0
        %1820 = vmatpush2.msra.mxu0 0.0
        %1821 = vmatprep.subr.mxu0 0.0
        %1822 = vmatpush2.msra.mxu0 0.0
        %1823 = vmatprep.subr.mxu0 0.0
        %1824 = vmatpush2.msra.mxu0 0.0
        %1825 = vmatprep.subr.mxu0 0.0
        %1826 = vmatpush2.msra.mxu0 0.0
        %1827 = vmatprep.subr.mxu0 0.0
        %1828 = vmatpush2.msra.mxu0 0.0
        %1829 = vmatprep.subr.mxu0 0.0
        %1830 = vmatpush2.msra.mxu0 0.0
        %1831 = vmatprep.mubr.f32.mxu0 0.0
        %1832 = vmatmul.mubr.f32.gmra.mxu0 %v1762
        %v1833 = vpop.f32.mrf.mxu0
        %v1834 = vadd.f32 0.0, %v1833
        %v1835 = vpop.f32.mrf.mxu0
        %1836 = vmatprep.mubr.f32.mxu0 0.0
        %1837 = vmatmul.mubr.f32.gmra.mxu0 %v1765
        %v1838 = vpop.f32.mrf.mxu0
        %v1839 = vadd.f32 0.0, %v1838
        %v1840 = vpop.f32.mrf.mxu0
        %1841 = vdwg.mxu0
        %1842 = vmatprep.subr.mxu0 0.0
        %1843 = vmatpush1.msra.mxu0 0.0
        %1844 = vmatprep.subr.mxu0 0.0
        %1845 = vmatpush1.msra.mxu0 0.0
        %1846 = vmatprep.subr.mxu0 0.0
        %1847 = vmatpush1.msra.mxu0 0.0
        %1848 = vmatprep.subr.mxu0 0.0
        %1849 = vmatpush1.msra.mxu0 0.0
        %1850 = vmatprep.subr.mxu0 0.0
        %1851 = vmatpush1.msra.mxu0 0.0
        %1852 = vmatprep.subr.mxu0 0.0
        %1853 = vmatpush1.msra.mxu0 0.0
        %1854 = vmatprep.subr.mxu0 0.0
        %1855 = vmatpush1.msra.mxu0 0.0
        %1856 = vmatprep.subr.mxu0 0.0
        %1857 = vmatpush1.msra.mxu0 0.0
        %1858 = vmatprep.subr.mxu0 0.0
        %1859 = vmatpush1.msra.mxu0 0.0
        %1860 = vmatprep.subr.mxu0 0.0
        %1861 = vmatpush1.msra.mxu0 0.0
        %1862 = vmatprep.subr.mxu0 0.0
        %1863 = vmatpush1.msra.mxu0 0.0
        %1864 = vmatprep.subr.mxu0 0.0
        %1865 = vmatpush1.msra.mxu0 0.0
        %1866 = vmatprep.subr.mxu0 0.0
        %1867 = vmatpush1.msra.mxu0 0.0
        %1868 = vmatprep.subr.mxu0 0.0
        %1869 = vmatpush1.msra.mxu0 0.0
        %1870 = vmatprep.subr.mxu0 0.0
        %1871 = vmatpush1.msra.mxu0 %v1319
        %1872 = vmatprep.subr.mxu0 0.0
        %1873 = vmatpush1.msra.mxu0 %v1318
        %1874 = vmatprep.subr.mxu0 0.0
        %1875 = vmatpush2.msra.mxu0 0.0
        %1876 = vmatprep.subr.mxu0 0.0
        %1877 = vmatpush2.msra.mxu0 0.0
        %1878 = vmatprep.subr.mxu0 0.0
        %1879 = vmatpush2.msra.mxu0 0.0
        %1880 = vmatprep.subr.mxu0 0.0
        %1881 = vmatpush2.msra.mxu0 0.0
        %1882 = vmatprep.subr.mxu0 0.0
        %1883 = vmatpush2.msra.mxu0 0.0
        %1884 = vmatprep.subr.mxu0 0.0
        %1885 = vmatpush2.msra.mxu0 0.0
        %1886 = vmatprep.subr.mxu0 0.0
        %1887 = vmatpush2.msra.mxu0 0.0
        %1888 = vmatprep.subr.mxu0 0.0
        %1889 = vmatpush2.msra.mxu0 0.0
        %1890 = vmatprep.subr.mxu0 0.0
        %1891 = vmatpush2.msra.mxu0 0.0
        %1892 = vmatprep.subr.mxu0 0.0
        %1893 = vmatpush2.msra.mxu0 0.0
        %1894 = vmatprep.subr.mxu0 0.0
        %1895 = vmatpush2.msra.mxu0 0.0
        %1896 = vmatprep.subr.mxu0 0.0
        %1897 = vmatpush2.msra.mxu0 0.0
        %1898 = vmatprep.subr.mxu0 0.0
        %1899 = vmatpush2.msra.mxu0 0.0
        %1900 = vmatprep.subr.mxu0 0.0
        %1901 = vmatpush2.msra.mxu0 0.0
        %1902 = vmatprep.subr.mxu0 0.0
        %1903 = vmatpush2.msra.mxu0 0.0
        %1904 = vmatprep.subr.mxu0 0.0
        %1905 = vmatpush2.msra.mxu0 0.0
        %1906 = vmatprep.mubr.f32.mxu0 0.0
        %1907 = vmatmul.mubr.f32.gmra.mxu0 %v1762
        %v1908 = vpop.f32.mrf.mxu0
        %v1909 = vadd.f32 0.0, %v1908
        %v1910 = vpop.f32.mrf.mxu0
        %1911 = vmatprep.mubr.f32.mxu0 0.0
        %1912 = vmatmul.mubr.f32.gmra.mxu0 %v1765
        %v1913 = vpop.f32.mrf.mxu0
        %v1914 = vadd.f32 0.0, %v1913
        %v1915 = vpop.f32.mrf.mxu0
        %1916 = vdwg.mxu0
        %s1917 = scalar_lea.vmem %s11, 16
        %v1918 = vld [vmem:[%s1917] sm:$0xff]
        %v1919 = vld [vmem:[%s1917 + $0x8] sm:$0xff]
        %s1920 = scalar_lea.vmem [#allocation10], 16
        %v1921 = vld [vmem:[%s1920] sm:$0xff]
        %v1922 = vld [vmem:[%s1920 + $0x8] sm:$0xff]
        %v1923 = vmul.f32 %v1834, %v1918
        %v1924 = vmul.f32 %v1839, %v1919
        %v1925 = vadd.f32 %v1667, %v1923
        %v1926 = vadd.f32 %v1668, %v1924
        %v1927 = vmul.f32 %v1909, %v1921
        %v1928 = vmul.f32 %v1914, %v1922
        %v1929 = vsub.f32 %v1925, %v1927
        %v1930 = vsub.f32 %v1926, %v1928
        %v1931 = vmul.f32 %v1834, %v1921
        %v1932 = vmul.f32 %v1839, %v1922
        %v1933 = vadd.f32 %v1675, %v1931
        %v1934 = vadd.f32 %v1676, %v1932
        %v1935 = vmul.f32 %v1909, %v1918
        %v1936 = vmul.f32 %v1914, %v1919
        %v1937 = vadd.f32 %v1933, %v1935
        %v1938 = vadd.f32 %v1934, %v1936
        %vm1939 = vcmask 15360
        %v1941 = vsel %vm1939, %v1937, 0
        %v1944 = vsel %vm1939, %v1938, 0
        %vm1946 = vcmask 1041408
        %v1948 = vsel %vm1946, %v1321, 0
        %1950 = vmatprep.subr.mxu0 0.0
        %1951 = vmatpush1.msra.mxu0 0.0
        %1952 = vmatprep.subr.mxu0 0.0
        %1953 = vmatpush1.msra.mxu0 0.0
        %1954 = vmatprep.subr.mxu0 0.0
        %1955 = vmatpush1.msra.mxu0 0.0
        %1956 = vmatprep.subr.mxu0 0.0
        %1957 = vmatpush1.msra.mxu0 0.0
        %1958 = vmatprep.subr.mxu0 0.0
        %1959 = vmatpush1.msra.mxu0 0.0
        %1960 = vmatprep.subr.mxu0 0.0
        %1961 = vmatpush1.msra.mxu0 0.0
        %1962 = vmatprep.subr.mxu0 0.0
        %1963 = vmatpush1.msra.mxu0 0.0
        %1964 = vmatprep.subr.mxu0 0.0
        %1965 = vmatpush1.msra.mxu0 0.0
        %1966 = vmatprep.subr.mxu0 0.0
        %1967 = vmatpush1.msra.mxu0 0.0
        %1968 = vmatprep.subr.mxu0 0.0
        %1969 = vmatpush1.msra.mxu0 0.0
        %1970 = vmatprep.subr.mxu0 0.0
        %1971 = vmatpush1.msra.mxu0 0.0
        %1972 = vmatprep.subr.mxu0 0.0
        %1973 = vmatpush1.msra.mxu0 0.0
        %1974 = vmatprep.subr.mxu0 0.0
        %1975 = vmatpush1.msra.mxu0 0.0
        %1976 = vmatprep.subr.mxu0 0.0
        %1977 = vmatpush1.msra.mxu0 0.0
        %1978 = vmatprep.subr.mxu0 0.0
        %1979 = vmatpush1.msra.mxu0 0.0
        %1980 = vmatprep.subr.mxu0 0.0
        %1981 = vmatpush1.msra.mxu0 %v1948
        %1982 = vmatprep.subr.mxu0 0.0
        %1983 = vmatpush2.msra.mxu0 0.0
        %1984 = vmatprep.subr.mxu0 0.0
        %1985 = vmatpush2.msra.mxu0 0.0
        %1986 = vmatprep.subr.mxu0 0.0
        %1987 = vmatpush2.msra.mxu0 0.0
        %1988 = vmatprep.subr.mxu0 0.0
        %1989 = vmatpush2.msra.mxu0 0.0
        %1990 = vmatprep.subr.mxu0 0.0
        %1991 = vmatpush2.msra.mxu0 0.0
        %1992 = vmatprep.subr.mxu0 0.0
        %1993 = vmatpush2.msra.mxu0 0.0
        %1994 = vmatprep.subr.mxu0 0.0
        %1995 = vmatpush2.msra.mxu0 0.0
        %1996 = vmatprep.subr.mxu0 0.0
        %1997 = vmatpush2.msra.mxu0 0.0
        %1998 = vmatprep.subr.mxu0 0.0
        %1999 = vmatpush2.msra.mxu0 0.0
        %2000 = vmatprep.subr.mxu0 0.0
        %2001 = vmatpush2.msra.mxu0 0.0
        %2002 = vmatprep.subr.mxu0 0.0
        %2003 = vmatpush2.msra.mxu0 0.0
        %2004 = vmatprep.subr.mxu0 0.0
        %2005 = vmatpush2.msra.mxu0 0.0
        %2006 = vmatprep.subr.mxu0 0.0
        %2007 = vmatpush2.msra.mxu0 0.0
        %2008 = vmatprep.subr.mxu0 0.0
        %2009 = vmatpush2.msra.mxu0 0.0
        %2010 = vmatprep.subr.mxu0 0.0
        %2011 = vmatpush2.msra.mxu0 0.0
        %2012 = vmatprep.subr.mxu0 0.0
        %2013 = vmatpush2.msra.mxu0 0.0
        %2014 = vmatprep.mubr.f32.mxu0 0.0
        %2015 = vmatmul.mubr.f32.gmra.mxu0 %v1941
        %v2016 = vpop.f32.mrf.mxu0
        %v2017 = vadd.f32 0.0, %v2016
        %v2018 = vpop.f32.mrf.mxu0
        %2019 = vmatprep.mubr.f32.mxu0 0.0
        %2020 = vmatmul.mubr.f32.gmra.mxu0 %v1944
        %v2021 = vpop.f32.mrf.mxu0
        %v2022 = vadd.f32 0.0, %v2021
        %v2023 = vpop.f32.mrf.mxu0
        %2024 = vdwg.mxu0
        %v2026 = vsel %vm1939, %v1929, 0
        %v2029 = vsel %vm1939, %v1930, 0
        %v2032 = vsel %vm1946, %v1320, 0
        %2034 = vmatprep.subr.mxu0 0.0
        %2035 = vmatpush1.msra.mxu0 0.0
        %2036 = vmatprep.subr.mxu0 0.0
        %2037 = vmatpush1.msra.mxu0 0.0
        %2038 = vmatprep.subr.mxu0 0.0
        %2039 = vmatpush1.msra.mxu0 0.0
        %2040 = vmatprep.subr.mxu0 0.0
        %2041 = vmatpush1.msra.mxu0 0.0
        %2042 = vmatprep.subr.mxu0 0.0
        %2043 = vmatpush1.msra.mxu0 0.0
        %2044 = vmatprep.subr.mxu0 0.0
        %2045 = vmatpush1.msra.mxu0 0.0
        %2046 = vmatprep.subr.mxu0 0.0
        %2047 = vmatpush1.msra.mxu0 0.0
        %2048 = vmatprep.subr.mxu0 0.0
        %2049 = vmatpush1.msra.mxu0 0.0
        %2050 = vmatprep.subr.mxu0 0.0
        %2051 = vmatpush1.msra.mxu0 0.0
        %2052 = vmatprep.subr.mxu0 0.0
        %2053 = vmatpush1.msra.mxu0 0.0
        %2054 = vmatprep.subr.mxu0 0.0
        %2055 = vmatpush1.msra.mxu0 0.0
        %2056 = vmatprep.subr.mxu0 0.0
        %2057 = vmatpush1.msra.mxu0 0.0
        %2058 = vmatprep.subr.mxu0 0.0
        %2059 = vmatpush1.msra.mxu0 0.0
        %2060 = vmatprep.subr.mxu0 0.0
        %2061 = vmatpush1.msra.mxu0 0.0
        %2062 = vmatprep.subr.mxu0 0.0
        %2063 = vmatpush1.msra.mxu0 0.0
        %2064 = vmatprep.subr.mxu0 0.0
        %2065 = vmatpush1.msra.mxu0 %v2032
        %2066 = vmatprep.subr.mxu0 0.0
        %2067 = vmatpush2.msra.mxu0 0.0
        %2068 = vmatprep.subr.mxu0 0.0
        %2069 = vmatpush2.msra.mxu0 0.0
        %2070 = vmatprep.subr.mxu0 0.0
        %2071 = vmatpush2.msra.mxu0 0.0
        %2072 = vmatprep.subr.mxu0 0.0
        %2073 = vmatpush2.msra.mxu0 0.0
        %2074 = vmatprep.subr.mxu0 0.0
        %2075 = vmatpush2.msra.mxu0 0.0
        %2076 = vmatprep.subr.mxu0 0.0
        %2077 = vmatpush2.msra.mxu0 0.0
        %2078 = vmatprep.subr.mxu0 0.0
        %2079 = vmatpush2.msra.mxu0 0.0
        %2080 = vmatprep.subr.mxu0 0.0
        %2081 = vmatpush2.msra.mxu0 0.0
        %2082 = vmatprep.subr.mxu0 0.0
        %2083 = vmatpush2.msra.mxu0 0.0
        %2084 = vmatprep.subr.mxu0 0.0
        %2085 = vmatpush2.msra.mxu0 0.0
        %2086 = vmatprep.subr.mxu0 0.0
        %2087 = vmatpush2.msra.mxu0 0.0
        %2088 = vmatprep.subr.mxu0 0.0
        %2089 = vmatpush2.msra.mxu0 0.0
        %2090 = vmatprep.subr.mxu0 0.0
        %2091 = vmatpush2.msra.mxu0 0.0
        %2092 = vmatprep.subr.mxu0 0.0
        %2093 = vmatpush2.msra.mxu0 0.0
        %2094 = vmatprep.subr.mxu0 0.0
        %2095 = vmatpush2.msra.mxu0 0.0
        %2096 = vmatprep.subr.mxu0 0.0
        %2097 = vmatpush2.msra.mxu0 0.0
        %2098 = vmatprep.mubr.f32.mxu0 0.0
        %2099 = vmatmul.mubr.f32.gmra.mxu0 %v2026
        %v2100 = vpop.f32.mrf.mxu0
        %v2101 = vadd.f32 %v2017, %v2100
        %v2102 = vpop.f32.mrf.mxu0
        %2103 = vmatprep.mubr.f32.mxu0 0.0
        %2104 = vmatmul.mubr.f32.gmra.mxu0 %v2029
        %v2105 = vpop.f32.mrf.mxu0
        %v2106 = vadd.f32 %v2022, %v2105
        %v2107 = vpop.f32.mrf.mxu0
        %2108 = vdwg.mxu0
        %v2109 = vld [vmem:[#allocation14] sm:$0xff]
        %v2110 = vld [vmem:[#allocation14 + $0x8] sm:$0xff]
        %v2111 = vld [vmem:[#allocation16] sm:$0x1]
        %v2113 = vlaneseq
        %v2114 = vshrl.u32 %v2113, 7
        %v2115 = vsub.s32 0, %v2114
        %v2116 = vrot.slane %v2111, %v2115
        %v2119 = vsel %vm891, %v2101, 0
        %v2122 = vsel %vm891, %v2106, 0
        %2124 = vmatprep.subr.mxu0 0.0
        %2125 = vmatpush1.msra.mxu0 0.0
        %2126 = vmatprep.subr.mxu0 0.0
        %2127 = vmatpush1.msra.mxu0 0.0
        %2128 = vmatprep.subr.mxu0 0.0
        %2129 = vmatpush1.msra.mxu0 0.0
        %2130 = vmatprep.subr.mxu0 0.0
        %2131 = vmatpush1.msra.mxu0 0.0
        %2132 = vmatprep.subr.mxu0 0.0
        %2133 = vmatpush1.msra.mxu0 0.0
        %2134 = vmatprep.subr.mxu0 0.0
        %2135 = vmatpush1.msra.mxu0 0.0
        %2136 = vmatprep.subr.mxu0 0.0
        %2137 = vmatpush1.msra.mxu0 0.0
        %2138 = vmatprep.subr.mxu0 0.0
        %2139 = vmatpush1.msra.mxu0 0.0
        %2140 = vmatprep.subr.mxu0 0.0
        %2141 = vmatpush1.msra.mxu0 0.0
        %2142 = vmatprep.subr.mxu0 0.0
        %2143 = vmatpush1.msra.mxu0 0.0
        %2144 = vmatprep.subr.mxu0 0.0
        %2145 = vmatpush1.msra.mxu0 0.0
        %2146 = vmatprep.subr.mxu0 0.0
        %2147 = vmatpush1.msra.mxu0 0.0
        %2148 = vmatprep.subr.mxu0 0.0
        %2149 = vmatpush1.msra.mxu0 0.0
        %2150 = vmatprep.subr.mxu0 0.0
        %2151 = vmatpush1.msra.mxu0 0.0
        %2152 = vmatprep.subr.mxu0 0.0
        %2153 = vmatpush1.msra.mxu0 %v2110
        %2154 = vmatprep.subr.mxu0 0.0
        %2155 = vmatpush1.msra.mxu0 %v2109
        %2156 = vmatprep.subr.mxu0 0.0
        %2157 = vmatpush2.msra.mxu0 0.0
        %2158 = vmatprep.subr.mxu0 0.0
        %2159 = vmatpush2.msra.mxu0 0.0
        %2160 = vmatprep.subr.mxu0 0.0
        %2161 = vmatpush2.msra.mxu0 0.0
        %2162 = vmatprep.subr.mxu0 0.0
        %2163 = vmatpush2.msra.mxu0 0.0
        %2164 = vmatprep.subr.mxu0 0.0
        %2165 = vmatpush2.msra.mxu0 0.0
        %2166 = vmatprep.subr.mxu0 0.0
        %2167 = vmatpush2.msra.mxu0 0.0
        %2168 = vmatprep.subr.mxu0 0.0
        %2169 = vmatpush2.msra.mxu0 0.0
        %2170 = vmatprep.subr.mxu0 0.0
        %2171 = vmatpush2.msra.mxu0 0.0
        %2172 = vmatprep.subr.mxu0 0.0
        %2173 = vmatpush2.msra.mxu0 0.0
        %2174 = vmatprep.subr.mxu0 0.0
        %2175 = vmatpush2.msra.mxu0 0.0
        %2176 = vmatprep.subr.mxu0 0.0
        %2177 = vmatpush2.msra.mxu0 0.0
        %2178 = vmatprep.subr.mxu0 0.0
        %2179 = vmatpush2.msra.mxu0 0.0
        %2180 = vmatprep.subr.mxu0 0.0
        %2181 = vmatpush2.msra.mxu0 0.0
        %2182 = vmatprep.subr.mxu0 0.0
        %2183 = vmatpush2.msra.mxu0 0.0
        %2184 = vmatprep.subr.mxu0 0.0
        %2185 = vmatpush2.msra.mxu0 0.0
        %2186 = vmatprep.subr.mxu0 0.0
        %2187 = vmatpush2.msra.mxu0 0.0
        %2188 = vmatprep.mubr.f32.mxu0 0.0
        %2189 = vmatmul.mubr.f32.gmra.mxu0 %v2119
        %v2190 = vpop.f32.mrf.mxu0
        %v2191 = vadd.f32 %v2116, %v2190
        %v2192 = vpop.f32.mrf.mxu0
        %2193 = vmatprep.mubr.f32.mxu0 0.0
        %2194 = vmatmul.mubr.f32.gmra.mxu0 %v2122
        %v2195 = vpop.f32.mrf.mxu0
        %v2196 = vadd.f32 %v2116, %v2195
        %v2197 = vpop.f32.mrf.mxu0
        %2198 = vdwg.mxu0
        %v2199 = vadd.f32 %v1312, %v2191
        %v2200 = vadd.f32 %v1313, %v2196
        %v2202 = vsel %vm891, %v1314, 0
        %v2205 = vsel %vm891, %v1315, 0
        %2207 = vmatprep.subr.mxu0 0.0
        %2208 = vmatpush1.msra.mxu0 0.0
        %2209 = vmatprep.subr.mxu0 0.0
        %2210 = vmatpush1.msra.mxu0 0.0
        %2211 = vmatprep.subr.mxu0 0.0
        %2212 = vmatpush1.msra.mxu0 0.0
        %2213 = vmatprep.subr.mxu0 0.0
        %2214 = vmatpush1.msra.mxu0 0.0
        %2215 = vmatprep.subr.mxu0 0.0
        %2216 = vmatpush1.msra.mxu0 0.0
        %2217 = vmatprep.subr.mxu0 0.0
        %2218 = vmatpush1.msra.mxu0 0.0
        %2219 = vmatprep.subr.mxu0 0.0
        %2220 = vmatpush1.msra.mxu0 0.0
        %2221 = vmatprep.subr.mxu0 0.0
        %2222 = vmatpush1.msra.mxu0 0.0
        %2223 = vmatprep.subr.mxu0 0.0
        %2224 = vmatpush1.msra.mxu0 0.0
        %2225 = vmatprep.subr.mxu0 0.0
        %2226 = vmatpush1.msra.mxu0 0.0
        %2227 = vmatprep.subr.mxu0 0.0
        %2228 = vmatpush1.msra.mxu0 0.0
        %2229 = vmatprep.subr.mxu0 0.0
        %2230 = vmatpush1.msra.mxu0 0.0
        %2231 = vmatprep.subr.mxu0 0.0
        %2232 = vmatpush1.msra.mxu0 0.0
        %2233 = vmatprep.subr.mxu0 0.0
        %2234 = vmatpush1.msra.mxu0 0.0
        %2235 = vmatprep.subr.mxu0 0.0
        %2236 = vmatpush1.msra.mxu0 %v2200
        %2237 = vmatprep.subr.mxu0 0.0
        %2238 = vmatpush1.msra.mxu0 %v2199
        %2239 = vmatprep.subr.mxu0 0.0
        %2240 = vmatpush2.msra.mxu0 0.0
        %2241 = vmatprep.subr.mxu0 0.0
        %2242 = vmatpush2.msra.mxu0 0.0
        %2243 = vmatprep.subr.mxu0 0.0
        %2244 = vmatpush2.msra.mxu0 0.0
        %2245 = vmatprep.subr.mxu0 0.0
        %2246 = vmatpush2.msra.mxu0 0.0
        %2247 = vmatprep.subr.mxu0 0.0
        %2248 = vmatpush2.msra.mxu0 0.0
        %2249 = vmatprep.subr.mxu0 0.0
        %2250 = vmatpush2.msra.mxu0 0.0
        %2251 = vmatprep.subr.mxu0 0.0
        %2252 = vmatpush2.msra.mxu0 0.0
        %2253 = vmatprep.subr.mxu0 0.0
        %2254 = vmatpush2.msra.mxu0 0.0
        %2255 = vmatprep.subr.mxu0 0.0
        %2256 = vmatpush2.msra.mxu0 0.0
        %2257 = vmatprep.subr.mxu0 0.0
        %2258 = vmatpush2.msra.mxu0 0.0
        %2259 = vmatprep.subr.mxu0 0.0
        %2260 = vmatpush2.msra.mxu0 0.0
        %2261 = vmatprep.subr.mxu0 0.0
        %2262 = vmatpush2.msra.mxu0 0.0
        %2263 = vmatprep.subr.mxu0 0.0
        %2264 = vmatpush2.msra.mxu0 0.0
        %2265 = vmatprep.subr.mxu0 0.0
        %2266 = vmatpush2.msra.mxu0 0.0
        %2267 = vmatprep.subr.mxu0 0.0
        %2268 = vmatpush2.msra.mxu0 0.0
        %2269 = vmatprep.subr.mxu0 0.0
        %2270 = vmatpush2.msra.mxu0 0.0
        %2271 = vmatprep.mubr.f32.mxu0 0.0
        %2272 = vmatmul.mubr.f32.gmra.mxu0 %v2202
        %v2273 = vpop.f32.mrf.mxu0
        %v2274 = vadd.f32 0.0, %v2273
        %v2275 = vpop.f32.mrf.mxu0
        %2276 = vmatprep.mubr.f32.mxu0 0.0
        %2277 = vmatmul.mubr.f32.gmra.mxu0 %v2205
        %v2278 = vpop.f32.mrf.mxu0
        %v2279 = vadd.f32 0.0, %v2278
        %v2280 = vpop.f32.mrf.mxu0
        %2281 = vdwg.mxu0
        %v2282 = vld [vmem:[#allocation17] sm:$0xff]
        %v2283 = vld [vmem:[#allocation17 + $0x8] sm:$0xff]
        %v2285 = vsel %vm891, %v2274, 0
        %v2288 = vsel %vm891, %v2279, 0
        %2290 = vmatprep.subr.mxu0 0.0
        %2291 = vmatpush1.msra.mxu0 0.0
        %2292 = vmatprep.subr.mxu0 0.0
        %2293 = vmatpush1.msra.mxu0 0.0
        %2294 = vmatprep.subr.mxu0 0.0
        %2295 = vmatpush1.msra.mxu0 0.0
        %2296 = vmatprep.subr.mxu0 0.0
        %2297 = vmatpush1.msra.mxu0 0.0
        %2298 = vmatprep.subr.mxu0 0.0
        %2299 = vmatpush1.msra.mxu0 0.0
        %2300 = vmatprep.subr.mxu0 0.0
        %2301 = vmatpush1.msra.mxu0 0.0
        %2302 = vmatprep.subr.mxu0 0.0
        %2303 = vmatpush1.msra.mxu0 0.0
        %2304 = vmatprep.subr.mxu0 0.0
        %2305 = vmatpush1.msra.mxu0 0.0
        %2306 = vmatprep.subr.mxu0 0.0
        %2307 = vmatpush1.msra.mxu0 0.0
        %2308 = vmatprep.subr.mxu0 0.0
        %2309 = vmatpush1.msra.mxu0 0.0
        %2310 = vmatprep.subr.mxu0 0.0
        %2311 = vmatpush1.msra.mxu0 0.0
        %2312 = vmatprep.subr.mxu0 0.0
        %2313 = vmatpush1.msra.mxu0 0.0
        %2314 = vmatprep.subr.mxu0 0.0
        %2315 = vmatpush1.msra.mxu0 0.0
        %2316 = vmatprep.subr.mxu0 0.0
        %2317 = vmatpush1.msra.mxu0 0.0
        %2318 = vmatprep.subr.mxu0 0.0
        %2319 = vmatpush1.msra.mxu0 %v2283
        %2320 = vmatprep.subr.mxu0 0.0
        %2321 = vmatpush1.msra.mxu0 %v2282
        %2322 = vmatprep.subr.mxu0 0.0
        %2323 = vmatpush2.msra.mxu0 0.0
        %2324 = vmatprep.subr.mxu0 0.0
        %2325 = vmatpush2.msra.mxu0 0.0
        %2326 = vmatprep.subr.mxu0 0.0
        %2327 = vmatpush2.msra.mxu0 0.0
        %2328 = vmatprep.subr.mxu0 0.0
        %2329 = vmatpush2.msra.mxu0 0.0
        %2330 = vmatprep.subr.mxu0 0.0
        %2331 = vmatpush2.msra.mxu0 0.0
        %2332 = vmatprep.subr.mxu0 0.0
        %2333 = vmatpush2.msra.mxu0 0.0
        %2334 = vmatprep.subr.mxu0 0.0
        %2335 = vmatpush2.msra.mxu0 0.0
        %2336 = vmatprep.subr.mxu0 0.0
        %2337 = vmatpush2.msra.mxu0 0.0
        %2338 = vmatprep.subr.mxu0 0.0
        %2339 = vmatpush2.msra.mxu0 0.0
        %2340 = vmatprep.subr.mxu0 0.0
        %2341 = vmatpush2.msra.mxu0 0.0
        %2342 = vmatprep.subr.mxu0 0.0
        %2343 = vmatpush2.msra.mxu0 0.0
        %2344 = vmatprep.subr.mxu0 0.0
        %2345 = vmatpush2.msra.mxu0 0.0
        %2346 = vmatprep.subr.mxu0 0.0
        %2347 = vmatpush2.msra.mxu0 0.0
        %2348 = vmatprep.subr.mxu0 0.0
        %2349 = vmatpush2.msra.mxu0 0.0
        %2350 = vmatprep.subr.mxu0 0.0
        %2351 = vmatpush2.msra.mxu0 0.0
        %2352 = vmatprep.subr.mxu0 0.0
        %2353 = vmatpush2.msra.mxu0 0.0
        %2354 = vmatprep.mubr.f32.mxu0 0.0
        %2355 = vmatmul.mubr.f32.gmra.mxu0 %v2285
        %v2356 = vpop.f32.mrf.mxu0
        %v2357 = vadd.f32 0.0, %v2356
        %v2358 = vpop.f32.mrf.mxu0
        %2359 = vmatprep.mubr.f32.mxu0 0.0
        %2360 = vmatmul.mubr.f32.gmra.mxu0 %v2288
        %v2361 = vpop.f32.mrf.mxu0
        %v2362 = vadd.f32 0.0, %v2361
        %v2363 = vpop.f32.mrf.mxu0
        %2364 = vdwg.mxu0
        %v2365 = vmul.f32 %v2357, 0.5
        %v2366 = vmul.f32 %v2362, 0.5
        %v2367 = vmul.f32 %v2357, 0.70710677
        %v2368 = vmul.f32 %v2362, 0.70710677
        %v2369 = vand.u32 2147483647, %v2367
        %v2370 = vand.u32 2147483647, %v2368
        %v2371 = vmul.f32 %v2369, 0.3275911
        %v2372 = vmul.f32 %v2370, 0.3275911
        %v2373 = vadd.f32 %v2371, 1.0
        %v2374 = vadd.f32 %v2372, 1.0
        %v2375 = vrcp.pop %v2373
        %v2376 = vmul.f32 1.0, %v2375
        %v2377 = vrcp.pop %v2374
        %v2378 = vmul.f32 1.0, %v2377
        %v2379 = vmul.f32 %v2376, 1.0614054
        %v2380 = vmul.f32 %v2378, 1.0614054
        %v2381 = vadd.f32 %v2379, -1.4531521
        %v2382 = vadd.f32 %v2380, -1.4531521
        %v2383 = vmul.f32 %v2381, %v2376
        %v2384 = vmul.f32 %v2382, %v2378
        %v2385 = vadd.f32 %v2383, 1.4214138
        %v2386 = vadd.f32 %v2384, 1.4214138
        %v2387 = vmul.f32 %v2385, %v2376
        %v2388 = vmul.f32 %v2386, %v2378
        %v2389 = vadd.f32 %v2387, -0.28449672
        %v2390 = vadd.f32 %v2388, -0.28449672
        %v2391 = vmul.f32 %v2389, %v2376
        %v2392 = vmul.f32 %v2390, %v2378
        %v2393 = vadd.f32 %v2391, 0.2548296
        %v2394 = vadd.f32 %v2392, 0.2548296
        %v2395 = vmul.f32 %v2393, %v2376
        %v2396 = vmul.f32 %v2394, %v2378
        %v2397 = vmul.f32 %v2369, %v2369
        %v2398 = vmul.f32 %v2370, %v2370
        %v2399 = vsub.f32 0.0, %v2397
        %v2400 = vsub.f32 0.0, %v2398
        %v2401 = vmul.f32 %v2399, 1.442695
        %v2402 = vpow.pop %v2401
        %v2403 = vmul.f32 %v2400, 1.442695
        %v2404 = vpow.pop %v2403
        %v2405 = vmul.f32 %v2395, %v2402
        %v2406 = vmul.f32 %v2396, %v2404
        %v2407 = vsub.f32 1.0, %v2405
        %v2408 = vsub.f32 1.0, %v2406
        %vm2409 = vcmp.lt.f32.partialorder %v2367, 0.0
        %vm2410 = vcmp.lt.f32.partialorder %v2368, 0.0
        %v2411 = vsub.f32 0.0, %v2407
        %v2412 = vsub.f32 0.0, %v2408
        %v2413 = vsel %vm2409, %v2411, %v2407
        %v2414 = vsel %vm2410, %v2412, %v2408
        %v2415 = vadd.f32 %v2413, 1.0
        %v2416 = vadd.f32 %v2414, 1.0
        %v2417 = vmul.f32 %v2365, %v2415
        %v2418 = vmul.f32 %v2366, %v2416
        %v2419 = vld [vmem:[%s18] sm:$0xff]
        %v2420 = vld [vmem:[%s18 + $0x8] sm:$0xff]
        %v2421 = vld [vmem:[%s18 + $0x10] sm:$0xff]
        %v2422 = vld [vmem:[%s18 + $0x18] sm:$0xff]
        %vm2423 = vcmask 261120
        %v2425 = vsel %vm2423, %v2417, 0
        %v2428 = vsel %vm2423, %v2418, 0
        %2430 = vmatprep.subr.mxu0 0.0
        %2431 = vmatpush1.msra.mxu0 0.0
        %2432 = vmatprep.subr.mxu0 0.0
        %2433 = vmatpush1.msra.mxu0 0.0
        %2434 = vmatprep.subr.mxu0 0.0
        %2435 = vmatpush1.msra.mxu0 0.0
        %2436 = vmatprep.subr.mxu0 0.0
        %2437 = vmatpush1.msra.mxu0 0.0
        %2438 = vmatprep.subr.mxu0 0.0
        %2439 = vmatpush1.msra.mxu0 0.0
        %2440 = vmatprep.subr.mxu0 0.0
        %2441 = vmatpush1.msra.mxu0 0.0
        %2442 = vmatprep.subr.mxu0 0.0
        %2443 = vmatpush1.msra.mxu0 0.0
        %2444 = vmatprep.subr.mxu0 0.0
        %2445 = vmatpush1.msra.mxu0 0.0
        %2446 = vmatprep.subr.mxu0 0.0
        %2447 = vmatpush1.msra.mxu0 0.0
        %2448 = vmatprep.subr.mxu0 0.0
        %2449 = vmatpush1.msra.mxu0 0.0
        %2450 = vmatprep.subr.mxu0 0.0
        %2451 = vmatpush1.msra.mxu0 0.0
        %2452 = vmatprep.subr.mxu0 0.0
        %2453 = vmatpush1.msra.mxu0 0.0
        %2454 = vmatprep.subr.mxu0 0.0
        %2455 = vmatpush1.msra.mxu0 %v2422
        %2456 = vmatprep.subr.mxu0 0.0
        %2457 = vmatpush1.msra.mxu0 %v2421
        %2458 = vmatprep.subr.mxu0 0.0
        %2459 = vmatpush1.msra.mxu0 %v2420
        %2460 = vmatprep.subr.mxu0 0.0
        %2461 = vmatpush1.msra.mxu0 %v2419
        %2462 = vmatprep.subr.mxu0 0.0
        %2463 = vmatpush2.msra.mxu0 0.0
        %2464 = vmatprep.subr.mxu0 0.0
        %2465 = vmatpush2.msra.mxu0 0.0
        %2466 = vmatprep.subr.mxu0 0.0
        %2467 = vmatpush2.msra.mxu0 0.0
        %2468 = vmatprep.subr.mxu0 0.0
        %2469 = vmatpush2.msra.mxu0 0.0
        %2470 = vmatprep.subr.mxu0 0.0
        %2471 = vmatpush2.msra.mxu0 0.0
        %2472 = vmatprep.subr.mxu0 0.0
        %2473 = vmatpush2.msra.mxu0 0.0
        %2474 = vmatprep.subr.mxu0 0.0
        %2475 = vmatpush2.msra.mxu0 0.0
        %2476 = vmatprep.subr.mxu0 0.0
        %2477 = vmatpush2.msra.mxu0 0.0
        %2478 = vmatprep.subr.mxu0 0.0
        %2479 = vmatpush2.msra.mxu0 0.0
        %2480 = vmatprep.subr.mxu0 0.0
        %2481 = vmatpush2.msra.mxu0 0.0
        %2482 = vmatprep.subr.mxu0 0.0
        %2483 = vmatpush2.msra.mxu0 0.0
        %2484 = vmatprep.subr.mxu0 0.0
        %2485 = vmatpush2.msra.mxu0 0.0
        %2486 = vmatprep.subr.mxu0 0.0
        %2487 = vmatpush2.msra.mxu0 0.0
        %2488 = vmatprep.subr.mxu0 0.0
        %2489 = vmatpush2.msra.mxu0 0.0
        %2490 = vmatprep.subr.mxu0 0.0
        %2491 = vmatpush2.msra.mxu0 0.0
        %2492 = vmatprep.subr.mxu0 0.0
        %2493 = vmatpush2.msra.mxu0 0.0
        %2494 = vmatprep.mubr.f32.mxu0 0.0
        %2495 = vmatmul.mubr.f32.gmra.mxu0 %v2425
        %v2496 = vpop.f32.mrf.mxu0
        %v2497 = vadd.f32 0.0, %v2496
        %v2498 = vpop.f32.mrf.mxu0
        %2499 = vmatprep.mubr.f32.mxu0 0.0
        %2500 = vmatmul.mubr.f32.gmra.mxu0 %v2428
        %v2501 = vpop.f32.mrf.mxu0
        %v2502 = vadd.f32 0.0, %v2501
        %v2503 = vpop.f32.mrf.mxu0
        %2504 = vdwg.mxu0
        %v2505 = vadd.f32 %v2274, %v2497
        %v2506 = vadd.f32 %v2279, %v2502
        %2507 = vmatprep.subr.mxu0 0.0
        %2508 = vmatpush1.msra.mxu0 0.0
        %2509 = vmatprep.subr.mxu0 0.0
        %2510 = vmatpush1.msra.mxu0 0.0
        %2511 = vmatprep.subr.mxu0 0.0
        %2512 = vmatpush1.msra.mxu0 0.0
        %2513 = vmatprep.subr.mxu0 0.0
        %2514 = vmatpush1.msra.mxu0 0.0
        %2515 = vmatprep.subr.mxu0 0.0
        %2516 = vmatpush1.msra.mxu0 0.0
        %2517 = vmatprep.subr.mxu0 0.0
        %2518 = vmatpush1.msra.mxu0 0.0
        %2519 = vmatprep.subr.mxu0 0.0
        %2520 = vmatpush1.msra.mxu0 0.0
        %2521 = vmatprep.subr.mxu0 0.0
        %2522 = vmatpush1.msra.mxu0 0.0
        %2523 = vmatprep.subr.mxu0 0.0
        %2524 = vmatpush1.msra.mxu0 0.0
        %2525 = vmatprep.subr.mxu0 0.0
        %2526 = vmatpush1.msra.mxu0 0.0
        %2527 = vmatprep.subr.mxu0 0.0
        %2528 = vmatpush1.msra.mxu0 0.0
        %2529 = vmatprep.subr.mxu0 0.0
        %2530 = vmatpush1.msra.mxu0 0.0
        %2531 = vmatprep.subr.mxu0 0.0
        %2532 = vmatpush1.msra.mxu0 0.0
        %2533 = vmatprep.subr.mxu0 0.0
        %2534 = vmatpush1.msra.mxu0 0.0
        %2535 = vmatprep.subr.mxu0 0.0
        %2536 = vmatpush1.msra.mxu0 %v2506
        %2537 = vmatprep.subr.mxu0 0.0
        %2538 = vmatpush1.msra.mxu0 %v2505
        %2539 = vmatprep.subr.mxu0 0.0
        %2540 = vmatpush2.msra.mxu0 0.0
        %2541 = vmatprep.subr.mxu0 0.0
        %2542 = vmatpush2.msra.mxu0 0.0
        %2543 = vmatprep.subr.mxu0 0.0
        %2544 = vmatpush2.msra.mxu0 0.0
        %2545 = vmatprep.subr.mxu0 0.0
        %2546 = vmatpush2.msra.mxu0 0.0
        %2547 = vmatprep.subr.mxu0 0.0
        %2548 = vmatpush2.msra.mxu0 0.0
        %2549 = vmatprep.subr.mxu0 0.0
        %2550 = vmatpush2.msra.mxu0 0.0
        %2551 = vmatprep.subr.mxu0 0.0
        %2552 = vmatpush2.msra.mxu0 0.0
        %2553 = vmatprep.subr.mxu0 0.0
        %2554 = vmatpush2.msra.mxu0 0.0
        %2555 = vmatprep.subr.mxu0 0.0
        %2556 = vmatpush2.msra.mxu0 0.0
        %2557 = vmatprep.subr.mxu0 0.0
        %2558 = vmatpush2.msra.mxu0 0.0
        %2559 = vmatprep.subr.mxu0 0.0
        %2560 = vmatpush2.msra.mxu0 0.0
        %2561 = vmatprep.subr.mxu0 0.0
        %2562 = vmatpush2.msra.mxu0 0.0
        %2563 = vmatprep.subr.mxu0 0.0
        %2564 = vmatpush2.msra.mxu0 0.0
        %2565 = vmatprep.subr.mxu0 0.0
        %2566 = vmatpush2.msra.mxu0 0.0
        %2567 = vmatprep.subr.mxu0 0.0
        %2568 = vmatpush2.msra.mxu0 0.0
        %2569 = vmatprep.subr.mxu0 0.0
        %2570 = vmatpush2.msra.mxu0 0.0
        %2571 = vmatprep.mubr.f32.mxu0 0.0
        %2572 = vmatmul.mubr.f32.gmra.mxu0 %v2202
        %v2573 = vpop.f32.mrf.mxu0
        %v2574 = vadd.f32 0.0, %v2573
        %v2575 = vpop.f32.mrf.mxu0
        %2576 = vmatprep.mubr.f32.mxu0 0.0
        %2577 = vmatmul.mubr.f32.gmra.mxu0 %v2205
        %v2578 = vpop.f32.mrf.mxu0
        %v2579 = vadd.f32 0.0, %v2578
        %v2580 = vpop.f32.mrf.mxu0
        %2581 = vdwg.mxu0
        %s2582 = scalar_lea.vmem [#allocation11], 16
        %v2583 = vld [vmem:[%s2582] sm:$0xff]
        %v2584 = vld [vmem:[%s2582 + $0x8] sm:$0xff]
        %s2585 = scalar_lea.vmem [#allocation13], 1
        %v2586 = vld [vmem:[%s2585] sm:$0x1]
        %v2588 = vlaneseq
        %v2589 = vshrl.u32 %v2588, 7
        %v2590 = vsub.s32 0, %v2589
        %v2591 = vrot.slane %v2586, %v2590
        %v2594 = vsel %vm891, %v2574, 0
        %v2597 = vsel %vm891, %v2579, 0
        %2599 = vmatprep.subr.mxu0 0.0
        %2600 = vmatpush1.msra.mxu0 0.0
        %2601 = vmatprep.subr.mxu0 0.0
        %2602 = vmatpush1.msra.mxu0 0.0
        %2603 = vmatprep.subr.mxu0 0.0
        %2604 = vmatpush1.msra.mxu0 0.0
        %2605 = vmatprep.subr.mxu0 0.0
        %2606 = vmatpush1.msra.mxu0 0.0
        %2607 = vmatprep.subr.mxu0 0.0
        %2608 = vmatpush1.msra.mxu0 0.0
        %2609 = vmatprep.subr.mxu0 0.0
        %2610 = vmatpush1.msra.mxu0 0.0
        %2611 = vmatprep.subr.mxu0 0.0
        %2612 = vmatpush1.msra.mxu0 0.0
        %2613 = vmatprep.subr.mxu0 0.0
        %2614 = vmatpush1.msra.mxu0 0.0
        %2615 = vmatprep.subr.mxu0 0.0
        %2616 = vmatpush1.msra.mxu0 0.0
        %2617 = vmatprep.subr.mxu0 0.0
        %2618 = vmatpush1.msra.mxu0 0.0
        %2619 = vmatprep.subr.mxu0 0.0
        %2620 = vmatpush1.msra.mxu0 0.0
        %2621 = vmatprep.subr.mxu0 0.0
        %2622 = vmatpush1.msra.mxu0 0.0
        %2623 = vmatprep.subr.mxu0 0.0
        %2624 = vmatpush1.msra.mxu0 0.0
        %2625 = vmatprep.subr.mxu0 0.0
        %2626 = vmatpush1.msra.mxu0 0.0
        %2627 = vmatprep.subr.mxu0 0.0
        %2628 = vmatpush1.msra.mxu0 %v2584
        %2629 = vmatprep.subr.mxu0 0.0
        %2630 = vmatpush1.msra.mxu0 %v2583
        %2631 = vmatprep.subr.mxu0 0.0
        %2632 = vmatpush2.msra.mxu0 0.0
        %2633 = vmatprep.subr.mxu0 0.0
        %2634 = vmatpush2.msra.mxu0 0.0
        %2635 = vmatprep.subr.mxu0 0.0
        %2636 = vmatpush2.msra.mxu0 0.0
        %2637 = vmatprep.subr.mxu0 0.0
        %2638 = vmatpush2.msra.mxu0 0.0
        %2639 = vmatprep.subr.mxu0 0.0
        %2640 = vmatpush2.msra.mxu0 0.0
        %2641 = vmatprep.subr.mxu0 0.0
        %2642 = vmatpush2.msra.mxu0 0.0
        %2643 = vmatprep.subr.mxu0 0.0
        %2644 = vmatpush2.msra.mxu0 0.0
        %2645 = vmatprep.subr.mxu0 0.0
        %2646 = vmatpush2.msra.mxu0 0.0
        %2647 = vmatprep.subr.mxu0 0.0
        %2648 = vmatpush2.msra.mxu0 0.0
        %2649 = vmatprep.subr.mxu0 0.0
        %2650 = vmatpush2.msra.mxu0 0.0
        %2651 = vmatprep.subr.mxu0 0.0
        %2652 = vmatpush2.msra.mxu0 0.0
        %2653 = vmatprep.subr.mxu0 0.0
        %2654 = vmatpush2.msra.mxu0 0.0
        %2655 = vmatprep.subr.mxu0 0.0
        %2656 = vmatpush2.msra.mxu0 0.0
        %2657 = vmatprep.subr.mxu0 0.0
        %2658 = vmatpush2.msra.mxu0 0.0
        %2659 = vmatprep.subr.mxu0 0.0
        %2660 = vmatpush2.msra.mxu0 0.0
        %2661 = vmatprep.subr.mxu0 0.0
        %2662 = vmatpush2.msra.mxu0 0.0
        %2663 = vmatprep.mubr.f32.mxu0 0.0
        %2664 = vmatmul.mubr.f32.gmra.mxu0 %v2594
        %v2665 = vpop.f32.mrf.mxu0
        %v2666 = vadd.f32 %v2591, %v2665
        %v2667 = vpop.f32.mrf.mxu0
        %2668 = vmatprep.mubr.f32.mxu0 0.0
        %2669 = vmatmul.mubr.f32.gmra.mxu0 %v2597
        %v2670 = vpop.f32.mrf.mxu0
        %v2671 = vadd.f32 %v2591, %v2670
        %v2672 = vpop.f32.mrf.mxu0
        %2673 = vdwg.mxu0
        %v2675 = vsel %vm891, %v2666, 0
        %v2678 = vsel %vm891, %v2671, 0
        %2680 = vmatprep.subr.mxu0 0.0
        %2681 = vmatpush1.xpose.msra.mxu0 0.0
        %2682 = vmatprep.subr.mxu0 0.0
        %2683 = vmatpush1.xpose.msra.mxu0 0.0
        %2684 = vmatprep.subr.mxu0 0.0
        %2685 = vmatpush1.xpose.msra.mxu0 0.0
        %2686 = vmatprep.subr.mxu0 0.0
        %2687 = vmatpush1.xpose.msra.mxu0 0.0
        %2688 = vmatprep.subr.mxu0 0.0
        %2689 = vmatpush1.xpose.msra.mxu0 0.0
        %2690 = vmatprep.subr.mxu0 0.0
        %2691 = vmatpush1.xpose.msra.mxu0 0.0
        %2692 = vmatprep.subr.mxu0 0.0
        %2693 = vmatpush1.xpose.msra.mxu0 0.0
        %2694 = vmatprep.subr.mxu0 0.0
        %2695 = vmatpush1.xpose.msra.mxu0 0.0
        %2696 = vmatprep.subr.mxu0 0.0
        %2697 = vmatpush1.xpose.msra.mxu0 0.0
        %2698 = vmatprep.subr.mxu0 0.0
        %2699 = vmatpush1.xpose.msra.mxu0 0.0
        %2700 = vmatprep.subr.mxu0 0.0
        %2701 = vmatpush1.xpose.msra.mxu0 0.0
        %2702 = vmatprep.subr.mxu0 0.0
        %2703 = vmatpush1.xpose.msra.mxu0 0.0
        %2704 = vmatprep.subr.mxu0 0.0
        %2705 = vmatpush1.xpose.msra.mxu0 0.0
        %2706 = vmatprep.subr.mxu0 0.0
        %2707 = vmatpush1.xpose.msra.mxu0 0.0
        %2708 = vmatprep.subr.mxu0 0.0
        %2709 = vmatpush1.xpose.msra.mxu0 %v2678
        %2710 = vmatprep.subr.mxu0 0.0
        %2711 = vmatpush1.xpose.msra.mxu0 %v2675
        %2712 = vmatprep.subr.mxu0 0.0
        %2713 = vmatpush2.xpose.msra.mxu0 0.0
        %2714 = vmatprep.subr.mxu0 0.0
        %2715 = vmatpush2.xpose.msra.mxu0 0.0
        %2716 = vmatprep.subr.mxu0 0.0
        %2717 = vmatpush2.xpose.msra.mxu0 0.0
        %2718 = vmatprep.subr.mxu0 0.0
        %2719 = vmatpush2.xpose.msra.mxu0 0.0
        %2720 = vmatprep.subr.mxu0 0.0
        %2721 = vmatpush2.xpose.msra.mxu0 0.0
        %2722 = vmatprep.subr.mxu0 0.0
        %2723 = vmatpush2.xpose.msra.mxu0 0.0
        %2724 = vmatprep.subr.mxu0 0.0
        %2725 = vmatpush2.xpose.msra.mxu0 0.0
        %2726 = vmatprep.subr.mxu0 0.0
        %2727 = vmatpush2.xpose.msra.mxu0 0.0
        %2728 = vmatprep.subr.mxu0 0.0
        %2729 = vmatpush2.xpose.msra.mxu0 0.0
        %2730 = vmatprep.subr.mxu0 0.0
        %2731 = vmatpush2.xpose.msra.mxu0 0.0
        %2732 = vmatprep.subr.mxu0 0.0
        %2733 = vmatpush2.xpose.msra.mxu0 0.0
        %2734 = vmatprep.subr.mxu0 0.0
        %2735 = vmatpush2.xpose.msra.mxu0 0.0
        %2736 = vmatprep.subr.mxu0 0.0
        %2737 = vmatpush2.xpose.msra.mxu0 0.0
        %2738 = vmatprep.subr.mxu0 0.0
        %2739 = vmatpush2.xpose.msra.mxu0 0.0
        %2740 = vmatprep.subr.mxu0 0.0
        %2741 = vmatpush2.xpose.msra.mxu0 0.0
        %2742 = vmatprep.subr.mxu0 0.0
        %2743 = vmatpush2.xpose.msra.mxu0 0.0
        %2744 = vmatprep.mubr.f32.mxu0 0.0
        %2745 = vmatmul.mubr.f32.gmra.mxu0 %v1415
        %v2746 = vpop.f32.mrf.mxu0
        %v2747 = vadd.f32 0.0, %v2746
        %v2748 = vpop.f32.mrf.mxu0
        %2749 = vmatprep.mubr.f32.mxu0 0.0
        %2750 = vmatmul.mubr.f32.gmra.mxu0 %v1418
        %v2751 = vpop.f32.mrf.mxu0
        %v2752 = vadd.f32 0.0, %v2751
        %v2753 = vpop.f32.mrf.mxu0
        %2754 = vdwg.mxu0
        %v2756 = vsel %vm891, %v2747, 0
        %v2759 = vsel %vm891, %v2752, 0
        %2761 = vmatprep.subr.mxu0 0.0
        %2762 = vmatpush1.msra.mxu0 0.0
        %2763 = vmatprep.subr.mxu0 0.0
        %2764 = vmatpush1.msra.mxu0 0.0
        %2765 = vmatprep.subr.mxu0 0.0
        %2766 = vmatpush1.msra.mxu0 0.0
        %2767 = vmatprep.subr.mxu0 0.0
        %2768 = vmatpush1.msra.mxu0 0.0
        %2769 = vmatprep.subr.mxu0 0.0
        %2770 = vmatpush1.msra.mxu0 0.0
        %2771 = vmatprep.subr.mxu0 0.0
        %2772 = vmatpush1.msra.mxu0 0.0
        %2773 = vmatprep.subr.mxu0 0.0
        %2774 = vmatpush1.msra.mxu0 0.0
        %2775 = vmatprep.subr.mxu0 0.0
        %2776 = vmatpush1.msra.mxu0 0.0
        %2777 = vmatprep.subr.mxu0 0.0
        %2778 = vmatpush1.msra.mxu0 0.0
        %2779 = vmatprep.subr.mxu0 0.0
        %2780 = vmatpush1.msra.mxu0 0.0
        %2781 = vmatprep.subr.mxu0 0.0
        %2782 = vmatpush1.msra.mxu0 0.0
        %2783 = vmatprep.subr.mxu0 0.0
        %2784 = vmatpush1.msra.mxu0 0.0
        %2785 = vmatprep.subr.mxu0 0.0
        %2786 = vmatpush1.msra.mxu0 0.0
        %2787 = vmatprep.subr.mxu0 0.0
        %2788 = vmatpush1.msra.mxu0 0.0
        %2789 = vmatprep.subr.mxu0 0.0
        %2790 = vmatpush1.msra.mxu0 %v1317
        %2791 = vmatprep.subr.mxu0 0.0
        %2792 = vmatpush1.msra.mxu0 %v1316
        %2793 = vmatprep.subr.mxu0 0.0
        %2794 = vmatpush2.msra.mxu0 0.0
        %2795 = vmatprep.subr.mxu0 0.0
        %2796 = vmatpush2.msra.mxu0 0.0
        %2797 = vmatprep.subr.mxu0 0.0
        %2798 = vmatpush2.msra.mxu0 0.0
        %2799 = vmatprep.subr.mxu0 0.0
        %2800 = vmatpush2.msra.mxu0 0.0
        %2801 = vmatprep.subr.mxu0 0.0
        %2802 = vmatpush2.msra.mxu0 0.0
        %2803 = vmatprep.subr.mxu0 0.0
        %2804 = vmatpush2.msra.mxu0 0.0
        %2805 = vmatprep.subr.mxu0 0.0
        %2806 = vmatpush2.msra.mxu0 0.0
        %2807 = vmatprep.subr.mxu0 0.0
        %2808 = vmatpush2.msra.mxu0 0.0
        %2809 = vmatprep.subr.mxu0 0.0
        %2810 = vmatpush2.msra.mxu0 0.0
        %2811 = vmatprep.subr.mxu0 0.0
        %2812 = vmatpush2.msra.mxu0 0.0
        %2813 = vmatprep.subr.mxu0 0.0
        %2814 = vmatpush2.msra.mxu0 0.0
        %2815 = vmatprep.subr.mxu0 0.0
        %2816 = vmatpush2.msra.mxu0 0.0
        %2817 = vmatprep.subr.mxu0 0.0
        %2818 = vmatpush2.msra.mxu0 0.0
        %2819 = vmatprep.subr.mxu0 0.0
        %2820 = vmatpush2.msra.mxu0 0.0
        %2821 = vmatprep.subr.mxu0 0.0
        %2822 = vmatpush2.msra.mxu0 0.0
        %2823 = vmatprep.subr.mxu0 0.0
        %2824 = vmatpush2.msra.mxu0 0.0
        %2825 = vmatprep.mubr.f32.mxu0 0.0
        %2826 = vmatmul.mubr.f32.gmra.mxu0 %v2756
        %v2827 = vpop.f32.mrf.mxu0
        %v2828 = vadd.f32 0.0, %v2827
        %v2829 = vpop.f32.mrf.mxu0
        %2830 = vmatprep.mubr.f32.mxu0 0.0
        %2831 = vmatmul.mubr.f32.gmra.mxu0 %v2759
        %v2832 = vpop.f32.mrf.mxu0
        %v2833 = vadd.f32 0.0, %v2832
        %v2834 = vpop.f32.mrf.mxu0
        %2835 = vdwg.mxu0
        %2836 = vmatprep.subr.mxu0 0.0
        %2837 = vmatpush1.msra.mxu0 0.0
        %2838 = vmatprep.subr.mxu0 0.0
        %2839 = vmatpush1.msra.mxu0 0.0
        %2840 = vmatprep.subr.mxu0 0.0
        %2841 = vmatpush1.msra.mxu0 0.0
        %2842 = vmatprep.subr.mxu0 0.0
        %2843 = vmatpush1.msra.mxu0 0.0
        %2844 = vmatprep.subr.mxu0 0.0
        %2845 = vmatpush1.msra.mxu0 0.0
        %2846 = vmatprep.subr.mxu0 0.0
        %2847 = vmatpush1.msra.mxu0 0.0
        %2848 = vmatprep.subr.mxu0 0.0
        %2849 = vmatpush1.msra.mxu0 0.0
        %2850 = vmatprep.subr.mxu0 0.0
        %2851 = vmatpush1.msra.mxu0 0.0
        %2852 = vmatprep.subr.mxu0 0.0
        %2853 = vmatpush1.msra.mxu0 0.0
        %2854 = vmatprep.subr.mxu0 0.0
        %2855 = vmatpush1.msra.mxu0 0.0
        %2856 = vmatprep.subr.mxu0 0.0
        %2857 = vmatpush1.msra.mxu0 0.0
        %2858 = vmatprep.subr.mxu0 0.0
        %2859 = vmatpush1.msra.mxu0 0.0
        %2860 = vmatprep.subr.mxu0 0.0
        %2861 = vmatpush1.msra.mxu0 0.0
        %2862 = vmatprep.subr.mxu0 0.0
        %2863 = vmatpush1.msra.mxu0 0.0
        %2864 = vmatprep.subr.mxu0 0.0
        %2865 = vmatpush1.msra.mxu0 %v1319
        %2866 = vmatprep.subr.mxu0 0.0
        %2867 = vmatpush1.msra.mxu0 %v1318
        %2868 = vmatprep.subr.mxu0 0.0
        %2869 = vmatpush2.msra.mxu0 0.0
        %2870 = vmatprep.subr.mxu0 0.0
        %2871 = vmatpush2.msra.mxu0 0.0
        %2872 = vmatprep.subr.mxu0 0.0
        %2873 = vmatpush2.msra.mxu0 0.0
        %2874 = vmatprep.subr.mxu0 0.0
        %2875 = vmatpush2.msra.mxu0 0.0
        %2876 = vmatprep.subr.mxu0 0.0
        %2877 = vmatpush2.msra.mxu0 0.0
        %2878 = vmatprep.subr.mxu0 0.0
        %2879 = vmatpush2.msra.mxu0 0.0
        %2880 = vmatprep.subr.mxu0 0.0
        %2881 = vmatpush2.msra.mxu0 0.0
        %2882 = vmatprep.subr.mxu0 0.0
        %2883 = vmatpush2.msra.mxu0 0.0
        %2884 = vmatprep.subr.mxu0 0.0
        %2885 = vmatpush2.msra.mxu0 0.0
        %2886 = vmatprep.subr.mxu0 0.0
        %2887 = vmatpush2.msra.mxu0 0.0
        %2888 = vmatprep.subr.mxu0 0.0
        %2889 = vmatpush2.msra.mxu0 0.0
        %2890 = vmatprep.subr.mxu0 0.0
        %2891 = vmatpush2.msra.mxu0 0.0
        %2892 = vmatprep.subr.mxu0 0.0
        %2893 = vmatpush2.msra.mxu0 0.0
        %2894 = vmatprep.subr.mxu0 0.0
        %2895 = vmatpush2.msra.mxu0 0.0
        %2896 = vmatprep.subr.mxu0 0.0
        %2897 = vmatpush2.msra.mxu0 0.0
        %2898 = vmatprep.subr.mxu0 0.0
        %2899 = vmatpush2.msra.mxu0 0.0
        %2900 = vmatprep.mubr.f32.mxu0 0.0
        %2901 = vmatmul.mubr.f32.gmra.mxu0 %v2756
        %v2902 = vpop.f32.mrf.mxu0
        %v2903 = vadd.f32 0.0, %v2902
        %v2904 = vpop.f32.mrf.mxu0
        %2905 = vmatprep.mubr.f32.mxu0 0.0
        %2906 = vmatmul.mubr.f32.gmra.mxu0 %v2759
        %v2907 = vpop.f32.mrf.mxu0
        %v2908 = vadd.f32 0.0, %v2907
        %v2909 = vpop.f32.mrf.mxu0
        %2910 = vdwg.mxu0
        %v2911 = vmul.f32 %v2828, %v1657
        %v2912 = vmul.f32 %v2833, %v1658
        %v2913 = vadd.f32 %v2911, 0.0
        %v2914 = vadd.f32 %v2912, 0.0
        %v2915 = vmul.f32 %v2903, %v1659
        %v2916 = vmul.f32 %v2908, %v1660
        %v2917 = vsub.f32 %v2913, %v2915
        %v2918 = vsub.f32 %v2914, %v2916
        %v2919 = vmul.f32 %v2828, %v1659
        %v2920 = vmul.f32 %v2833, %v1660
        %v2921 = vadd.f32 %v2919, 0.0
        %v2922 = vadd.f32 %v2920, 0.0
        %v2923 = vmul.f32 %v2903, %v1657
        %v2924 = vmul.f32 %v2908, %v1658
        %v2925 = vadd.f32 %v2921, %v2923
        %v2926 = vadd.f32 %v2922, %v2924
        %2927 = vmatprep.subr.mxu0 0.0
        %2928 = vmatpush1.xpose.msra.mxu0 0.0
        %2929 = vmatprep.subr.mxu0 0.0
        %2930 = vmatpush1.xpose.msra.mxu0 0.0
        %2931 = vmatprep.subr.mxu0 0.0
        %2932 = vmatpush1.xpose.msra.mxu0 0.0
        %2933 = vmatprep.subr.mxu0 0.0
        %2934 = vmatpush1.xpose.msra.mxu0 0.0
        %2935 = vmatprep.subr.mxu0 0.0
        %2936 = vmatpush1.xpose.msra.mxu0 0.0
        %2937 = vmatprep.subr.mxu0 0.0
        %2938 = vmatpush1.xpose.msra.mxu0 0.0
        %2939 = vmatprep.subr.mxu0 0.0
        %2940 = vmatpush1.xpose.msra.mxu0 0.0
        %2941 = vmatprep.subr.mxu0 0.0
        %2942 = vmatpush1.xpose.msra.mxu0 0.0
        %2943 = vmatprep.subr.mxu0 0.0
        %2944 = vmatpush1.xpose.msra.mxu0 0.0
        %2945 = vmatprep.subr.mxu0 0.0
        %2946 = vmatpush1.xpose.msra.mxu0 0.0
        %2947 = vmatprep.subr.mxu0 0.0
        %2948 = vmatpush1.xpose.msra.mxu0 0.0
        %2949 = vmatprep.subr.mxu0 0.0
        %2950 = vmatpush1.xpose.msra.mxu0 0.0
        %2951 = vmatprep.subr.mxu0 0.0
        %2952 = vmatpush1.xpose.msra.mxu0 0.0
        %2953 = vmatprep.subr.mxu0 0.0
        %2954 = vmatpush1.xpose.msra.mxu0 0.0
        %2955 = vmatprep.subr.mxu0 0.0
        %2956 = vmatpush1.xpose.msra.mxu0 %v2678
        %2957 = vmatprep.subr.mxu0 0.0
        %2958 = vmatpush1.xpose.msra.mxu0 %v2675
        %2959 = vmatprep.subr.mxu0 0.0
        %2960 = vmatpush2.xpose.msra.mxu0 0.0
        %2961 = vmatprep.subr.mxu0 0.0
        %2962 = vmatpush2.xpose.msra.mxu0 0.0
        %2963 = vmatprep.subr.mxu0 0.0
        %2964 = vmatpush2.xpose.msra.mxu0 0.0
        %2965 = vmatprep.subr.mxu0 0.0
        %2966 = vmatpush2.xpose.msra.mxu0 0.0
        %2967 = vmatprep.subr.mxu0 0.0
        %2968 = vmatpush2.xpose.msra.mxu0 0.0
        %2969 = vmatprep.subr.mxu0 0.0
        %2970 = vmatpush2.xpose.msra.mxu0 0.0
        %2971 = vmatprep.subr.mxu0 0.0
        %2972 = vmatpush2.xpose.msra.mxu0 0.0
        %2973 = vmatprep.subr.mxu0 0.0
        %2974 = vmatpush2.xpose.msra.mxu0 0.0
        %2975 = vmatprep.subr.mxu0 0.0
        %2976 = vmatpush2.xpose.msra.mxu0 0.0
        %2977 = vmatprep.subr.mxu0 0.0
        %2978 = vmatpush2.xpose.msra.mxu0 0.0
        %2979 = vmatprep.subr.mxu0 0.0
        %2980 = vmatpush2.xpose.msra.mxu0 0.0
        %2981 = vmatprep.subr.mxu0 0.0
        %2982 = vmatpush2.xpose.msra.mxu0 0.0
        %2983 = vmatprep.subr.mxu0 0.0
        %2984 = vmatpush2.xpose.msra.mxu0 0.0
        %2985 = vmatprep.subr.mxu0 0.0
        %2986 = vmatpush2.xpose.msra.mxu0 0.0
        %2987 = vmatprep.subr.mxu0 0.0
        %2988 = vmatpush2.xpose.msra.mxu0 0.0
        %2989 = vmatprep.subr.mxu0 0.0
        %2990 = vmatpush2.xpose.msra.mxu0 0.0
        %2991 = vmatprep.mubr.f32.mxu0 0.0
        %2992 = vmatmul.mubr.f32.gmra.mxu0 %v1681
        %v2993 = vpop.f32.mrf.mxu0
        %v2994 = vadd.f32 0.0, %v2993
        %v2995 = vpop.f32.mrf.mxu0
        %2996 = vmatprep.mubr.f32.mxu0 0.0
        %2997 = vmatmul.mubr.f32.gmra.mxu0 %v1684
        %v2998 = vpop.f32.mrf.mxu0
        %v2999 = vadd.f32 0.0, %v2998
        %v3000 = vpop.f32.mrf.mxu0
        %3001 = vdwg.mxu0
        %v3003 = vsel %vm891, %v2994, 0
        %v3006 = vsel %vm891, %v2999, 0
        %3008 = vmatprep.subr.mxu0 0.0
        %3009 = vmatpush1.msra.mxu0 0.0
        %3010 = vmatprep.subr.mxu0 0.0
        %3011 = vmatpush1.msra.mxu0 0.0
        %3012 = vmatprep.subr.mxu0 0.0
        %3013 = vmatpush1.msra.mxu0 0.0
        %3014 = vmatprep.subr.mxu0 0.0
        %3015 = vmatpush1.msra.mxu0 0.0
        %3016 = vmatprep.subr.mxu0 0.0
        %3017 = vmatpush1.msra.mxu0 0.0
        %3018 = vmatprep.subr.mxu0 0.0
        %3019 = vmatpush1.msra.mxu0 0.0
        %3020 = vmatprep.subr.mxu0 0.0
        %3021 = vmatpush1.msra.mxu0 0.0
        %3022 = vmatprep.subr.mxu0 0.0
        %3023 = vmatpush1.msra.mxu0 0.0
        %3024 = vmatprep.subr.mxu0 0.0
        %3025 = vmatpush1.msra.mxu0 0.0
        %3026 = vmatprep.subr.mxu0 0.0
        %3027 = vmatpush1.msra.mxu0 0.0
        %3028 = vmatprep.subr.mxu0 0.0
        %3029 = vmatpush1.msra.mxu0 0.0
        %3030 = vmatprep.subr.mxu0 0.0
        %3031 = vmatpush1.msra.mxu0 0.0
        %3032 = vmatprep.subr.mxu0 0.0
        %3033 = vmatpush1.msra.mxu0 0.0
        %3034 = vmatprep.subr.mxu0 0.0
        %3035 = vmatpush1.msra.mxu0 0.0
        %3036 = vmatprep.subr.mxu0 0.0
        %3037 = vmatpush1.msra.mxu0 %v1317
        %3038 = vmatprep.subr.mxu0 0.0
        %3039 = vmatpush1.msra.mxu0 %v1316
        %3040 = vmatprep.subr.mxu0 0.0
        %3041 = vmatpush2.msra.mxu0 0.0
        %3042 = vmatprep.subr.mxu0 0.0
        %3043 = vmatpush2.msra.mxu0 0.0
        %3044 = vmatprep.subr.mxu0 0.0
        %3045 = vmatpush2.msra.mxu0 0.0
        %3046 = vmatprep.subr.mxu0 0.0
        %3047 = vmatpush2.msra.mxu0 0.0
        %3048 = vmatprep.subr.mxu0 0.0
        %3049 = vmatpush2.msra.mxu0 0.0
        %3050 = vmatprep.subr.mxu0 0.0
        %3051 = vmatpush2.msra.mxu0 0.0
        %3052 = vmatprep.subr.mxu0 0.0
        %3053 = vmatpush2.msra.mxu0 0.0
        %3054 = vmatprep.subr.mxu0 0.0
        %3055 = vmatpush2.msra.mxu0 0.0
        %3056 = vmatprep.subr.mxu0 0.0
        %3057 = vmatpush2.msra.mxu0 0.0
        %3058 = vmatprep.subr.mxu0 0.0
        %3059 = vmatpush2.msra.mxu0 0.0
        %3060 = vmatprep.subr.mxu0 0.0
        %3061 = vmatpush2.msra.mxu0 0.0
        %3062 = vmatprep.subr.mxu0 0.0
        %3063 = vmatpush2.msra.mxu0 0.0
        %3064 = vmatprep.subr.mxu0 0.0
        %3065 = vmatpush2.msra.mxu0 0.0
        %3066 = vmatprep.subr.mxu0 0.0
        %3067 = vmatpush2.msra.mxu0 0.0
        %3068 = vmatprep.subr.mxu0 0.0
        %3069 = vmatpush2.msra.mxu0 0.0
        %3070 = vmatprep.subr.mxu0 0.0
        %3071 = vmatpush2.msra.mxu0 0.0
        %3072 = vmatprep.mubr.f32.mxu0 0.0
        %3073 = vmatmul.mubr.f32.gmra.mxu0 %v3003
        %v3074 = vpop.f32.mrf.mxu0
        %v3075 = vadd.f32 0.0, %v3074
        %v3076 = vpop.f32.mrf.mxu0
        %3077 = vmatprep.mubr.f32.mxu0 0.0
        %3078 = vmatmul.mubr.f32.gmra.mxu0 %v3006
        %v3079 = vpop.f32.mrf.mxu0
        %v3080 = vadd.f32 0.0, %v3079
        %v3081 = vpop.f32.mrf.mxu0
        %3082 = vdwg.mxu0
        %3083 = vmatprep.subr.mxu0 0.0
        %3084 = vmatpush1.msra.mxu0 0.0
        %3085 = vmatprep.subr.mxu0 0.0
        %3086 = vmatpush1.msra.mxu0 0.0
        %3087 = vmatprep.subr.mxu0 0.0
        %3088 = vmatpush1.msra.mxu0 0.0
        %3089 = vmatprep.subr.mxu0 0.0
        %3090 = vmatpush1.msra.mxu0 0.0
        %3091 = vmatprep.subr.mxu0 0.0
        %3092 = vmatpush1.msra.mxu0 0.0
        %3093 = vmatprep.subr.mxu0 0.0
        %3094 = vmatpush1.msra.mxu0 0.0
        %3095 = vmatprep.subr.mxu0 0.0
        %3096 = vmatpush1.msra.mxu0 0.0
        %3097 = vmatprep.subr.mxu0 0.0
        %3098 = vmatpush1.msra.mxu0 0.0
        %3099 = vmatprep.subr.mxu0 0.0
        %3100 = vmatpush1.msra.mxu0 0.0
        %3101 = vmatprep.subr.mxu0 0.0
        %3102 = vmatpush1.msra.mxu0 0.0
        %3103 = vmatprep.subr.mxu0 0.0
        %3104 = vmatpush1.msra.mxu0 0.0
        %3105 = vmatprep.subr.mxu0 0.0
        %3106 = vmatpush1.msra.mxu0 0.0
        %3107 = vmatprep.subr.mxu0 0.0
        %3108 = vmatpush1.msra.mxu0 0.0
        %3109 = vmatprep.subr.mxu0 0.0
        %3110 = vmatpush1.msra.mxu0 0.0
        %3111 = vmatprep.subr.mxu0 0.0
        %3112 = vmatpush1.msra.mxu0 %v1319
        %3113 = vmatprep.subr.mxu0 0.0
        %3114 = vmatpush1.msra.mxu0 %v1318
        %3115 = vmatprep.subr.mxu0 0.0
        %3116 = vmatpush2.msra.mxu0 0.0
        %3117 = vmatprep.subr.mxu0 0.0
        %3118 = vmatpush2.msra.mxu0 0.0
        %3119 = vmatprep.subr.mxu0 0.0
        %3120 = vmatpush2.msra.mxu0 0.0
        %3121 = vmatprep.subr.mxu0 0.0
        %3122 = vmatpush2.msra.mxu0 0.0
        %3123 = vmatprep.subr.mxu0 0.0
        %3124 = vmatpush2.msra.mxu0 0.0
        %3125 = vmatprep.subr.mxu0 0.0
        %3126 = vmatpush2.msra.mxu0 0.0
        %3127 = vmatprep.subr.mxu0 0.0
        %3128 = vmatpush2.msra.mxu0 0.0
        %3129 = vmatprep.subr.mxu0 0.0
        %3130 = vmatpush2.msra.mxu0 0.0
        %3131 = vmatprep.subr.mxu0 0.0
        %3132 = vmatpush2.msra.mxu0 0.0
        %3133 = vmatprep.subr.mxu0 0.0
        %3134 = vmatpush2.msra.mxu0 0.0
        %3135 = vmatprep.subr.mxu0 0.0
        %3136 = vmatpush2.msra.mxu0 0.0
        %3137 = vmatprep.subr.mxu0 0.0
        %3138 = vmatpush2.msra.mxu0 0.0
        %3139 = vmatprep.subr.mxu0 0.0
        %3140 = vmatpush2.msra.mxu0 0.0
        %3141 = vmatprep.subr.mxu0 0.0
        %3142 = vmatpush2.msra.mxu0 0.0
        %3143 = vmatprep.subr.mxu0 0.0
        %3144 = vmatpush2.msra.mxu0 0.0
        %3145 = vmatprep.subr.mxu0 0.0
        %3146 = vmatpush2.msra.mxu0 0.0
        %3147 = vmatprep.mubr.f32.mxu0 0.0
        %3148 = vmatmul.mubr.f32.gmra.mxu0 %v3003
        %v3149 = vpop.f32.mrf.mxu0
        %v3150 = vadd.f32 0.0, %v3149
        %v3151 = vpop.f32.mrf.mxu0
        %3152 = vmatprep.mubr.f32.mxu0 0.0
        %3153 = vmatmul.mubr.f32.gmra.mxu0 %v3006
        %v3154 = vpop.f32.mrf.mxu0
        %v3155 = vadd.f32 0.0, %v3154
        %v3156 = vpop.f32.mrf.mxu0
        %3157 = vdwg.mxu0
        %v3158 = vmul.f32 %v3075, %v1918
        %v3159 = vmul.f32 %v3080, %v1919
        %v3160 = vadd.f32 %v2917, %v3158
        %v3161 = vadd.f32 %v2918, %v3159
        %v3162 = vmul.f32 %v3150, %v1921
        %v3163 = vmul.f32 %v3155, %v1922
        %v3164 = vsub.f32 %v3160, %v3162
        %v3165 = vsub.f32 %v3161, %v3163
        %v3166 = vmul.f32 %v3075, %v1921
        %v3167 = vmul.f32 %v3080, %v1922
        %v3168 = vadd.f32 %v2925, %v3166
        %v3169 = vadd.f32 %v2926, %v3167
        %v3170 = vmul.f32 %v3150, %v1918
        %v3171 = vmul.f32 %v3155, %v1919
        %v3172 = vadd.f32 %v3168, %v3170
        %v3173 = vadd.f32 %v3169, %v3171
        %v3175 = vsel %vm1939, %v3172, 0
        %v3178 = vsel %vm1939, %v3173, 0
        %3180 = vmatprep.subr.mxu0 0.0
        %3181 = vmatpush1.msra.mxu0 0.0
        %3182 = vmatprep.subr.mxu0 0.0
        %3183 = vmatpush1.msra.mxu0 0.0
        %3184 = vmatprep.subr.mxu0 0.0
        %3185 = vmatpush1.msra.mxu0 0.0
        %3186 = vmatprep.subr.mxu0 0.0
        %3187 = vmatpush1.msra.mxu0 0.0
        %3188 = vmatprep.subr.mxu0 0.0
        %3189 = vmatpush1.msra.mxu0 0.0
        %3190 = vmatprep.subr.mxu0 0.0
        %3191 = vmatpush1.msra.mxu0 0.0
        %3192 = vmatprep.subr.mxu0 0.0
        %3193 = vmatpush1.msra.mxu0 0.0
        %3194 = vmatprep.subr.mxu0 0.0
        %3195 = vmatpush1.msra.mxu0 0.0
        %3196 = vmatprep.subr.mxu0 0.0
        %3197 = vmatpush1.msra.mxu0 0.0
        %3198 = vmatprep.subr.mxu0 0.0
        %3199 = vmatpush1.msra.mxu0 0.0
        %3200 = vmatprep.subr.mxu0 0.0
        %3201 = vmatpush1.msra.mxu0 0.0
        %3202 = vmatprep.subr.mxu0 0.0
        %3203 = vmatpush1.msra.mxu0 0.0
        %3204 = vmatprep.subr.mxu0 0.0
        %3205 = vmatpush1.msra.mxu0 0.0
        %3206 = vmatprep.subr.mxu0 0.0
        %3207 = vmatpush1.msra.mxu0 0.0
        %3208 = vmatprep.subr.mxu0 0.0
        %3209 = vmatpush1.msra.mxu0 0.0
        %3210 = vmatprep.subr.mxu0 0.0
        %3211 = vmatpush1.msra.mxu0 %v1948
        %3212 = vmatprep.subr.mxu0 0.0
        %3213 = vmatpush2.msra.mxu0 0.0
        %3214 = vmatprep.subr.mxu0 0.0
        %3215 = vmatpush2.msra.mxu0 0.0
        %3216 = vmatprep.subr.mxu0 0.0
        %3217 = vmatpush2.msra.mxu0 0.0
        %3218 = vmatprep.subr.mxu0 0.0
        %3219 = vmatpush2.msra.mxu0 0.0
        %3220 = vmatprep.subr.mxu0 0.0
        %3221 = vmatpush2.msra.mxu0 0.0
        %3222 = vmatprep.subr.mxu0 0.0
        %3223 = vmatpush2.msra.mxu0 0.0
        %3224 = vmatprep.subr.mxu0 0.0
        %3225 = vmatpush2.msra.mxu0 0.0
        %3226 = vmatprep.subr.mxu0 0.0
        %3227 = vmatpush2.msra.mxu0 0.0
        %3228 = vmatprep.subr.mxu0 0.0
        %3229 = vmatpush2.msra.mxu0 0.0
        %3230 = vmatprep.subr.mxu0 0.0
        %3231 = vmatpush2.msra.mxu0 0.0
        %3232 = vmatprep.subr.mxu0 0.0
        %3233 = vmatpush2.msra.mxu0 0.0
        %3234 = vmatprep.subr.mxu0 0.0
        %3235 = vmatpush2.msra.mxu0 0.0
        %3236 = vmatprep.subr.mxu0 0.0
        %3237 = vmatpush2.msra.mxu0 0.0
        %3238 = vmatprep.subr.mxu0 0.0
        %3239 = vmatpush2.msra.mxu0 0.0
        %3240 = vmatprep.subr.mxu0 0.0
        %3241 = vmatpush2.msra.mxu0 0.0
        %3242 = vmatprep.subr.mxu0 0.0
        %3243 = vmatpush2.msra.mxu0 0.0
        %3244 = vmatprep.mubr.f32.mxu0 0.0
        %3245 = vmatmul.mubr.f32.gmra.mxu0 %v3175
        %v3246 = vpop.f32.mrf.mxu0
        %v3247 = vadd.f32 0.0, %v3246
        %v3248 = vpop.f32.mrf.mxu0
        %3249 = vmatprep.mubr.f32.mxu0 0.0
        %3250 = vmatmul.mubr.f32.gmra.mxu0 %v3178
        %v3251 = vpop.f32.mrf.mxu0
        %v3252 = vadd.f32 0.0, %v3251
        %v3253 = vpop.f32.mrf.mxu0
        %3254 = vdwg.mxu0
        %v3256 = vsel %vm1939, %v3164, 0
        %v3259 = vsel %vm1939, %v3165, 0
        %3261 = vmatprep.subr.mxu0 0.0
        %3262 = vmatpush1.msra.mxu0 0.0
        %3263 = vmatprep.subr.mxu0 0.0
        %3264 = vmatpush1.msra.mxu0 0.0
        %3265 = vmatprep.subr.mxu0 0.0
        %3266 = vmatpush1.msra.mxu0 0.0
        %3267 = vmatprep.subr.mxu0 0.0
        %3268 = vmatpush1.msra.mxu0 0.0
        %3269 = vmatprep.subr.mxu0 0.0
        %3270 = vmatpush1.msra.mxu0 0.0
        %3271 = vmatprep.subr.mxu0 0.0
        %3272 = vmatpush1.msra.mxu0 0.0
        %3273 = vmatprep.subr.mxu0 0.0
        %3274 = vmatpush1.msra.mxu0 0.0
        %3275 = vmatprep.subr.mxu0 0.0
        %3276 = vmatpush1.msra.mxu0 0.0
        %3277 = vmatprep.subr.mxu0 0.0
        %3278 = vmatpush1.msra.mxu0 0.0
        %3279 = vmatprep.subr.mxu0 0.0
        %3280 = vmatpush1.msra.mxu0 0.0
        %3281 = vmatprep.subr.mxu0 0.0
        %3282 = vmatpush1.msra.mxu0 0.0
        %3283 = vmatprep.subr.mxu0 0.0
        %3284 = vmatpush1.msra.mxu0 0.0
        %3285 = vmatprep.subr.mxu0 0.0
        %3286 = vmatpush1.msra.mxu0 0.0
        %3287 = vmatprep.subr.mxu0 0.0
        %3288 = vmatpush1.msra.mxu0 0.0
        %3289 = vmatprep.subr.mxu0 0.0
        %3290 = vmatpush1.msra.mxu0 0.0
        %3291 = vmatprep.subr.mxu0 0.0
        %3292 = vmatpush1.msra.mxu0 %v2032
        %3293 = vmatprep.subr.mxu0 0.0
        %3294 = vmatpush2.msra.mxu0 0.0
        %3295 = vmatprep.subr.mxu0 0.0
        %3296 = vmatpush2.msra.mxu0 0.0
        %3297 = vmatprep.subr.mxu0 0.0
        %3298 = vmatpush2.msra.mxu0 0.0
        %3299 = vmatprep.subr.mxu0 0.0
        %3300 = vmatpush2.msra.mxu0 0.0
        %3301 = vmatprep.subr.mxu0 0.0
        %3302 = vmatpush2.msra.mxu0 0.0
        %3303 = vmatprep.subr.mxu0 0.0
        %3304 = vmatpush2.msra.mxu0 0.0
        %3305 = vmatprep.subr.mxu0 0.0
        %3306 = vmatpush2.msra.mxu0 0.0
        %3307 = vmatprep.subr.mxu0 0.0
        %3308 = vmatpush2.msra.mxu0 0.0
        %3309 = vmatprep.subr.mxu0 0.0
        %3310 = vmatpush2.msra.mxu0 0.0
        %3311 = vmatprep.subr.mxu0 0.0
        %3312 = vmatpush2.msra.mxu0 0.0
        %3313 = vmatprep.subr.mxu0 0.0
        %3314 = vmatpush2.msra.mxu0 0.0
        %3315 = vmatprep.subr.mxu0 0.0
        %3316 = vmatpush2.msra.mxu0 0.0
        %3317 = vmatprep.subr.mxu0 0.0
        %3318 = vmatpush2.msra.mxu0 0.0
        %3319 = vmatprep.subr.mxu0 0.0
        %3320 = vmatpush2.msra.mxu0 0.0
        %3321 = vmatprep.subr.mxu0 0.0
        %3322 = vmatpush2.msra.mxu0 0.0
        %3323 = vmatprep.subr.mxu0 0.0
        %3324 = vmatpush2.msra.mxu0 0.0
        %3325 = vmatprep.mubr.f32.mxu0 0.0
        %3326 = vmatmul.mubr.f32.gmra.mxu0 %v3256
        %v3327 = vpop.f32.mrf.mxu0
        %v3328 = vadd.f32 %v3247, %v3327
        %v3329 = vpop.f32.mrf.mxu0
        %3330 = vmatprep.mubr.f32.mxu0 0.0
        %3331 = vmatmul.mubr.f32.gmra.mxu0 %v3259
        %v3332 = vpop.f32.mrf.mxu0
        %v3333 = vadd.f32 %v3252, %v3332
        %v3334 = vpop.f32.mrf.mxu0
        %3335 = vdwg.mxu0
        %s3336 = scalar_lea.vmem [#allocation14], 16
        %v3337 = vld [vmem:[%s3336] sm:$0xff]
        %v3338 = vld [vmem:[%s3336 + $0x8] sm:$0xff]
        %s3339 = scalar_lea.vmem [#allocation16], 1
        %v3340 = vld [vmem:[%s3339] sm:$0x1]
        %v3342 = vlaneseq
        %v3343 = vshrl.u32 %v3342, 7
        %v3344 = vsub.s32 0, %v3343
        %v3345 = vrot.slane %v3340, %v3344
        %v3348 = vsel %vm891, %v3328, 0
        %v3351 = vsel %vm891, %v3333, 0
        %3353 = vmatprep.subr.mxu0 0.0
        %3354 = vmatpush1.msra.mxu0 0.0
        %3355 = vmatprep.subr.mxu0 0.0
        %3356 = vmatpush1.msra.mxu0 0.0
        %3357 = vmatprep.subr.mxu0 0.0
        %3358 = vmatpush1.msra.mxu0 0.0
        %3359 = vmatprep.subr.mxu0 0.0
        %3360 = vmatpush1.msra.mxu0 0.0
        %3361 = vmatprep.subr.mxu0 0.0
        %3362 = vmatpush1.msra.mxu0 0.0
        %3363 = vmatprep.subr.mxu0 0.0
        %3364 = vmatpush1.msra.mxu0 0.0
        %3365 = vmatprep.subr.mxu0 0.0
        %3366 = vmatpush1.msra.mxu0 0.0
        %3367 = vmatprep.subr.mxu0 0.0
        %3368 = vmatpush1.msra.mxu0 0.0
        %3369 = vmatprep.subr.mxu0 0.0
        %3370 = vmatpush1.msra.mxu0 0.0
        %3371 = vmatprep.subr.mxu0 0.0
        %3372 = vmatpush1.msra.mxu0 0.0
        %3373 = vmatprep.subr.mxu0 0.0
        %3374 = vmatpush1.msra.mxu0 0.0
        %3375 = vmatprep.subr.mxu0 0.0
        %3376 = vmatpush1.msra.mxu0 0.0
        %3377 = vmatprep.subr.mxu0 0.0
        %3378 = vmatpush1.msra.mxu0 0.0
        %3379 = vmatprep.subr.mxu0 0.0
        %3380 = vmatpush1.msra.mxu0 0.0
        %3381 = vmatprep.subr.mxu0 0.0
        %3382 = vmatpush1.msra.mxu0 %v3338
        %3383 = vmatprep.subr.mxu0 0.0
        %3384 = vmatpush1.msra.mxu0 %v3337
        %3385 = vmatprep.subr.mxu0 0.0
        %3386 = vmatpush2.msra.mxu0 0.0
        %3387 = vmatprep.subr.mxu0 0.0
        %3388 = vmatpush2.msra.mxu0 0.0
        %3389 = vmatprep.subr.mxu0 0.0
        %3390 = vmatpush2.msra.mxu0 0.0
        %3391 = vmatprep.subr.mxu0 0.0
        %3392 = vmatpush2.msra.mxu0 0.0
        %3393 = vmatprep.subr.mxu0 0.0
        %3394 = vmatpush2.msra.mxu0 0.0
        %3395 = vmatprep.subr.mxu0 0.0
        %3396 = vmatpush2.msra.mxu0 0.0
        %3397 = vmatprep.subr.mxu0 0.0
        %3398 = vmatpush2.msra.mxu0 0.0
        %3399 = vmatprep.subr.mxu0 0.0
        %3400 = vmatpush2.msra.mxu0 0.0
        %3401 = vmatprep.subr.mxu0 0.0
        %3402 = vmatpush2.msra.mxu0 0.0
        %3403 = vmatprep.subr.mxu0 0.0
        %3404 = vmatpush2.msra.mxu0 0.0
        %3405 = vmatprep.subr.mxu0 0.0
        %3406 = vmatpush2.msra.mxu0 0.0
        %3407 = vmatprep.subr.mxu0 0.0
        %3408 = vmatpush2.msra.mxu0 0.0
        %3409 = vmatprep.subr.mxu0 0.0
        %3410 = vmatpush2.msra.mxu0 0.0
        %3411 = vmatprep.subr.mxu0 0.0
        %3412 = vmatpush2.msra.mxu0 0.0
        %3413 = vmatprep.subr.mxu0 0.0
        %3414 = vmatpush2.msra.mxu0 0.0
        %3415 = vmatprep.subr.mxu0 0.0
        %3416 = vmatpush2.msra.mxu0 0.0
        %3417 = vmatprep.mubr.f32.mxu0 0.0
        %3418 = vmatmul.mubr.f32.gmra.mxu0 %v3348
        %v3419 = vpop.f32.mrf.mxu0
        %v3420 = vadd.f32 %v3345, %v3419
        %v3421 = vpop.f32.mrf.mxu0
        %3422 = vmatprep.mubr.f32.mxu0 0.0
        %3423 = vmatmul.mubr.f32.gmra.mxu0 %v3351
        %v3424 = vpop.f32.mrf.mxu0
        %v3425 = vadd.f32 %v3345, %v3424
        %v3426 = vpop.f32.mrf.mxu0
        %3427 = vdwg.mxu0
        %v3428 = vadd.f32 %v2574, %v3420
        %v3429 = vadd.f32 %v2579, %v3425
        %3430 = vmatprep.subr.mxu0 0.0
        %3431 = vmatpush1.msra.mxu0 0.0
        %3432 = vmatprep.subr.mxu0 0.0
        %3433 = vmatpush1.msra.mxu0 0.0
        %3434 = vmatprep.subr.mxu0 0.0
        %3435 = vmatpush1.msra.mxu0 0.0
        %3436 = vmatprep.subr.mxu0 0.0
        %3437 = vmatpush1.msra.mxu0 0.0
        %3438 = vmatprep.subr.mxu0 0.0
        %3439 = vmatpush1.msra.mxu0 0.0
        %3440 = vmatprep.subr.mxu0 0.0
        %3441 = vmatpush1.msra.mxu0 0.0
        %3442 = vmatprep.subr.mxu0 0.0
        %3443 = vmatpush1.msra.mxu0 0.0
        %3444 = vmatprep.subr.mxu0 0.0
        %3445 = vmatpush1.msra.mxu0 0.0
        %3446 = vmatprep.subr.mxu0 0.0
        %3447 = vmatpush1.msra.mxu0 0.0
        %3448 = vmatprep.subr.mxu0 0.0
        %3449 = vmatpush1.msra.mxu0 0.0
        %3450 = vmatprep.subr.mxu0 0.0
        %3451 = vmatpush1.msra.mxu0 0.0
        %3452 = vmatprep.subr.mxu0 0.0
        %3453 = vmatpush1.msra.mxu0 0.0
        %3454 = vmatprep.subr.mxu0 0.0
        %3455 = vmatpush1.msra.mxu0 0.0
        %3456 = vmatprep.subr.mxu0 0.0
        %3457 = vmatpush1.msra.mxu0 0.0
        %3458 = vmatprep.subr.mxu0 0.0
        %3459 = vmatpush1.msra.mxu0 %v3429
        %3460 = vmatprep.subr.mxu0 0.0
        %3461 = vmatpush1.msra.mxu0 %v3428
        %3462 = vmatprep.subr.mxu0 0.0
        %3463 = vmatpush2.msra.mxu0 0.0
        %3464 = vmatprep.subr.mxu0 0.0
        %3465 = vmatpush2.msra.mxu0 0.0
        %3466 = vmatprep.subr.mxu0 0.0
        %3467 = vmatpush2.msra.mxu0 0.0
        %3468 = vmatprep.subr.mxu0 0.0
        %3469 = vmatpush2.msra.mxu0 0.0
        %3470 = vmatprep.subr.mxu0 0.0
        %3471 = vmatpush2.msra.mxu0 0.0
        %3472 = vmatprep.subr.mxu0 0.0
        %3473 = vmatpush2.msra.mxu0 0.0
        %3474 = vmatprep.subr.mxu0 0.0
        %3475 = vmatpush2.msra.mxu0 0.0
        %3476 = vmatprep.subr.mxu0 0.0
        %3477 = vmatpush2.msra.mxu0 0.0
        %3478 = vmatprep.subr.mxu0 0.0
        %3479 = vmatpush2.msra.mxu0 0.0
        %3480 = vmatprep.subr.mxu0 0.0
        %3481 = vmatpush2.msra.mxu0 0.0
        %3482 = vmatprep.subr.mxu0 0.0
        %3483 = vmatpush2.msra.mxu0 0.0
        %3484 = vmatprep.subr.mxu0 0.0
        %3485 = vmatpush2.msra.mxu0 0.0
        %3486 = vmatprep.subr.mxu0 0.0
        %3487 = vmatpush2.msra.mxu0 0.0
        %3488 = vmatprep.subr.mxu0 0.0
        %3489 = vmatpush2.msra.mxu0 0.0
        %3490 = vmatprep.subr.mxu0 0.0
        %3491 = vmatpush2.msra.mxu0 0.0
        %3492 = vmatprep.subr.mxu0 0.0
        %3493 = vmatpush2.msra.mxu0 0.0
        %3494 = vmatprep.mubr.f32.mxu0 0.0
        %3495 = vmatmul.mubr.f32.gmra.mxu0 %v2202
        %v3496 = vpop.f32.mrf.mxu0
        %v3497 = vadd.f32 0.0, %v3496
        %v3498 = vpop.f32.mrf.mxu0
        %3499 = vmatprep.mubr.f32.mxu0 0.0
        %3500 = vmatmul.mubr.f32.gmra.mxu0 %v2205
        %v3501 = vpop.f32.mrf.mxu0
        %v3502 = vadd.f32 0.0, %v3501
        %v3503 = vpop.f32.mrf.mxu0
        %3504 = vdwg.mxu0
        %s3505 = scalar_lea.vmem [#allocation17], 16
        %v3506 = vld [vmem:[%s3505] sm:$0xff]
        %v3507 = vld [vmem:[%s3505 + $0x8] sm:$0xff]
        %v3509 = vsel %vm891, %v3497, 0
        %v3512 = vsel %vm891, %v3502, 0
        %3514 = vmatprep.subr.mxu0 0.0
        %3515 = vmatpush1.msra.mxu0 0.0
        %3516 = vmatprep.subr.mxu0 0.0
        %3517 = vmatpush1.msra.mxu0 0.0
        %3518 = vmatprep.subr.mxu0 0.0
        %3519 = vmatpush1.msra.mxu0 0.0
        %3520 = vmatprep.subr.mxu0 0.0
        %3521 = vmatpush1.msra.mxu0 0.0
        %3522 = vmatprep.subr.mxu0 0.0
        %3523 = vmatpush1.msra.mxu0 0.0
        %3524 = vmatprep.subr.mxu0 0.0
        %3525 = vmatpush1.msra.mxu0 0.0
        %3526 = vmatprep.subr.mxu0 0.0
        %3527 = vmatpush1.msra.mxu0 0.0
        %3528 = vmatprep.subr.mxu0 0.0
        %3529 = vmatpush1.msra.mxu0 0.0
        %3530 = vmatprep.subr.mxu0 0.0
        %3531 = vmatpush1.msra.mxu0 0.0
        %3532 = vmatprep.subr.mxu0 0.0
        %3533 = vmatpush1.msra.mxu0 0.0
        %3534 = vmatprep.subr.mxu0 0.0
        %3535 = vmatpush1.msra.mxu0 0.0
        %3536 = vmatprep.subr.mxu0 0.0
        %3537 = vmatpush1.msra.mxu0 0.0
        %3538 = vmatprep.subr.mxu0 0.0
        %3539 = vmatpush1.msra.mxu0 0.0
        %3540 = vmatprep.subr.mxu0 0.0
        %3541 = vmatpush1.msra.mxu0 0.0
        %3542 = vmatprep.subr.mxu0 0.0
        %3543 = vmatpush1.msra.mxu0 %v3507
        %3544 = vmatprep.subr.mxu0 0.0
        %3545 = vmatpush1.msra.mxu0 %v3506
        %3546 = vmatprep.subr.mxu0 0.0
        %3547 = vmatpush2.msra.mxu0 0.0
        %3548 = vmatprep.subr.mxu0 0.0
        %3549 = vmatpush2.msra.mxu0 0.0
        %3550 = vmatprep.subr.mxu0 0.0
        %3551 = vmatpush2.msra.mxu0 0.0
        %3552 = vmatprep.subr.mxu0 0.0
        %3553 = vmatpush2.msra.mxu0 0.0
        %3554 = vmatprep.subr.mxu0 0.0
        %3555 = vmatpush2.msra.mxu0 0.0
        %3556 = vmatprep.subr.mxu0 0.0
        %3557 = vmatpush2.msra.mxu0 0.0
        %3558 = vmatprep.subr.mxu0 0.0
        %3559 = vmatpush2.msra.mxu0 0.0
        %3560 = vmatprep.subr.mxu0 0.0
        %3561 = vmatpush2.msra.mxu0 0.0
        %3562 = vmatprep.subr.mxu0 0.0
        %3563 = vmatpush2.msra.mxu0 0.0
        %3564 = vmatprep.subr.mxu0 0.0
        %3565 = vmatpush2.msra.mxu0 0.0
        %3566 = vmatprep.subr.mxu0 0.0
        %3567 = vmatpush2.msra.mxu0 0.0
        %3568 = vmatprep.subr.mxu0 0.0
        %3569 = vmatpush2.msra.mxu0 0.0
        %3570 = vmatprep.subr.mxu0 0.0
        %3571 = vmatpush2.msra.mxu0 0.0
        %3572 = vmatprep.subr.mxu0 0.0
        %3573 = vmatpush2.msra.mxu0 0.0
        %3574 = vmatprep.subr.mxu0 0.0
        %3575 = vmatpush2.msra.mxu0 0.0
        %3576 = vmatprep.subr.mxu0 0.0
        %3577 = vmatpush2.msra.mxu0 0.0
        %3578 = vmatprep.mubr.f32.mxu0 0.0
        %3579 = vmatmul.mubr.f32.gmra.mxu0 %v3509
        %v3580 = vpop.f32.mrf.mxu0
        %v3581 = vadd.f32 0.0, %v3580
        %v3582 = vpop.f32.mrf.mxu0
        %3583 = vmatprep.mubr.f32.mxu0 0.0
        %3584 = vmatmul.mubr.f32.gmra.mxu0 %v3512
        %v3585 = vpop.f32.mrf.mxu0
        %v3586 = vadd.f32 0.0, %v3585
        %v3587 = vpop.f32.mrf.mxu0
        %3588 = vdwg.mxu0
        %v3589 = vmul.f32 %v3581, 0.5
        %v3590 = vmul.f32 %v3586, 0.5
        %v3591 = vmul.f32 %v3581, 0.70710677
        %v3592 = vmul.f32 %v3586, 0.70710677
        %v3593 = vand.u32 2147483647, %v3591
        %v3594 = vand.u32 2147483647, %v3592
        %v3595 = vmul.f32 %v3593, 0.3275911
        %v3596 = vmul.f32 %v3594, 0.3275911
        %v3597 = vadd.f32 %v3595, 1.0
        %v3598 = vadd.f32 %v3596, 1.0
        %v3599 = vrcp.pop %v3597
        %v3600 = vmul.f32 1.0, %v3599
        %v3601 = vrcp.pop %v3598
        %v3602 = vmul.f32 1.0, %v3601
        %v3603 = vmul.f32 %v3600, 1.0614054
        %v3604 = vmul.f32 %v3602, 1.0614054
        %v3605 = vadd.f32 %v3603, -1.4531521
        %v3606 = vadd.f32 %v3604, -1.4531521
        %v3607 = vmul.f32 %v3605, %v3600
        %v3608 = vmul.f32 %v3606, %v3602
        %v3609 = vadd.f32 %v3607, 1.4214138
        %v3610 = vadd.f32 %v3608, 1.4214138
        %v3611 = vmul.f32 %v3609, %v3600
        %v3612 = vmul.f32 %v3610, %v3602
        %v3613 = vadd.f32 %v3611, -0.28449672
        %v3614 = vadd.f32 %v3612, -0.28449672
        %v3615 = vmul.f32 %v3613, %v3600
        %v3616 = vmul.f32 %v3614, %v3602
        %v3617 = vadd.f32 %v3615, 0.2548296
        %v3618 = vadd.f32 %v3616, 0.2548296
        %v3619 = vmul.f32 %v3617, %v3600
        %v3620 = vmul.f32 %v3618, %v3602
        %v3621 = vmul.f32 %v3593, %v3593
        %v3622 = vmul.f32 %v3594, %v3594
        %v3623 = vsub.f32 0.0, %v3621
        %v3624 = vsub.f32 0.0, %v3622
        %v3625 = vmul.f32 %v3623, 1.442695
        %v3626 = vpow.pop %v3625
        %v3627 = vmul.f32 %v3624, 1.442695
        %v3628 = vpow.pop %v3627
        %v3629 = vmul.f32 %v3619, %v3626
        %v3630 = vmul.f32 %v3620, %v3628
        %v3631 = vsub.f32 1.0, %v3629
        %v3632 = vsub.f32 1.0, %v3630
        %vm3633 = vcmp.lt.f32.partialorder %v3591, 0.0
        %vm3634 = vcmp.lt.f32.partialorder %v3592, 0.0
        %v3635 = vsub.f32 0.0, %v3631
        %v3636 = vsub.f32 0.0, %v3632
        %v3637 = vsel %vm3633, %v3635, %v3631
        %v3638 = vsel %vm3634, %v3636, %v3632
        %v3639 = vadd.f32 %v3637, 1.0
        %v3640 = vadd.f32 %v3638, 1.0
        %v3641 = vmul.f32 %v3589, %v3639
        %v3642 = vmul.f32 %v3590, %v3640
        %s3643 = scalar_lea.vmem %s18, 32
        %v3644 = vld [vmem:[%s3643] sm:$0xff]
        %v3645 = vld [vmem:[%s3643 + $0x8] sm:$0xff]
        %v3646 = vld [vmem:[%s3643 + $0x10] sm:$0xff]
        %v3647 = vld [vmem:[%s3643 + $0x18] sm:$0xff]
        %v3649 = vsel %vm2423, %v3641, 0
        %v3652 = vsel %vm2423, %v3642, 0
        %3654 = vmatprep.subr.mxu0 0.0
        %3655 = vmatpush1.msra.mxu0 0.0
        %3656 = vmatprep.subr.mxu0 0.0
        %3657 = vmatpush1.msra.mxu0 0.0
        %3658 = vmatprep.subr.mxu0 0.0
        %3659 = vmatpush1.msra.mxu0 0.0
        %3660 = vmatprep.subr.mxu0 0.0
        %3661 = vmatpush1.msra.mxu0 0.0
        %3662 = vmatprep.subr.mxu0 0.0
        %3663 = vmatpush1.msra.mxu0 0.0
        %3664 = vmatprep.subr.mxu0 0.0
        %3665 = vmatpush1.msra.mxu0 0.0
        %3666 = vmatprep.subr.mxu0 0.0
        %3667 = vmatpush1.msra.mxu0 0.0
        %3668 = vmatprep.subr.mxu0 0.0
        %3669 = vmatpush1.msra.mxu0 0.0
        %3670 = vmatprep.subr.mxu0 0.0
        %3671 = vmatpush1.msra.mxu0 0.0
        %3672 = vmatprep.subr.mxu0 0.0
        %3673 = vmatpush1.msra.mxu0 0.0
        %3674 = vmatprep.subr.mxu0 0.0
        %3675 = vmatpush1.msra.mxu0 0.0
        %3676 = vmatprep.subr.mxu0 0.0
        %3677 = vmatpush1.msra.mxu0 0.0
        %3678 = vmatprep.subr.mxu0 0.0
        %3679 = vmatpush1.msra.mxu0 %v3647
        %3680 = vmatprep.subr.mxu0 0.0
        %3681 = vmatpush1.msra.mxu0 %v3646
        %3682 = vmatprep.subr.mxu0 0.0
        %3683 = vmatpush1.msra.mxu0 %v3645
        %3684 = vmatprep.subr.mxu0 0.0
        %3685 = vmatpush1.msra.mxu0 %v3644
        %3686 = vmatprep.subr.mxu0 0.0
        %3687 = vmatpush2.msra.mxu0 0.0
        %3688 = vmatprep.subr.mxu0 0.0
        %3689 = vmatpush2.msra.mxu0 0.0
        %3690 = vmatprep.subr.mxu0 0.0
        %3691 = vmatpush2.msra.mxu0 0.0
        %3692 = vmatprep.subr.mxu0 0.0
        %3693 = vmatpush2.msra.mxu0 0.0
        %3694 = vmatprep.subr.mxu0 0.0
        %3695 = vmatpush2.msra.mxu0 0.0
        %3696 = vmatprep.subr.mxu0 0.0
        %3697 = vmatpush2.msra.mxu0 0.0
        %3698 = vmatprep.subr.mxu0 0.0
        %3699 = vmatpush2.msra.mxu0 0.0
        %3700 = vmatprep.subr.mxu0 0.0
        %3701 = vmatpush2.msra.mxu0 0.0
        %3702 = vmatprep.subr.mxu0 0.0
        %3703 = vmatpush2.msra.mxu0 0.0
        %3704 = vmatprep.subr.mxu0 0.0
        %3705 = vmatpush2.msra.mxu0 0.0
        %3706 = vmatprep.subr.mxu0 0.0
        %3707 = vmatpush2.msra.mxu0 0.0
        %3708 = vmatprep.subr.mxu0 0.0
        %3709 = vmatpush2.msra.mxu0 0.0
        %3710 = vmatprep.subr.mxu0 0.0
        %3711 = vmatpush2.msra.mxu0 0.0
        %3712 = vmatprep.subr.mxu0 0.0
        %3713 = vmatpush2.msra.mxu0 0.0
        %3714 = vmatprep.subr.mxu0 0.0
        %3715 = vmatpush2.msra.mxu0 0.0
        %3716 = vmatprep.subr.mxu0 0.0
        %3717 = vmatpush2.msra.mxu0 0.0
        %3718 = vmatprep.mubr.f32.mxu0 0.0
        %3719 = vmatmul.mubr.f32.gmra.mxu0 %v3649
        %v3720 = vpop.f32.mrf.mxu0
        %v3721 = vadd.f32 0.0, %v3720
        %v3722 = vpop.f32.mrf.mxu0
        %3723 = vmatprep.mubr.f32.mxu0 0.0
        %3724 = vmatmul.mubr.f32.gmra.mxu0 %v3652
        %v3725 = vpop.f32.mrf.mxu0
        %v3726 = vadd.f32 0.0, %v3725
        %v3727 = vpop.f32.mrf.mxu0
        %3728 = vdwg.mxu0
        %v3729 = vadd.f32 %v3497, %v3721
        %v3730 = vadd.f32 %v3502, %v3726
        %3731 = vmatprep.subr.mxu0 0.0
        %3732 = vmatpush1.msra.mxu0 0.0
        %3733 = vmatprep.subr.mxu0 0.0
        %3734 = vmatpush1.msra.mxu0 0.0
        %3735 = vmatprep.subr.mxu0 0.0
        %3736 = vmatpush1.msra.mxu0 0.0
        %3737 = vmatprep.subr.mxu0 0.0
        %3738 = vmatpush1.msra.mxu0 0.0
        %3739 = vmatprep.subr.mxu0 0.0
        %3740 = vmatpush1.msra.mxu0 0.0
        %3741 = vmatprep.subr.mxu0 0.0
        %3742 = vmatpush1.msra.mxu0 0.0
        %3743 = vmatprep.subr.mxu0 0.0
        %3744 = vmatpush1.msra.mxu0 0.0
        %3745 = vmatprep.subr.mxu0 0.0
        %3746 = vmatpush1.msra.mxu0 0.0
        %3747 = vmatprep.subr.mxu0 0.0
        %3748 = vmatpush1.msra.mxu0 0.0
        %3749 = vmatprep.subr.mxu0 0.0
        %3750 = vmatpush1.msra.mxu0 0.0
        %3751 = vmatprep.subr.mxu0 0.0
        %3752 = vmatpush1.msra.mxu0 0.0
        %3753 = vmatprep.subr.mxu0 0.0
        %3754 = vmatpush1.msra.mxu0 0.0
        %3755 = vmatprep.subr.mxu0 0.0
        %3756 = vmatpush1.msra.mxu0 0.0
        %3757 = vmatprep.subr.mxu0 0.0
        %3758 = vmatpush1.msra.mxu0 0.0
        %3759 = vmatprep.subr.mxu0 0.0
        %3760 = vmatpush1.msra.mxu0 %v3730
        %3761 = vmatprep.subr.mxu0 0.0
        %3762 = vmatpush1.msra.mxu0 %v3729
        %3763 = vmatprep.subr.mxu0 0.0
        %3764 = vmatpush2.msra.mxu0 0.0
        %3765 = vmatprep.subr.mxu0 0.0
        %3766 = vmatpush2.msra.mxu0 0.0
        %3767 = vmatprep.subr.mxu0 0.0
        %3768 = vmatpush2.msra.mxu0 0.0
        %3769 = vmatprep.subr.mxu0 0.0
        %3770 = vmatpush2.msra.mxu0 0.0
        %3771 = vmatprep.subr.mxu0 0.0
        %3772 = vmatpush2.msra.mxu0 0.0
        %3773 = vmatprep.subr.mxu0 0.0
        %3774 = vmatpush2.msra.mxu0 0.0
        %3775 = vmatprep.subr.mxu0 0.0
        %3776 = vmatpush2.msra.mxu0 0.0
        %3777 = vmatprep.subr.mxu0 0.0
        %3778 = vmatpush2.msra.mxu0 0.0
        %3779 = vmatprep.subr.mxu0 0.0
        %3780 = vmatpush2.msra.mxu0 0.0
        %3781 = vmatprep.subr.mxu0 0.0
        %3782 = vmatpush2.msra.mxu0 0.0
        %3783 = vmatprep.subr.mxu0 0.0
        %3784 = vmatpush2.msra.mxu0 0.0
        %3785 = vmatprep.subr.mxu0 0.0
        %3786 = vmatpush2.msra.mxu0 0.0
        %3787 = vmatprep.subr.mxu0 0.0
        %3788 = vmatpush2.msra.mxu0 0.0
        %3789 = vmatprep.subr.mxu0 0.0
        %3790 = vmatpush2.msra.mxu0 0.0
        %3791 = vmatprep.subr.mxu0 0.0
        %3792 = vmatpush2.msra.mxu0 0.0
        %3793 = vmatprep.subr.mxu0 0.0
        %3794 = vmatpush2.msra.mxu0 0.0
        %3795 = vmatprep.mubr.f32.mxu0 0.0
        %3796 = vmatmul.mubr.f32.gmra.mxu0 %v2202
        %v3797 = vpop.f32.mrf.mxu0
        %v3798 = vadd.f32 0.0, %v3797
        %v3799 = vpop.f32.mrf.mxu0
        %3800 = vmatprep.mubr.f32.mxu0 0.0
        %3801 = vmatmul.mubr.f32.gmra.mxu0 %v2205
        %v3802 = vpop.f32.mrf.mxu0
        %v3803 = vadd.f32 0.0, %v3802
        %v3804 = vpop.f32.mrf.mxu0
        %3805 = vdwg.mxu0
        %v3806 = vsel %vm891, %v3798, 0.0
        %3807 = vadd.xlane.f32.xlu0 %v3806
        %v3808 = vpop.xlane.xlu0 %3807
        %v3809 = vsel %vm891, %v3803, 0.0
        %3810 = vadd.xlane.f32.xlu0 %v3809
        %v3811 = vpop.xlane.xlu0 %3810
        %v3812 = vrcp.pop 16.0
        %v3813 = vmul.f32 %v3808, %v3812
        %v3814 = vmul.f32 %v3811, %v3812
        %v3815 = vsub.f32 %v3798, %v3813
        %v3816 = vsub.f32 %v3803, %v3814
        %v3817 = vmul.f32 %v3815, %v3815
        %v3818 = vmul.f32 %v3816, %v3816
        %v3819 = vsel %vm891, %v3817, 0.0
        %3820 = vadd.xlane.f32.xlu0 %v3819
        %v3821 = vpop.xlane.xlu0 %3820
        %v3822 = vsel %vm891, %v3818, 0.0
        %3823 = vadd.xlane.f32.xlu0 %v3822
        %v3824 = vpop.xlane.xlu0 %3823
        %v3825 = vmul.f32 %v3821, %v3812
        %v3826 = vmul.f32 %v3824, %v3812
        %v3827 = vadd.f32 %v3825, 1e-05
        %v3828 = vadd.f32 %v3826, 1e-05
        %v3829 = vrsqrt.pop %v3827
        %v3830 = vrsqrt.pop %v3828
        %v3831 = vmul.f32 %v3815, %v3829
        %v3832 = vmul.f32 %v3816, %v3830
        %v3833 = vld [vmem:[%s19] sm:$0x1]
        %v3835 = vlaneseq
        %v3836 = vshrl.u32 %v3835, 7
        %v3837 = vsub.s32 0, %v3836
        %v3838 = vrot.slane %v3833, %v3837
        %v3840 = vmul.f32 %v3831, %v3838
        %v3841 = vmul.f32 %v3832, %v3838
        %v3842 = vld [vmem:[%s20] sm:$0x1]
        %v3844 = vlaneseq
        %v3845 = vshrl.u32 %v3844, 7
        %v3846 = vsub.s32 0, %v3845
        %v3847 = vrot.slane %v3842, %v3846
        %v3849 = vadd.f32 %v3840, %v3847
        %v3850 = vadd.f32 %v3841, %v3847
        %v3851 = vsel %vm891, %v3849, 0.0
        %v3852 = vsel %vm891, %v3850, 0.0
        %v3853 = vadd.f32 %v3851, %v3852
        %v3854 = vrot.slane %v3853, 4
        %v3855 = vadd.f32 %v3853, %v3854
        %v3856 = vrot.slane %v3855, 2
        %v3857 = vadd.f32 %v3855, %v3856
        %v3858 = vrot.slane %v3857, 1
        %v3859 = vadd.f32 %v3857, %v3858
        %v3860 = vmul.f32 %v3859, %v3812
        %v3861 = vsub.f32 %v3849, %v3860
        %v3862 = vsub.f32 %v3850, %v3860
        %v3863 = vmul.f32 %v3861, 0.5
        %v3864 = vmul.f32 %v3862, 0.5
        %v3865 = vmul.f32 %v3861, 0.70710677
        %v3866 = vmul.f32 %v3862, 0.70710677
        %v3867 = vand.u32 2147483647, %v3865
        %v3868 = vand.u32 2147483647, %v3866
        %v3869 = vmul.f32 %v3867, 0.3275911
        %v3870 = vmul.f32 %v3868, 0.3275911
        %v3871 = vadd.f32 %v3869, 1.0
        %v3872 = vadd.f32 %v3870, 1.0
        %v3873 = vrcp.pop %v3871
        %v3874 = vmul.f32 1.0, %v3873
        %v3875 = vrcp.pop %v3872
        %v3876 = vmul.f32 1.0, %v3875
        %v3877 = vmul.f32 %v3874, 1.0614054
        %v3878 = vmul.f32 %v3876, 1.0614054
        %v3879 = vadd.f32 %v3877, -1.4531521
        %v3880 = vadd.f32 %v3878, -1.4531521
        %v3881 = vmul.f32 %v3879, %v3874
        %v3882 = vmul.f32 %v3880, %v3876
        %v3883 = vadd.f32 %v3881, 1.4214138
        %v3884 = vadd.f32 %v3882, 1.4214138
        %v3885 = vmul.f32 %v3883, %v3874
        %v3886 = vmul.f32 %v3884, %v3876
        %v3887 = vadd.f32 %v3885, -0.28449672
        %v3888 = vadd.f32 %v3886, -0.28449672
        %v3889 = vmul.f32 %v3887, %v3874
        %v3890 = vmul.f32 %v3888, %v3876
        %v3891 = vadd.f32 %v3889, 0.2548296
        %v3892 = vadd.f32 %v3890, 0.2548296
        %v3893 = vmul.f32 %v3891, %v3874
        %v3894 = vmul.f32 %v3892, %v3876
        %v3895 = vmul.f32 %v3867, %v3867
        %v3896 = vmul.f32 %v3868, %v3868
        %v3897 = vsub.f32 0.0, %v3895
        %v3898 = vsub.f32 0.0, %v3896
        %v3899 = vmul.f32 %v3897, 1.442695
        %v3900 = vpow.pop %v3899
        %v3901 = vmul.f32 %v3898, 1.442695
        %v3902 = vpow.pop %v3901
        %v3903 = vmul.f32 %v3893, %v3900
        %v3904 = vmul.f32 %v3894, %v3902
        %v3905 = vsub.f32 1.0, %v3903
        %v3906 = vsub.f32 1.0, %v3904
        %vm3907 = vcmp.lt.f32.partialorder %v3865, 0.0
        %vm3908 = vcmp.lt.f32.partialorder %v3866, 0.0
        %v3909 = vsub.f32 0.0, %v3905
        %v3910 = vsub.f32 0.0, %v3906
        %v3911 = vsel %vm3907, %v3909, %v3905
        %v3912 = vsel %vm3908, %v3910, %v3906
        %v3913 = vadd.f32 %v3911, 1.0
        %v3914 = vadd.f32 %v3912, 1.0
        %v3915 = vmul.f32 %v3863, %v3913
        %v3916 = vmul.f32 %v3864, %v3914
        %v3917 = vmul.f32 %v3915, %v887
        %v3918 = vmul.f32 %v3916, %v888
        %v3919 = vld [vmem:[#allocation19] sm:$0xff]
        %v3920 = vld [vmem:[#allocation19 + $0x8] sm:$0xff]
        %v3921 = vmul.f32 %v3917, %v3919
        %v3922 = vmul.f32 %v3918, %v3920
        %v3923 = vsel %vm891, %v3921, 0.0
        %3924 = vadd.xlane.f32.xlu0 %v3923
        %v3925 = vpop.xlane.xlu0 %3924
        %v3926 = vsel %vm891, %v3922, 0.0
        %3927 = vadd.xlane.f32.xlu0 %v3926
        %v3928 = vpop.xlane.xlu0 %3927
        %v3929 = vadd.f32 %v3925, %v3928
        %v3930 = vrot.slane %v3929, 4
        %v3931 = vadd.f32 %v3929, %v3930
        %v3932 = vrot.slane %v3931, 2
        %v3933 = vadd.f32 %v3931, %v3932
        %v3934 = vrot.slane %v3933, 1
        %v3935 = vadd.f32 %v3933, %v3934
        %v3936 = vld [vmem:[#allocation2] sm:$0x1]
        %v3937 = vadd.f32 %v3935, %v3936
        %vm3938 = vcmask 0
        %3939 = vst.msk [vmem:[%s884] sm:$0x1] %vm3938, %v3937
        %p3940 = scmp.lt.s32.totalorder %s42, 1
        %s3941 = scalar_select %p3940, %s42, 1
        %s3942 = scalar_lea.vmem %s23, %s3941
        // Predicated region
        $region157: #{_lambda_.1} parent=111 // pred_check
          %p3943 = pneg %p553
        $region158: #{_lambda_.1} parent=111 // pred_check_branch
          %3945 = sbr.rel (%p3943) target = $region160
        $region159: #{_lambda_.1} parent=111 // pred_region
          _
        $region160: #{_lambda_.1} parent=111 // pred_fallthru
          _
      $region112: #{_lambda_.1} parent=5 // pred_fallthru
        _
      %p3946 = scmp.le.s32.totalorder 2, %s37
      // Predicated region
      $region161: #{_lambda_.1} parent=5 // pred_check
        %p3947 = pneg %p3946
      $region162: #{_lambda_.1} parent=5 // pred_check_branch
        %3949 = sbr.rel (%p3947) target = $region164
      $region163: #{_lambda_.1} parent=5 // pred_region
        %s3950 = ssub.s32 %s37, 2
        // Predicated region
        $region165: #{_lambda_.1} parent=163 // pred_check
          %p3951 = pneg %p559
        $region166: #{_lambda_.1} parent=163 // pred_check_branch
          %3953 = sbr.rel (%p3951) target = $region168
        $region167: #{_lambda_.1} parent=163 // pred_region
          %p3954 = scmp.lt.s32.totalorder %s43, 1
          %s3955 = scalar_select %p3954, %s43, 1
          %s3956 = scalar_lea.vmem %s23, %s3955
        $region168: #{_lambda_.1} parent=163 // pred_fallthru
          _
      $region164: #{_lambda_.1} parent=5 // pred_fallthru
        _
    $region6: #{_lambda_.1} parent=1 // loop_footer
      %s41 = sadd.s32 1, %s37
    $region7: #{_lambda_.1} parent=1 // loop_footer_branch
      %36 = sbr.rel target = $region3
    $region8: #{_lambda_.1} parent=1 // loop_exit
      _
    %3957 = vsyncpa [#allocation4], 1
    %s3958 = scalar_lea.sflag [#allocation4], 1
    %3959 = vsyncpa %s3958, 1
    %3960 = vsyncpa [#allocation6], 1
    %3961 = vsyncpa [#allocation9], 1
    %3962 = vsyncpa [#allocation12], 1
    %3963 = vsyncpa [#allocation15], 1
    %3964 = vsyncpa [#allocation18], 1

</llo_original>
